<compile_context>
chip_gen: v5e
topology: v5e:2x2
jax: 0.10.0
libtpu: 0.0.40
codegen_flags: <defaults>
</compile_context>

<pallas_src>
import functools
import jax
import jax.numpy as jnp
from jax.experimental import pallas as pl
from jax.experimental.pallas import tpu as pltpu


def attention_kernel(x_ref, wqkv_ref, bqkv_ref, wo_t_ref, bo_ref, o_ref, *,
                     heads, dim_head, point_tile, neighbors, mxu_dtype,
                     approx_recip):
    # x_ref:      (rows, D)            rows = point_tile * neighbors
    # wqkv_ref:   (D, 3*inner)         block-diag grouped convs, BN scale and
    #                                  attention scale pre-folded
    # bqkv_ref:   (1, 3*inner)         folded BatchNorm shift
    # wo_t_ref:   (inner, D)           pre-transposed output Linear weight
    # bo_ref:     (1, D)
    # o_ref:      (rows, D)
    T = point_tile
    K = neighbors
    dh = dim_head
    inner = heads * dh
    rows = T * K

    # One row-batched MXU matmul gives Q|K|V for every head; BN is already in
    # the weights/bias, attention scale already in the Q columns.
    x = x_ref[...].astype(mxu_dtype)                               # [rows, D]
    qkv = jnp.dot(x, wqkv_ref[...],
                  preferred_element_type=jnp.float32) + bqkv_ref[...]
    # qkv: [rows, 3*inner] f32

    outs = []
    for h in range(heads):                                         # small & static
        q = qkv[:, h * dh:(h + 1) * dh].reshape(T, K, dh).astype(mxu_dtype)
        k = qkv[:, inner + h * dh:inner + (h + 1) * dh].reshape(
            T, K, dh).astype(mxu_dtype)
        v = qkv[:, 2 * inner + h * dh:2 * inner + (h + 1) * dh].reshape(
            T, K, dh).astype(mxu_dtype)

        # Attention over neighbors, batched over the point-tile axis.
        dots = jnp.einsum('tid,tjd->tij', q, k,
                          preferred_element_type=jnp.float32)       # [T, K, K]
        dots = dots - jnp.max(dots, axis=-1, keepdims=True)
        e = jnp.exp(dots)
        # approx=True routes the divide to the otherwise-idle EUP slot.
        attn = e * pl.reciprocal(jnp.sum(e, axis=-1, keepdims=True),
                                 approx=approx_recip)
        o_h = jnp.einsum('tij,tjd->tid', attn.astype(mxu_dtype), v,
                         preferred_element_type=jnp.float32)         # [T, K, dh]
        outs.append(o_h.reshape(rows, dh))

    # Head concat along lanes, then ONE output-projection matmul.
    o_all = jnp.concatenate(outs, axis=-1)                           # [rows, inner]
    out = jnp.dot(o_all.astype(mxu_dtype), wo_t_ref[...],
                  preferred_element_type=jnp.float32) + bo_ref[...]
    o_ref[...] = out.astype(o_ref.dtype)


def attention_forward(x, params, *, heads, dim_head, eps=1e-5, point_tile=None,
                      mxu_dtype=jnp.bfloat16, approx_recip=True):
    """x: [B, P, K, D] (same layout as the PyTorch module input)."""
    B, P, K, D = x.shape
    inner = heads * dim_head
    dg = D // heads
    N = B * P

    # Default: one grid step (kernel is latency/overhead bound at small N).
    if point_tile is None:
        point_tile = N
    assert N % point_tile == 0, "point_tile must divide B*P"
    num_steps = N // point_tile
    rows = point_tile * K

    # --- Training-mode BatchNorm2d folded into the QKV weights + bias. -------
    xf = x.astype(jnp.float32)
    mean = jnp.mean(xf, axis=(0, 1, 2))
    var = jnp.mean(jnp.square(xf - mean), axis=(0, 1, 2))   # two-pass variance
    gamma = params["bn_gamma"].astype(jnp.float32)
    beta = params["bn_beta"].astype(jnp.float32)
    bn_scale = gamma / jnp.sqrt(var + eps)                   # [D]
    bn_shift = beta - mean * bn_scale                        # [D]

    # --- Grouped 1x1 convs (all heads, Q|K|V) -> one block-diagonal weight. --
    eye_h = jnp.eye(heads, dtype=jnp.float32)

    def grouped_to_block_diag(w):                            # w: [inner, dg]
        wh = w.reshape(heads, dim_head, dg).astype(jnp.float32)   # [H, dh, dg]
        # block (h, h) of the result is wh[h].T  ->  [D, inner]
        return jnp.einsum('hdg,hk->hgkd', wh, eye_h).reshape(D, inner)

    scale = dim_head ** (-0.5)
    wqkv = jnp.concatenate(
        [grouped_to_block_diag(params["wq"]) * scale,        # fold attn scale
         grouped_to_block_diag(params["wk"]),
         grouped_to_block_diag(params["wv"])], axis=1)       # [D, 3*inner]

    wqkv_folded = (bn_scale[:, None] * wqkv).astype(mxu_dtype)          # [D, 3*inner]
    bqkv = (bn_shift @ wqkv).reshape(1, 3 * inner).astype(jnp.float32)  # [1, 3*inner]
    wo_t = params["wo"].T.astype(mxu_dtype)                              # [inner, D]
    bo = params["bo"].reshape(1, D).astype(jnp.float32)

    x2 = x.reshape(N * K, D)

    kernel = functools.partial(
        attention_kernel, heads=heads, dim_head=dim_head,
        point_tile=point_tile, neighbors=K, mxu_dtype=mxu_dtype,
        approx_recip=approx_recip)

    # Advisory cost estimate (includes the output write).
    flops = (2 * N * K * D * 3 * inner
             + 4 * N * heads * K * K * dim_head
             + 2 * N * K * inner * D)
    bytes_accessed = (2 * N * K * D * x.dtype.itemsize          # x read + out write
                      + wqkv_folded.size * wqkv_folded.dtype.itemsize
                      + wo_t.size * wo_t.dtype.itemsize
                      + bqkv.size * 4 + bo.size * 4)
    cost = pl.CostEstimate(flops=flops,
                           transcendentals=N * heads * K * (K + 1),
                           bytes_accessed=bytes_accessed)

    out2 = pl.pallas_call(
        kernel,
        out_shape=jax.ShapeDtypeStruct((N * K, D), x.dtype),
        grid_spec=pltpu.PrefetchScalarGridSpec(
            num_scalar_prefetch=0,
            grid=(num_steps,),
            in_specs=[
                pl.BlockSpec((rows, D), lambda i: (i, 0)),             # x rows
                pl.BlockSpec((D, 3 * inner), lambda i: (0, 0)),        # fused wqkv
                pl.BlockSpec((1, 3 * inner), lambda i: (0, 0)),        # qkv bias (BN shift)
                pl.BlockSpec((inner, D), lambda i: (0, 0)),            # wo^T
                pl.BlockSpec((1, D), lambda i: (0, 0)),                # bo
            ],
            out_specs=pl.BlockSpec((rows, D), lambda i: (i, 0)),
        ),
        compiler_params=pltpu.CompilerParams(
            dimension_semantics=("parallel",)),
        cost_estimate=cost,
    )(x2, wqkv_folded, bqkv, wo_t, bo)

    return out2.reshape(B, P, K, D)


def attention_reference(x, params, *, heads, dim_head, eps=1e-5):
    """Pure-JAX reference mirroring the PyTorch forward (training-mode BN)."""
    B, P, K, D = x.shape
    dg = D // heads
    gamma, beta = params["bn_gamma"], params["bn_beta"]
    mean = jnp.mean(x, axis=(0, 1, 2))
    var = jnp.mean((x - mean) ** 2, axis=(0, 1, 2))
    xn = (x - mean) / jnp.sqrt(var + eps) * gamma + beta
    xg = xn.reshape(B, P, K, heads, dg)
    wqh = params["wq"].reshape(heads, dim_head, dg)
    wkh = params["wk"].reshape(heads, dim_head, dg)
    wvh = params["wv"].reshape(heads, dim_head, dg)
    q = jnp.einsum('bpkhg,hdg->bphkd', xg, wqh)
    k = jnp.einsum('bpkhg,hdg->bphkd', xg, wkh)
    v = jnp.einsum('bpkhg,hdg->bphkd', xg, wvh)
    dots = jnp.einsum('bphid,bphjd->bphij', q, k) * (dim_head ** -0.5)
    attn = jax.nn.softmax(dots, axis=-1)
    out = jnp.einsum('bphij,bphjd->bphid', attn, v)              # [B,P,H,K,dh]
    out = jnp.transpose(out, (0, 1, 3, 2, 4)).reshape(B, P, K, heads * dim_head)
    return out @ params["wo"].T + params["bo"]


if __name__ == "__main__":
    # x: [batch=2, points=8, neighbors=8, dim=16], heads=4, dim_head=8.
    B, P, K, D = 2, 8, 8, 16
    heads, dim_head = 4, 8
    inner_dim = heads * dim_head
    dg = D // heads

    key = jax.random.PRNGKey(0)
    kx, kq, kk, kv, kw, kb = jax.random.split(key, 6)

    x = jax.random.normal(kx, (B, P, K, D), dtype=jnp.float32)

    params = {
        # BatchNorm2d default init
        "bn_gamma": jnp.ones((D,), jnp.float32),
        "bn_beta": jnp.zeros((D,), jnp.float32),
        # grouped 1x1 conv weights: [inner_dim, D//heads] (kernel size 1 squeezed)
        "wq": 0.1 * jax.random.normal(kq, (inner_dim, dg), dtype=jnp.float32),
        "wk": 0.1 * jax.random.normal(kk, (inner_dim, dg), dtype=jnp.float32),
        "wv": 0.1 * jax.random.normal(kv, (inner_dim, dg), dtype=jnp.float32),
        # to_out Linear: weight [D, inner_dim], bias [D]
        "wo": 0.1 * jax.random.normal(kw, (D, inner_dim), dtype=jnp.float32),
        "bo": 0.1 * jax.random.normal(kb, (D,), dtype=jnp.float32),
    }

    ref = attention_reference(x, params, heads=heads, dim_head=dim_head)

    # Fast default config: bf16 MXU operands + EUP approx reciprocal.
    out = attention_forward(x, params, heads=heads, dim_head=dim_head)
    out = jax.block_until_ready(out)
    assert out.shape == (B, P, K, D)
    err_bf16 = float(jnp.max(jnp.abs(out.astype(jnp.float32) - ref)))
    assert err_bf16 < 3e-2, f"bf16 path max abs err {err_bf16}"

    # Exact config: f32 MXU operands + exact reciprocal -> tight f32 match.
    out_f32 = attention_forward(x, params, heads=heads, dim_head=dim_head,
                                mxu_dtype=jnp.float32, approx_recip=False)
    out_f32 = jax.block_until_ready(out_f32)
    assert jnp.allclose(out_f32, ref, atol=1e-4, rtol=1e-4), \
        f"f32 path max abs err {jnp.max(jnp.abs(out_f32 - ref))}"

    print("KERNEL_OK")
</pallas_src>

<mosaic_0001>
module attributes {stable_mosaic.version = 11 : i64} {
  func.func @attention_kernel(%arg0: i32, %arg1: memref<128x16xf32, #tpu.memory_space<vmem>>, %arg2: memref<16x96xbf16, #tpu.memory_space<vmem>>, %arg3: memref<1x96xf32, #tpu.memory_space<vmem>>, %arg4: memref<32x16xbf16, #tpu.memory_space<vmem>>, %arg5: memref<1x16xf32, #tpu.memory_space<vmem>>, %arg6: memref<128x16xf32, #tpu.memory_space<vmem>>) attributes {dimension_semantics = [#tpu.dimension_semantics<parallel>], iteration_bounds = array<i64: 1>, scalar_prefetch = 0 : i64, scratch_operands = 0 : i64, tpu.core_type = #tpu.core_type<tc>, window_params = [{transform_indices = @transform_0, window_bounds = array<i64: 128, 16>}, {pipeline_mode = #tpu.pipeline_mode<synchronous>, transform_indices = @transform_1, window_bounds = array<i64: 16, 96>}, {pipeline_mode = #tpu.pipeline_mode<synchronous>, transform_indices = @transform_2, window_bounds = array<i64: 1, 96>}, {pipeline_mode = #tpu.pipeline_mode<synchronous>, transform_indices = @transform_3, window_bounds = array<i64: 32, 16>}, {pipeline_mode = #tpu.pipeline_mode<synchronous>, transform_indices = @transform_4, window_bounds = array<i64: 1, 16>}, {transform_indices = @transform_5, window_bounds = array<i64: 128, 16>}]} {
    %c0 = arith.constant 0 : index
    %c0_0 = arith.constant 0 : index
    %0 = vector.load %arg1[%c0, %c0_0] : memref<128x16xf32, #tpu.memory_space<vmem>>, vector<128x16xf32>
    %1 = arith.truncf %0 : vector<128x16xf32> to vector<128x16xbf16>
    %c0_1 = arith.constant 0 : index
    %c0_2 = arith.constant 0 : index
    %2 = vector.load %arg2[%c0_1, %c0_2] : memref<16x96xbf16, #tpu.memory_space<vmem>>, vector<16x96xbf16>
    %cst = arith.constant dense<0.000000e+00> : vector<128x96xf32>
    %3 = tpu.matmul %1, %2, %cst {dimension_numbers = #tpu.dot_dimension_numbers<[1], [0], [0], [1], [0, 0, 1, 1], [], []>} : vector<128x16xbf16>, vector<16x96xbf16>, vector<128x96xf32> -> vector<128x96xf32>
    %c0_3 = arith.constant 0 : index
    %c0_4 = arith.constant 0 : index
    %4 = vector.load %arg3[%c0_3, %c0_4] : memref<1x96xf32, #tpu.memory_space<vmem>>, vector<1x96xf32>
    %5 = vector.broadcast %4 : vector<1x96xf32> to vector<128x96xf32>
    %6 = arith.addf %3, %5 : vector<128x96xf32>
    %7 = vector.extract_strided_slice %6 {offsets = [0, 0], sizes = [128, 8], strides = [1, 1]} : vector<128x96xf32> to vector<128x8xf32>
    %8 = vector.shape_cast %7 : vector<128x8xf32> to vector<16x8x8xf32>
    %9 = arith.truncf %8 : vector<16x8x8xf32> to vector<16x8x8xbf16>
    %10 = vector.extract_strided_slice %6 {offsets = [0, 32], sizes = [128, 8], strides = [1, 1]} : vector<128x96xf32> to vector<128x8xf32>
    %11 = vector.shape_cast %10 : vector<128x8xf32> to vector<16x8x8xf32>
    %12 = arith.truncf %11 : vector<16x8x8xf32> to vector<16x8x8xbf16>
    %13 = vector.extract_strided_slice %6 {offsets = [0, 64], sizes = [128, 8], strides = [1, 1]} : vector<128x96xf32> to vector<128x8xf32>
    %14 = vector.shape_cast %13 : vector<128x8xf32> to vector<16x8x8xf32>
    %15 = arith.truncf %14 : vector<16x8x8xf32> to vector<16x8x8xbf16>
    "tpu.trace_start"() <{level = 10 : i32, message = "tid,tjd->tij"}> : () -> ()
    %cst_5 = arith.constant dense<0.000000e+00> : vector<16x8x8xf32>
    %16 = tpu.matmul %9, %12, %cst_5 {dimension_numbers = #tpu.dot_dimension_numbers<[2], [2], [1], [1], [0, 0, 0, 1, 1, 1], [0], [0]>} : vector<16x8x8xbf16>, vector<16x8x8xbf16>, vector<16x8x8xf32> -> vector<16x8x8xf32>
    "tpu.trace_stop"() : () -> ()
    %cst_6 = arith.constant dense<0xFF800000> : vector<16x8xf32>
    %17 = vector.multi_reduction <maximumf>, %16, %cst_6 [2] : vector<16x8x8xf32> to vector<16x8xf32>
    %18 = vector.shape_cast %17 : vector<16x8xf32> to vector<16x8x1xf32>
    %19 = vector.broadcast %18 : vector<16x8x1xf32> to vector<16x8x8xf32>
    %20 = arith.subf %16, %19 : vector<16x8x8xf32>
    %21 = math.exp %20 : vector<16x8x8xf32>
    %cst_7 = arith.constant dense<0.000000e+00> : vector<16x8xf32>
    %22 = vector.multi_reduction <add>, %21, %cst_7 [2] : vector<16x8x8xf32> to vector<16x8xf32>
    %23 = vector.shape_cast %22 : vector<16x8xf32> to vector<16x8x1xf32>
    %24 = tpu.reciprocal %23 {approx = true} : vector<16x8x1xf32> -> vector<16x8x1xf32>
    %25 = vector.broadcast %24 : vector<16x8x1xf32> to vector<16x8x8xf32>
    %26 = arith.mulf %21, %25 : vector<16x8x8xf32>
    %27 = arith.truncf %26 : vector<16x8x8xf32> to vector<16x8x8xbf16>
    "tpu.trace_start"() <{level = 10 : i32, message = "tij,tjd->tid"}> : () -> ()
    %cst_8 = arith.constant dense<0.000000e+00> : vector<16x8x8xf32>
    %28 = tpu.matmul %27, %15, %cst_8 {dimension_numbers = #tpu.dot_dimension_numbers<[2], [1], [1], [2], [0, 0, 0, 1, 1, 2], [0], [0]>} : vector<16x8x8xbf16>, vector<16x8x8xbf16>, vector<16x8x8xf32> -> vector<16x8x8xf32>
    "tpu.trace_stop"() : () -> ()
    %29 = vector.shape_cast %28 : vector<16x8x8xf32> to vector<128x8xf32>
    %30 = vector.extract_strided_slice %6 {offsets = [0, 8], sizes = [128, 8], strides = [1, 1]} : vector<128x96xf32> to vector<128x8xf32>
    %31 = vector.shape_cast %30 : vector<128x8xf32> to vector<16x8x8xf32>
    %32 = arith.truncf %31 : vector<16x8x8xf32> to vector<16x8x8xbf16>
    %33 = vector.extract_strided_slice %6 {offsets = [0, 40], sizes = [128, 8], strides = [1, 1]} : vector<128x96xf32> to vector<128x8xf32>
    %34 = vector.shape_cast %33 : vector<128x8xf32> to vector<16x8x8xf32>
    %35 = arith.truncf %34 : vector<16x8x8xf32> to vector<16x8x8xbf16>
    %36 = vector.extract_strided_slice %6 {offsets = [0, 72], sizes = [128, 8], strides = [1, 1]} : vector<128x96xf32> to vector<128x8xf32>
    %37 = vector.shape_cast %36 : vector<128x8xf32> to vector<16x8x8xf32>
    %38 = arith.truncf %37 : vector<16x8x8xf32> to vector<16x8x8xbf16>
    "tpu.trace_start"() <{level = 10 : i32, message = "tid,tjd->tij"}> : () -> ()
    %cst_9 = arith.constant dense<0.000000e+00> : vector<16x8x8xf32>
    %39 = tpu.matmul %32, %35, %cst_9 {dimension_numbers = #tpu.dot_dimension_numbers<[2], [2], [1], [1], [0, 0, 0, 1, 1, 1], [0], [0]>} : vector<16x8x8xbf16>, vector<16x8x8xbf16>, vector<16x8x8xf32> -> vector<16x8x8xf32>
    "tpu.trace_stop"() : () -> ()
    %cst_10 = arith.constant dense<0xFF800000> : vector<16x8xf32>
    %40 = vector.multi_reduction <maximumf>, %39, %cst_10 [2] : vector<16x8x8xf32> to vector<16x8xf32>
    %41 = vector.shape_cast %40 : vector<16x8xf32> to vector<16x8x1xf32>
    %42 = vector.broadcast %41 : vector<16x8x1xf32> to vector<16x8x8xf32>
    %43 = arith.subf %39, %42 : vector<16x8x8xf32>
    %44 = math.exp %43 : vector<16x8x8xf32>
    %cst_11 = arith.constant dense<0.000000e+00> : vector<16x8xf32>
    %45 = vector.multi_reduction <add>, %44, %cst_11 [2] : vector<16x8x8xf32> to vector<16x8xf32>
    %46 = vector.shape_cast %45 : vector<16x8xf32> to vector<16x8x1xf32>
    %47 = tpu.reciprocal %46 {approx = true} : vector<16x8x1xf32> -> vector<16x8x1xf32>
    %48 = vector.broadcast %47 : vector<16x8x1xf32> to vector<16x8x8xf32>
    %49 = arith.mulf %44, %48 : vector<16x8x8xf32>
    %50 = arith.truncf %49 : vector<16x8x8xf32> to vector<16x8x8xbf16>
    "tpu.trace_start"() <{level = 10 : i32, message = "tij,tjd->tid"}> : () -> ()
    %cst_12 = arith.constant dense<0.000000e+00> : vector<16x8x8xf32>
    %51 = tpu.matmul %50, %38, %cst_12 {dimension_numbers = #tpu.dot_dimension_numbers<[2], [1], [1], [2], [0, 0, 0, 1, 1, 2], [0], [0]>} : vector<16x8x8xbf16>, vector<16x8x8xbf16>, vector<16x8x8xf32> -> vector<16x8x8xf32>
    "tpu.trace_stop"() : () -> ()
    %52 = vector.shape_cast %51 : vector<16x8x8xf32> to vector<128x8xf32>
    %53 = vector.extract_strided_slice %6 {offsets = [0, 16], sizes = [128, 8], strides = [1, 1]} : vector<128x96xf32> to vector<128x8xf32>
    %54 = vector.shape_cast %53 : vector<128x8xf32> to vector<16x8x8xf32>
    %55 = arith.truncf %54 : vector<16x8x8xf32> to vector<16x8x8xbf16>
    %56 = vector.extract_strided_slice %6 {offsets = [0, 48], sizes = [128, 8], strides = [1, 1]} : vector<128x96xf32> to vector<128x8xf32>
    %57 = vector.shape_cast %56 : vector<128x8xf32> to vector<16x8x8xf32>
    %58 = arith.truncf %57 : vector<16x8x8xf32> to vector<16x8x8xbf16>
    %59 = vector.extract_strided_slice %6 {offsets = [0, 80], sizes = [128, 8], strides = [1, 1]} : vector<128x96xf32> to vector<128x8xf32>
    %60 = vector.shape_cast %59 : vector<128x8xf32> to vector<16x8x8xf32>
    %61 = arith.truncf %60 : vector<16x8x8xf32> to vector<16x8x8xbf16>
    "tpu.trace_start"() <{level = 10 : i32, message = "tid,tjd->tij"}> : () -> ()
    %cst_13 = arith.constant dense<0.000000e+00> : vector<16x8x8xf32>
    %62 = tpu.matmul %55, %58, %cst_13 {dimension_numbers = #tpu.dot_dimension_numbers<[2], [2], [1], [1], [0, 0, 0, 1, 1, 1], [0], [0]>} : vector<16x8x8xbf16>, vector<16x8x8xbf16>, vector<16x8x8xf32> -> vector<16x8x8xf32>
    "tpu.trace_stop"() : () -> ()
    %cst_14 = arith.constant dense<0xFF800000> : vector<16x8xf32>
    %63 = vector.multi_reduction <maximumf>, %62, %cst_14 [2] : vector<16x8x8xf32> to vector<16x8xf32>
    %64 = vector.shape_cast %63 : vector<16x8xf32> to vector<16x8x1xf32>
    %65 = vector.broadcast %64 : vector<16x8x1xf32> to vector<16x8x8xf32>
    %66 = arith.subf %62, %65 : vector<16x8x8xf32>
    %67 = math.exp %66 : vector<16x8x8xf32>
    %cst_15 = arith.constant dense<0.000000e+00> : vector<16x8xf32>
    %68 = vector.multi_reduction <add>, %67, %cst_15 [2] : vector<16x8x8xf32> to vector<16x8xf32>
    %69 = vector.shape_cast %68 : vector<16x8xf32> to vector<16x8x1xf32>
    %70 = tpu.reciprocal %69 {approx = true} : vector<16x8x1xf32> -> vector<16x8x1xf32>
    %71 = vector.broadcast %70 : vector<16x8x1xf32> to vector<16x8x8xf32>
    %72 = arith.mulf %67, %71 : vector<16x8x8xf32>
    %73 = arith.truncf %72 : vector<16x8x8xf32> to vector<16x8x8xbf16>
    "tpu.trace_start"() <{level = 10 : i32, message = "tij,tjd->tid"}> : () -> ()
    %cst_16 = arith.constant dense<0.000000e+00> : vector<16x8x8xf32>
    %74 = tpu.matmul %73, %61, %cst_16 {dimension_numbers = #tpu.dot_dimension_numbers<[2], [1], [1], [2], [0, 0, 0, 1, 1, 2], [0], [0]>} : vector<16x8x8xbf16>, vector<16x8x8xbf16>, vector<16x8x8xf32> -> vector<16x8x8xf32>
    "tpu.trace_stop"() : () -> ()
    %75 = vector.shape_cast %74 : vector<16x8x8xf32> to vector<128x8xf32>
    %76 = vector.extract_strided_slice %6 {offsets = [0, 24], sizes = [128, 8], strides = [1, 1]} : vector<128x96xf32> to vector<128x8xf32>
    %77 = vector.shape_cast %76 : vector<128x8xf32> to vector<16x8x8xf32>
    %78 = arith.truncf %77 : vector<16x8x8xf32> to vector<16x8x8xbf16>
    %79 = vector.extract_strided_slice %6 {offsets = [0, 56], sizes = [128, 8], strides = [1, 1]} : vector<128x96xf32> to vector<128x8xf32>
    %80 = vector.shape_cast %79 : vector<128x8xf32> to vector<16x8x8xf32>
    %81 = arith.truncf %80 : vector<16x8x8xf32> to vector<16x8x8xbf16>
    %82 = vector.extract_strided_slice %6 {offsets = [0, 88], sizes = [128, 8], strides = [1, 1]} : vector<128x96xf32> to vector<128x8xf32>
    %83 = vector.shape_cast %82 : vector<128x8xf32> to vector<16x8x8xf32>
    %84 = arith.truncf %83 : vector<16x8x8xf32> to vector<16x8x8xbf16>
    "tpu.trace_start"() <{level = 10 : i32, message = "tid,tjd->tij"}> : () -> ()
    %cst_17 = arith.constant dense<0.000000e+00> : vector<16x8x8xf32>
    %85 = tpu.matmul %78, %81, %cst_17 {dimension_numbers = #tpu.dot_dimension_numbers<[2], [2], [1], [1], [0, 0, 0, 1, 1, 1], [0], [0]>} : vector<16x8x8xbf16>, vector<16x8x8xbf16>, vector<16x8x8xf32> -> vector<16x8x8xf32>
    "tpu.trace_stop"() : () -> ()
    %cst_18 = arith.constant dense<0xFF800000> : vector<16x8xf32>
    %86 = vector.multi_reduction <maximumf>, %85, %cst_18 [2] : vector<16x8x8xf32> to vector<16x8xf32>
    %87 = vector.shape_cast %86 : vector<16x8xf32> to vector<16x8x1xf32>
    %88 = vector.broadcast %87 : vector<16x8x1xf32> to vector<16x8x8xf32>
    %89 = arith.subf %85, %88 : vector<16x8x8xf32>
    %90 = math.exp %89 : vector<16x8x8xf32>
    %cst_19 = arith.constant dense<0.000000e+00> : vector<16x8xf32>
    %91 = vector.multi_reduction <add>, %90, %cst_19 [2] : vector<16x8x8xf32> to vector<16x8xf32>
    %92 = vector.shape_cast %91 : vector<16x8xf32> to vector<16x8x1xf32>
    %93 = tpu.reciprocal %92 {approx = true} : vector<16x8x1xf32> -> vector<16x8x1xf32>
    %94 = vector.broadcast %93 : vector<16x8x1xf32> to vector<16x8x8xf32>
    %95 = arith.mulf %90, %94 : vector<16x8x8xf32>
    %96 = arith.truncf %95 : vector<16x8x8xf32> to vector<16x8x8xbf16>
    "tpu.trace_start"() <{level = 10 : i32, message = "tij,tjd->tid"}> : () -> ()
    %cst_20 = arith.constant dense<0.000000e+00> : vector<16x8x8xf32>
    %97 = tpu.matmul %96, %84, %cst_20 {dimension_numbers = #tpu.dot_dimension_numbers<[2], [1], [1], [2], [0, 0, 0, 1, 1, 2], [0], [0]>} : vector<16x8x8xbf16>, vector<16x8x8xbf16>, vector<16x8x8xf32> -> vector<16x8x8xf32>
    "tpu.trace_stop"() : () -> ()
    %98 = vector.shape_cast %97 : vector<16x8x8xf32> to vector<128x8xf32>
    %99 = tpu.concatenate %29, %52, %75, %98 in 1 : vector<128x8xf32>, vector<128x8xf32>, vector<128x8xf32>, vector<128x8xf32> -> vector<128x32xf32>
    %100 = arith.truncf %99 : vector<128x32xf32> to vector<128x32xbf16>
    %c0_21 = arith.constant 0 : index
    %c0_22 = arith.constant 0 : index
    %101 = vector.load %arg4[%c0_21, %c0_22] : memref<32x16xbf16, #tpu.memory_space<vmem>>, vector<32x16xbf16>
    %cst_23 = arith.constant dense<0.000000e+00> : vector<128x16xf32>
    %102 = tpu.matmul %100, %101, %cst_23 {dimension_numbers = #tpu.dot_dimension_numbers<[1], [0], [0], [1], [0, 0, 1, 1], [], []>} : vector<128x32xbf16>, vector<32x16xbf16>, vector<128x16xf32> -> vector<128x16xf32>
    %c0_24 = arith.constant 0 : index
    %c0_25 = arith.constant 0 : index
    %103 = vector.load %arg5[%c0_24, %c0_25] : memref<1x16xf32, #tpu.memory_space<vmem>>, vector<1x16xf32>
    %104 = vector.broadcast %103 : vector<1x16xf32> to vector<128x16xf32>
    %105 = arith.addf %102, %104 : vector<128x16xf32>
    %c0_26 = arith.constant 0 : index
    %c0_27 = arith.constant 0 : index
    %106 = vector.load %arg6[%c0_26, %c0_27] : memref<128x16xf32, #tpu.memory_space<vmem>>, vector<128x16xf32>
    tpu.vector_store %arg6[%c0_26, %c0_27], %105 {strides = array<i32>} : memref<128x16xf32, #tpu.memory_space<vmem>>, vector<128x16xf32>,
    return
  }
  func.func @transform_0(%arg0: i32) -> (i32, i32) {
    %c0_i32 = arith.constant 0 : i32
    %c0_i32_0 = arith.constant 0 : i32
    return %arg0, %c0_i32 : i32, i32
  }
  func.func @transform_1(%arg0: i32) -> (i32, i32) {
    %c0_i32 = arith.constant 0 : i32
    %c0_i32_0 = arith.constant 0 : i32
    %c0_i32_1 = arith.constant 0 : i32
    return %c0_i32, %c0_i32_0 : i32, i32
  }
  func.func @transform_2(%arg0: i32) -> (i32, i32) {
    %c0_i32 = arith.constant 0 : i32
    %c0_i32_0 = arith.constant 0 : i32
    %c0_i32_1 = arith.constant 0 : i32
    return %c0_i32, %c0_i32_0 : i32, i32
  }
  func.func @transform_3(%arg0: i32) -> (i32, i32) {
    %c0_i32 = arith.constant 0 : i32
    %c0_i32_0 = arith.constant 0 : i32
    %c0_i32_1 = arith.constant 0 : i32
    return %c0_i32, %c0_i32_0 : i32, i32
  }
  func.func @transform_4(%arg0: i32) -> (i32, i32) {
    %c0_i32 = arith.constant 0 : i32
    %c0_i32_0 = arith.constant 0 : i32
    %c0_i32_1 = arith.constant 0 : i32
    return %c0_i32, %c0_i32_0 : i32, i32
  }
  func.func @transform_5(%arg0: i32) -> (i32, i32) {
    %c0_i32 = arith.constant 0 : i32
    %c0_i32_0 = arith.constant 0 : i32
    return %arg0, %c0_i32 : i32, i32
  }
}

</mosaic_0001>

<llo_original>
// kernel: tpu_custom_call.1
$region0: #{tpu_custom_call.1}
  #allocation0 [shape = 'u32[]', space=smem, size = 0x4, offset = 0x4, fixed_abs, tag = 'smem constant byte address 0x4 - core index']
  #allocation1 [shape = 'u32[72,128]{1,0:T(1,128)}', space=vmem, size = 0x9000, scoped, tag = 'internal scratch']
  %s0 = inlined_call_operand.vmem [shape: f32[128,16], index: 0, kind: input, shape index: {}]
  %s1 = inlined_call_operand.vmem [shape: bf16[16,96], index: 1, kind: input, shape index: {}]
  %s2 = inlined_call_operand.vmem [shape: f32[1,96], index: 2, kind: input, shape index: {}]
  %s3 = inlined_call_operand.vmem [shape: bf16[32,16], index: 3, kind: input, shape index: {}]
  %s4 = inlined_call_operand.vmem [shape: f32[1,16], index: 4, kind: input, shape index: {}]
  %s5 = inlined_call_operand.vmem [shape: f32[128,16], index: 5, kind: output, shape index: {}]
  %s6 = sld [smem:[#allocation0]]
  $region30: #{tpu_custom_call.1} parent=0
    _
  %s8 = ssub.s32 1, %s6
  %s9 = scalar_select 0, %s8, %s6
  // Predicated region
  $region2: #{tpu_custom_call.1} parent=0 // pred_check
    _
  $region3: #{tpu_custom_call.1} parent=0 // pred_check_branch
    %11 = sbr.rel (0) target = $region5
  $region4: #{tpu_custom_call.1} parent=0 // pred_region
    _
  $region5: #{tpu_custom_call.1} parent=0 // pred_fallthru
    _
  // Predicated region
  $region6: #{tpu_custom_call.1} parent=0 // pred_check
    _
  $region7: #{tpu_custom_call.1} parent=0 // pred_check_branch
    %13 = sbr.rel (0) target = $region9
  $region8: #{tpu_custom_call.1} parent=0 // pred_region
    _
  $region9: #{tpu_custom_call.1} parent=0 // pred_fallthru
    _
  // Predicated region
  $region10: #{tpu_custom_call.1} parent=0 // pred_check
    _
  $region11: #{tpu_custom_call.1} parent=0 // pred_check_branch
    %15 = sbr.rel (0) target = $region13
  $region12: #{tpu_custom_call.1} parent=0 // pred_region
    _
  $region13: #{tpu_custom_call.1} parent=0 // pred_fallthru
    _
  // Predicated region
  $region14: #{tpu_custom_call.1} parent=0 // pred_check
    _
  $region15: #{tpu_custom_call.1} parent=0 // pred_check_branch
    %17 = sbr.rel (0) target = $region17
  $region16: #{tpu_custom_call.1} parent=0 // pred_region
    _
  $region17: #{tpu_custom_call.1} parent=0 // pred_fallthru
    _
  // Predicated region
  $region18: #{tpu_custom_call.1} parent=0 // pred_check
    _
  $region19: #{tpu_custom_call.1} parent=0 // pred_check_branch
    %19 = sbr.rel (0) target = $region21
  $region20: #{tpu_custom_call.1} parent=0 // pred_region
    _
  $region21: #{tpu_custom_call.1} parent=0 // pred_fallthru
    _
  %v21 = vld [vmem:[%s0] sm:$0xff]
  %v22 = vld [vmem:[%s0 + $0x8] sm:$0xff]
  %v23 = vld [vmem:[%s0 + $0x10] sm:$0xff]
  %v24 = vld [vmem:[%s0 + $0x18] sm:$0xff]
  %v25 = vld [vmem:[%s0 + $0x20] sm:$0xff]
  %v26 = vld [vmem:[%s0 + $0x28] sm:$0xff]
  %v27 = vld [vmem:[%s0 + $0x30] sm:$0xff]
  %v28 = vld [vmem:[%s0 + $0x38] sm:$0xff]
  %v29 = vld [vmem:[%s0 + $0x40] sm:$0xff]
  %v30 = vld [vmem:[%s0 + $0x48] sm:$0xff]
  %v31 = vld [vmem:[%s0 + $0x50] sm:$0xff]
  %v32 = vld [vmem:[%s0 + $0x58] sm:$0xff]
  %v33 = vld [vmem:[%s0 + $0x60] sm:$0xff]
  %v34 = vld [vmem:[%s0 + $0x68] sm:$0xff]
  %v35 = vld [vmem:[%s0 + $0x70] sm:$0xff]
  %v36 = vld [vmem:[%s0 + $0x78] sm:$0xff]
  %v37 = vpack.c.bf16 %v22, %v21
  %v38 = vpack.c.bf16 %v24, %v23
  %v39 = vpack.c.bf16 %v26, %v25
  %v40 = vpack.c.bf16 %v28, %v27
  %v41 = vpack.c.bf16 %v30, %v29
  %v42 = vpack.c.bf16 %v32, %v31
  %v43 = vpack.c.bf16 %v34, %v33
  %v44 = vpack.c.bf16 %v36, %v35
  %v45 = vld [vmem:[%s1] sm:$0xf]
  %v46 = vld [vmem:[%s1 + $0x4] sm:$0xf]
  %v47 = vld [vmem:[%s2] sm:$0x1]
  %v49 = vperm.slane %v47, 0
  %v53 = vunpack.c.l.b16 %v45
  %v54 = vunpack.c.l.b16 %v46
  %v55 = vpack.c.b16 %v54, %v53
  %vm57 = vcmask 130048
  %v59 = vsel %vm57, %v37, 0
  %v62 = vsel %vm57, %v38, 0
  %v65 = vsel %vm57, %v39, 0
  %v68 = vsel %vm57, %v40, 0
  %v71 = vsel %vm57, %v41, 0
  %v74 = vsel %vm57, %v42, 0
  %v77 = vsel %vm57, %v43, 0
  %v80 = vsel %vm57, %v44, 0
  %82 = vmatpush.bf16.msra.mxu0 0
  %83 = vmatpush.bf16.msra.mxu0 0
  %84 = vmatpush.bf16.msra.mxu0 0
  %85 = vmatpush.bf16.msra.mxu0 0
  %86 = vmatpush.bf16.msra.mxu0 0
  %87 = vmatpush.bf16.msra.mxu0 0
  %88 = vmatpush.bf16.msra.mxu0 0
  %89 = vmatpush.bf16.msra.mxu0 %v55
  %90 = vmatmul.bf16.gmra.mxu0 %v59
  %v91 = vpop.f32.mrf.mxu0
  %v92 = vadd.f32 %v49, %v91
  %v93 = vpop.f32.mrf.mxu0
  %v94 = vadd.f32 %v49, %v93
  %95 = vmatmul.bf16.gmra.mxu0 %v62
  %v96 = vpop.f32.mrf.mxu0
  %v97 = vadd.f32 %v49, %v96
  %v98 = vpop.f32.mrf.mxu0
  %v99 = vadd.f32 %v49, %v98
  %100 = vmatmul.bf16.gmra.mxu0 %v65
  %v101 = vpop.f32.mrf.mxu0
  %v102 = vadd.f32 %v49, %v101
  %v103 = vpop.f32.mrf.mxu0
  %v104 = vadd.f32 %v49, %v103
  %105 = vmatmul.bf16.gmra.mxu0 %v68
  %v106 = vpop.f32.mrf.mxu0
  %v107 = vadd.f32 %v49, %v106
  %v108 = vpop.f32.mrf.mxu0
  %v109 = vadd.f32 %v49, %v108
  %110 = vmatmul.bf16.gmra.mxu0 %v71
  %v111 = vpop.f32.mrf.mxu0
  %v112 = vadd.f32 %v49, %v111
  %v113 = vpop.f32.mrf.mxu0
  %v114 = vadd.f32 %v49, %v113
  %115 = vmatmul.bf16.gmra.mxu0 %v74
  %v116 = vpop.f32.mrf.mxu0
  %v117 = vadd.f32 %v49, %v116
  %v118 = vpop.f32.mrf.mxu0
  %v119 = vadd.f32 %v49, %v118
  %120 = vmatmul.bf16.gmra.mxu0 %v77
  %v121 = vpop.f32.mrf.mxu0
  %v122 = vadd.f32 %v49, %v121
  %v123 = vpop.f32.mrf.mxu0
  %v124 = vadd.f32 %v49, %v123
  %125 = vmatmul.bf16.gmra.mxu0 %v80
  %v126 = vpop.f32.mrf.mxu0
  %v127 = vadd.f32 %v49, %v126
  %v128 = vpop.f32.mrf.mxu0
  %v129 = vadd.f32 %v49, %v128
  %130 = vdwg.mxu0
  %v131 = vpack.c.bf16 %v92, %v92
  %v132 = vpack.c.bf16 %v94, %v94
  %v133 = vpack.c.bf16 %v97, %v97
  %v134 = vpack.c.bf16 %v99, %v99
  %v135 = vpack.c.bf16 %v102, %v102
  %v136 = vpack.c.bf16 %v104, %v104
  %v137 = vpack.c.bf16 %v107, %v107
  %v138 = vpack.c.bf16 %v109, %v109
  %v139 = vpack.c.bf16 %v112, %v112
  %v140 = vpack.c.bf16 %v114, %v114
  %v141 = vpack.c.bf16 %v117, %v117
  %v142 = vpack.c.bf16 %v119, %v119
  %v143 = vpack.c.bf16 %v122, %v122
  %v144 = vpack.c.bf16 %v124, %v124
  %v145 = vpack.c.bf16 %v127, %v127
  %v146 = vpack.c.bf16 %v129, %v129
  %v148 = vunpack.c.l.b16 %v131
  %v149 = vpack.c.b16 %v148, %v148
  %150 = vrot.lane.b32.xlu0 %v149, 96
  %v151 = vpop.permute.xlu0 %150
  %vm152 = vcmask 64512
  %v154 = vsel %vm152, %v131, 0
  %v157 = vsel %vm152, %v151, 0
  %159 = vmatpush.bf16.xpose.msra.mxu0 0
  %160 = vmatpush.bf16.xpose.msra.mxu0 0
  %161 = vmatpush.bf16.xpose.msra.mxu0 0
  %162 = vmatpush.bf16.xpose.msra.mxu0 0
  %163 = vmatpush.bf16.xpose.msra.mxu0 0
  %164 = vmatpush.bf16.xpose.msra.mxu0 0
  %165 = vmatpush.bf16.xpose.msra.mxu0 0
  %166 = vmatpush.bf16.xpose.msra.mxu0 %v157
  %167 = vmatmul.bf16.gmra.mxu0 %v154
  %v168 = vpop.f32.mrf.mxu0
  %v169 = vadd.f32 0.0, %v168
  %v170 = vpop.f32.mrf.mxu0
  %171 = vdwg.mxu0
  %v173 = vunpack.c.l.b16 %v132
  %v174 = vpack.c.b16 %v173, %v173
  %175 = vrot.lane.b32.xlu0 %v174, 96
  %v176 = vpop.permute.xlu0 %175
  %v178 = vsel %vm152, %v132, 0
  %v181 = vsel %vm152, %v176, 0
  %183 = vmatpush.bf16.xpose.msra.mxu0 0
  %184 = vmatpush.bf16.xpose.msra.mxu0 0
  %185 = vmatpush.bf16.xpose.msra.mxu0 0
  %186 = vmatpush.bf16.xpose.msra.mxu0 0
  %187 = vmatpush.bf16.xpose.msra.mxu0 0
  %188 = vmatpush.bf16.xpose.msra.mxu0 0
  %189 = vmatpush.bf16.xpose.msra.mxu0 0
  %190 = vmatpush.bf16.xpose.msra.mxu0 %v181
  %191 = vmatmul.bf16.gmra.mxu0 %v178
  %v192 = vpop.f32.mrf.mxu0
  %v193 = vadd.f32 0.0, %v192
  %v194 = vpop.f32.mrf.mxu0
  %195 = vdwg.mxu0
  %v197 = vunpack.c.l.b16 %v133
  %v198 = vpack.c.b16 %v197, %v197
  %199 = vrot.lane.b32.xlu0 %v198, 96
  %v200 = vpop.permute.xlu0 %199
  %v202 = vsel %vm152, %v133, 0
  %v205 = vsel %vm152, %v200, 0
  %207 = vmatpush.bf16.xpose.msra.mxu0 0
  %208 = vmatpush.bf16.xpose.msra.mxu0 0
  %209 = vmatpush.bf16.xpose.msra.mxu0 0
  %210 = vmatpush.bf16.xpose.msra.mxu0 0
  %211 = vmatpush.bf16.xpose.msra.mxu0 0
  %212 = vmatpush.bf16.xpose.msra.mxu0 0
  %213 = vmatpush.bf16.xpose.msra.mxu0 0
  %214 = vmatpush.bf16.xpose.msra.mxu0 %v205
  %215 = vmatmul.bf16.gmra.mxu0 %v202
  %v216 = vpop.f32.mrf.mxu0
  %v217 = vadd.f32 0.0, %v216
  %v218 = vpop.f32.mrf.mxu0
  %219 = vdwg.mxu0
  %v221 = vunpack.c.l.b16 %v134
  %v222 = vpack.c.b16 %v221, %v221
  %223 = vrot.lane.b32.xlu0 %v222, 96
  %v224 = vpop.permute.xlu0 %223
  %v226 = vsel %vm152, %v134, 0
  %v229 = vsel %vm152, %v224, 0
  %231 = vmatpush.bf16.xpose.msra.mxu0 0
  %232 = vmatpush.bf16.xpose.msra.mxu0 0
  %233 = vmatpush.bf16.xpose.msra.mxu0 0
  %234 = vmatpush.bf16.xpose.msra.mxu0 0
  %235 = vmatpush.bf16.xpose.msra.mxu0 0
  %236 = vmatpush.bf16.xpose.msra.mxu0 0
  %237 = vmatpush.bf16.xpose.msra.mxu0 0
  %238 = vmatpush.bf16.xpose.msra.mxu0 %v229
  %239 = vmatmul.bf16.gmra.mxu0 %v226
  %v240 = vpop.f32.mrf.mxu0
  %v241 = vadd.f32 0.0, %v240
  %v242 = vpop.f32.mrf.mxu0
  %243 = vdwg.mxu0
  %v245 = vunpack.c.l.b16 %v135
  %v246 = vpack.c.b16 %v245, %v245
  %247 = vrot.lane.b32.xlu0 %v246, 96
  %v248 = vpop.permute.xlu0 %247
  %v250 = vsel %vm152, %v135, 0
  %v253 = vsel %vm152, %v248, 0
  %255 = vmatpush.bf16.xpose.msra.mxu0 0
  %256 = vmatpush.bf16.xpose.msra.mxu0 0
  %257 = vmatpush.bf16.xpose.msra.mxu0 0
  %258 = vmatpush.bf16.xpose.msra.mxu0 0
  %259 = vmatpush.bf16.xpose.msra.mxu0 0
  %260 = vmatpush.bf16.xpose.msra.mxu0 0
  %261 = vmatpush.bf16.xpose.msra.mxu0 0
  %262 = vmatpush.bf16.xpose.msra.mxu0 %v253
  %263 = vmatmul.bf16.gmra.mxu0 %v250
  %v264 = vpop.f32.mrf.mxu0
  %v265 = vadd.f32 0.0, %v264
  %v266 = vpop.f32.mrf.mxu0
  %267 = vdwg.mxu0
  %v269 = vunpack.c.l.b16 %v136
  %v270 = vpack.c.b16 %v269, %v269
  %271 = vrot.lane.b32.xlu0 %v270, 96
  %v272 = vpop.permute.xlu0 %271
  %v274 = vsel %vm152, %v136, 0
  %v277 = vsel %vm152, %v272, 0
  %279 = vmatpush.bf16.xpose.msra.mxu0 0
  %280 = vmatpush.bf16.xpose.msra.mxu0 0
  %281 = vmatpush.bf16.xpose.msra.mxu0 0
  %282 = vmatpush.bf16.xpose.msra.mxu0 0
  %283 = vmatpush.bf16.xpose.msra.mxu0 0
  %284 = vmatpush.bf16.xpose.msra.mxu0 0
  %285 = vmatpush.bf16.xpose.msra.mxu0 0
  %286 = vmatpush.bf16.xpose.msra.mxu0 %v277
  %287 = vmatmul.bf16.gmra.mxu0 %v274
  %v288 = vpop.f32.mrf.mxu0
  %v289 = vadd.f32 0.0, %v288
  %v290 = vpop.f32.mrf.mxu0
  %291 = vdwg.mxu0
  %v293 = vunpack.c.l.b16 %v137
  %v294 = vpack.c.b16 %v293, %v293
  %295 = vrot.lane.b32.xlu0 %v294, 96
  %v296 = vpop.permute.xlu0 %295
  %v298 = vsel %vm152, %v137, 0
  %v301 = vsel %vm152, %v296, 0
  %303 = vmatpush.bf16.xpose.msra.mxu0 0
  %304 = vmatpush.bf16.xpose.msra.mxu0 0
  %305 = vmatpush.bf16.xpose.msra.mxu0 0
  %306 = vmatpush.bf16.xpose.msra.mxu0 0
  %307 = vmatpush.bf16.xpose.msra.mxu0 0
  %308 = vmatpush.bf16.xpose.msra.mxu0 0
  %309 = vmatpush.bf16.xpose.msra.mxu0 0
  %310 = vmatpush.bf16.xpose.msra.mxu0 %v301
  %311 = vmatmul.bf16.gmra.mxu0 %v298
  %v312 = vpop.f32.mrf.mxu0
  %v313 = vadd.f32 0.0, %v312
  %v314 = vpop.f32.mrf.mxu0
  %315 = vdwg.mxu0
  %v317 = vunpack.c.l.b16 %v138
  %v318 = vpack.c.b16 %v317, %v317
  %319 = vrot.lane.b32.xlu0 %v318, 96
  %v320 = vpop.permute.xlu0 %319
  %v322 = vsel %vm152, %v138, 0
  %v325 = vsel %vm152, %v320, 0
  %327 = vmatpush.bf16.xpose.msra.mxu0 0
  %328 = vmatpush.bf16.xpose.msra.mxu0 0
  %329 = vmatpush.bf16.xpose.msra.mxu0 0
  %330 = vmatpush.bf16.xpose.msra.mxu0 0
  %331 = vmatpush.bf16.xpose.msra.mxu0 0
  %332 = vmatpush.bf16.xpose.msra.mxu0 0
  %333 = vmatpush.bf16.xpose.msra.mxu0 0
  %334 = vmatpush.bf16.xpose.msra.mxu0 %v325
  %335 = vmatmul.bf16.gmra.mxu0 %v322
  %v336 = vpop.f32.mrf.mxu0
  %v337 = vadd.f32 0.0, %v336
  %v338 = vpop.f32.mrf.mxu0
  %339 = vdwg.mxu0
  %v341 = vunpack.c.l.b16 %v139
  %v342 = vpack.c.b16 %v341, %v341
  %343 = vrot.lane.b32.xlu0 %v342, 96
  %v344 = vpop.permute.xlu0 %343
  %v346 = vsel %vm152, %v139, 0
  %v349 = vsel %vm152, %v344, 0
  %351 = vmatpush.bf16.xpose.msra.mxu0 0
  %352 = vmatpush.bf16.xpose.msra.mxu0 0
  %353 = vmatpush.bf16.xpose.msra.mxu0 0
  %354 = vmatpush.bf16.xpose.msra.mxu0 0
  %355 = vmatpush.bf16.xpose.msra.mxu0 0
  %356 = vmatpush.bf16.xpose.msra.mxu0 0
  %357 = vmatpush.bf16.xpose.msra.mxu0 0
  %358 = vmatpush.bf16.xpose.msra.mxu0 %v349
  %359 = vmatmul.bf16.gmra.mxu0 %v346
  %v360 = vpop.f32.mrf.mxu0
  %v361 = vadd.f32 0.0, %v360
  %v362 = vpop.f32.mrf.mxu0
  %363 = vdwg.mxu0
  %v365 = vunpack.c.l.b16 %v140
  %v366 = vpack.c.b16 %v365, %v365
  %367 = vrot.lane.b32.xlu0 %v366, 96
  %v368 = vpop.permute.xlu0 %367
  %v370 = vsel %vm152, %v140, 0
  %v373 = vsel %vm152, %v368, 0
  %375 = vmatpush.bf16.xpose.msra.mxu0 0
  %376 = vmatpush.bf16.xpose.msra.mxu0 0
  %377 = vmatpush.bf16.xpose.msra.mxu0 0
  %378 = vmatpush.bf16.xpose.msra.mxu0 0
  %379 = vmatpush.bf16.xpose.msra.mxu0 0
  %380 = vmatpush.bf16.xpose.msra.mxu0 0
  %381 = vmatpush.bf16.xpose.msra.mxu0 0
  %382 = vmatpush.bf16.xpose.msra.mxu0 %v373
  %383 = vmatmul.bf16.gmra.mxu0 %v370
  %v384 = vpop.f32.mrf.mxu0
  %v385 = vadd.f32 0.0, %v384
  %v386 = vpop.f32.mrf.mxu0
  %387 = vdwg.mxu0
  %v389 = vunpack.c.l.b16 %v141
  %v390 = vpack.c.b16 %v389, %v389
  %391 = vrot.lane.b32.xlu0 %v390, 96
  %v392 = vpop.permute.xlu0 %391
  %v394 = vsel %vm152, %v141, 0
  %v397 = vsel %vm152, %v392, 0
  %399 = vmatpush.bf16.xpose.msra.mxu0 0
  %400 = vmatpush.bf16.xpose.msra.mxu0 0
  %401 = vmatpush.bf16.xpose.msra.mxu0 0
  %402 = vmatpush.bf16.xpose.msra.mxu0 0
  %403 = vmatpush.bf16.xpose.msra.mxu0 0
  %404 = vmatpush.bf16.xpose.msra.mxu0 0
  %405 = vmatpush.bf16.xpose.msra.mxu0 0
  %406 = vmatpush.bf16.xpose.msra.mxu0 %v397
  %407 = vmatmul.bf16.gmra.mxu0 %v394
  %v408 = vpop.f32.mrf.mxu0
  %v409 = vadd.f32 0.0, %v408
  %v410 = vpop.f32.mrf.mxu0
  %411 = vdwg.mxu0
  %v413 = vunpack.c.l.b16 %v142
  %v414 = vpack.c.b16 %v413, %v413
  %415 = vrot.lane.b32.xlu0 %v414, 96
  %v416 = vpop.permute.xlu0 %415
  %v418 = vsel %vm152, %v142, 0
  %v421 = vsel %vm152, %v416, 0
  %423 = vmatpush.bf16.xpose.msra.mxu0 0
  %424 = vmatpush.bf16.xpose.msra.mxu0 0
  %425 = vmatpush.bf16.xpose.msra.mxu0 0
  %426 = vmatpush.bf16.xpose.msra.mxu0 0
  %427 = vmatpush.bf16.xpose.msra.mxu0 0
  %428 = vmatpush.bf16.xpose.msra.mxu0 0
  %429 = vmatpush.bf16.xpose.msra.mxu0 0
  %430 = vmatpush.bf16.xpose.msra.mxu0 %v421
  %431 = vmatmul.bf16.gmra.mxu0 %v418
  %v432 = vpop.f32.mrf.mxu0
  %v433 = vadd.f32 0.0, %v432
  %v434 = vpop.f32.mrf.mxu0
  %435 = vdwg.mxu0
  %v437 = vunpack.c.l.b16 %v143
  %v438 = vpack.c.b16 %v437, %v437
  %439 = vrot.lane.b32.xlu0 %v438, 96
  %v440 = vpop.permute.xlu0 %439
  %v442 = vsel %vm152, %v143, 0
  %v445 = vsel %vm152, %v440, 0
  %447 = vmatpush.bf16.xpose.msra.mxu0 0
  %448 = vmatpush.bf16.xpose.msra.mxu0 0
  %449 = vmatpush.bf16.xpose.msra.mxu0 0
  %450 = vmatpush.bf16.xpose.msra.mxu0 0
  %451 = vmatpush.bf16.xpose.msra.mxu0 0
  %452 = vmatpush.bf16.xpose.msra.mxu0 0
  %453 = vmatpush.bf16.xpose.msra.mxu0 0
  %454 = vmatpush.bf16.xpose.msra.mxu0 %v445
  %455 = vmatmul.bf16.gmra.mxu0 %v442
  %v456 = vpop.f32.mrf.mxu0
  %v457 = vadd.f32 0.0, %v456
  %v458 = vpop.f32.mrf.mxu0
  %459 = vdwg.mxu0
  %v461 = vunpack.c.l.b16 %v144
  %v462 = vpack.c.b16 %v461, %v461
  %463 = vrot.lane.b32.xlu0 %v462, 96
  %v464 = vpop.permute.xlu0 %463
  %v466 = vsel %vm152, %v144, 0
  %v469 = vsel %vm152, %v464, 0
  %471 = vmatpush.bf16.xpose.msra.mxu0 0
  %472 = vmatpush.bf16.xpose.msra.mxu0 0
  %473 = vmatpush.bf16.xpose.msra.mxu0 0
  %474 = vmatpush.bf16.xpose.msra.mxu0 0
  %475 = vmatpush.bf16.xpose.msra.mxu0 0
  %476 = vmatpush.bf16.xpose.msra.mxu0 0
  %477 = vmatpush.bf16.xpose.msra.mxu0 0
  %478 = vmatpush.bf16.xpose.msra.mxu0 %v469
  %479 = vmatmul.bf16.gmra.mxu0 %v466
  %v480 = vpop.f32.mrf.mxu0
  %v481 = vadd.f32 0.0, %v480
  %v482 = vpop.f32.mrf.mxu0
  %483 = vdwg.mxu0
  %v485 = vunpack.c.l.b16 %v145
  %v486 = vpack.c.b16 %v485, %v485
  %487 = vrot.lane.b32.xlu0 %v486, 96
  %v488 = vpop.permute.xlu0 %487
  %v490 = vsel %vm152, %v145, 0
  %v493 = vsel %vm152, %v488, 0
  %495 = vmatpush.bf16.xpose.msra.mxu0 0
  %496 = vmatpush.bf16.xpose.msra.mxu0 0
  %497 = vmatpush.bf16.xpose.msra.mxu0 0
  %498 = vmatpush.bf16.xpose.msra.mxu0 0
  %499 = vmatpush.bf16.xpose.msra.mxu0 0
  %500 = vmatpush.bf16.xpose.msra.mxu0 0
  %501 = vmatpush.bf16.xpose.msra.mxu0 0
  %502 = vmatpush.bf16.xpose.msra.mxu0 %v493
  %503 = vmatmul.bf16.gmra.mxu0 %v490
  %v504 = vpop.f32.mrf.mxu0
  %v505 = vadd.f32 0.0, %v504
  %v506 = vpop.f32.mrf.mxu0
  %507 = vdwg.mxu0
  %v509 = vunpack.c.l.b16 %v146
  %v510 = vpack.c.b16 %v509, %v509
  %511 = vrot.lane.b32.xlu0 %v510, 96
  %v512 = vpop.permute.xlu0 %511
  %v514 = vsel %vm152, %v146, 0
  %v517 = vsel %vm152, %v512, 0
  %519 = vmatpush.bf16.xpose.msra.mxu0 0
  %520 = vmatpush.bf16.xpose.msra.mxu0 0
  %521 = vmatpush.bf16.xpose.msra.mxu0 0
  %522 = vmatpush.bf16.xpose.msra.mxu0 0
  %523 = vmatpush.bf16.xpose.msra.mxu0 0
  %524 = vmatpush.bf16.xpose.msra.mxu0 0
  %525 = vmatpush.bf16.xpose.msra.mxu0 0
  %526 = vmatpush.bf16.xpose.msra.mxu0 %v517
  %527 = vmatmul.bf16.gmra.mxu0 %v514
  %v528 = vpop.f32.mrf.mxu0
  %v529 = vadd.f32 0.0, %v528
  %v530 = vpop.f32.mrf.mxu0
  %531 = vdwg.mxu0
  %v532 = vsel %vm152, %v169, -inf
  %533 = vmax.xlane.f32.xlu0 %v532
  %v534 = vpop.xlane.xlu0 %533
  %v535 = vsel %vm152, %v193, -inf
  %536 = vmax.xlane.f32.xlu0 %v535
  %v537 = vpop.xlane.xlu0 %536
  %v538 = vsel %vm152, %v217, -inf
  %539 = vmax.xlane.f32.xlu0 %v538
  %v540 = vpop.xlane.xlu0 %539
  %v541 = vsel %vm152, %v241, -inf
  %542 = vmax.xlane.f32.xlu0 %v541
  %v543 = vpop.xlane.xlu0 %542
  %v544 = vsel %vm152, %v265, -inf
  %545 = vmax.xlane.f32.xlu0 %v544
  %v546 = vpop.xlane.xlu0 %545
  %v547 = vsel %vm152, %v289, -inf
  %548 = vmax.xlane.f32.xlu0 %v547
  %v549 = vpop.xlane.xlu0 %548
  %v550 = vsel %vm152, %v313, -inf
  %551 = vmax.xlane.f32.xlu0 %v550
  %v552 = vpop.xlane.xlu0 %551
  %v553 = vsel %vm152, %v337, -inf
  %554 = vmax.xlane.f32.xlu0 %v553
  %v555 = vpop.xlane.xlu0 %554
  %v556 = vsel %vm152, %v361, -inf
  %557 = vmax.xlane.f32.xlu0 %v556
  %v558 = vpop.xlane.xlu0 %557
  %v559 = vsel %vm152, %v385, -inf
  %560 = vmax.xlane.f32.xlu0 %v559
  %v561 = vpop.xlane.xlu0 %560
  %v562 = vsel %vm152, %v409, -inf
  %563 = vmax.xlane.f32.xlu0 %v562
  %v564 = vpop.xlane.xlu0 %563
  %v565 = vsel %vm152, %v433, -inf
  %566 = vmax.xlane.f32.xlu0 %v565
  %v567 = vpop.xlane.xlu0 %566
  %v568 = vsel %vm152, %v457, -inf
  %569 = vmax.xlane.f32.xlu0 %v568
  %v570 = vpop.xlane.xlu0 %569
  %v571 = vsel %vm152, %v481, -inf
  %572 = vmax.xlane.f32.xlu0 %v571
  %v573 = vpop.xlane.xlu0 %572
  %v574 = vsel %vm152, %v505, -inf
  %575 = vmax.xlane.f32.xlu0 %v574
  %v576 = vpop.xlane.xlu0 %575
  %v577 = vsel %vm152, %v529, -inf
  %578 = vmax.xlane.f32.xlu0 %v577
  %v579 = vpop.xlane.xlu0 %578
  %v580 = vsub.f32 %v169, %v534
  %v581 = vsub.f32 %v193, %v537
  %v582 = vsub.f32 %v217, %v540
  %v583 = vsub.f32 %v241, %v543
  %v584 = vsub.f32 %v265, %v546
  %v585 = vsub.f32 %v289, %v549
  %v586 = vsub.f32 %v313, %v552
  %v587 = vsub.f32 %v337, %v555
  %v588 = vsub.f32 %v361, %v558
  %v589 = vsub.f32 %v385, %v561
  %v590 = vsub.f32 %v409, %v564
  %v591 = vsub.f32 %v433, %v567
  %v592 = vsub.f32 %v457, %v570
  %v593 = vsub.f32 %v481, %v573
  %v594 = vsub.f32 %v505, %v576
  %v595 = vsub.f32 %v529, %v579
  %v596 = vmul.f32 %v580, 1.442695
  %v597 = vpow.pop %v596
  %v598 = vmul.f32 %v581, 1.442695
  %v599 = vpow.pop %v598
  %v600 = vmul.f32 %v582, 1.442695
  %v601 = vpow.pop %v600
  %v602 = vmul.f32 %v583, 1.442695
  %v603 = vpow.pop %v602
  %v604 = vmul.f32 %v584, 1.442695
  %v605 = vpow.pop %v604
  %v606 = vmul.f32 %v585, 1.442695
  %v607 = vpow.pop %v606
  %v608 = vmul.f32 %v586, 1.442695
  %v609 = vpow.pop %v608
  %v610 = vmul.f32 %v587, 1.442695
  %v611 = vpow.pop %v610
  %v612 = vmul.f32 %v588, 1.442695
  %v613 = vpow.pop %v612
  %v614 = vmul.f32 %v589, 1.442695
  %v615 = vpow.pop %v614
  %v616 = vmul.f32 %v590, 1.442695
  %v617 = vpow.pop %v616
  %v618 = vmul.f32 %v591, 1.442695
  %v619 = vpow.pop %v618
  %v620 = vmul.f32 %v592, 1.442695
  %v621 = vpow.pop %v620
  %v622 = vmul.f32 %v593, 1.442695
  %v623 = vpow.pop %v622
  %v624 = vmul.f32 %v594, 1.442695
  %v625 = vpow.pop %v624
  %v626 = vmul.f32 %v595, 1.442695
  %v627 = vpow.pop %v626
  %v628 = vsel %vm152, %v597, 0.0
  %629 = vadd.xlane.f32.xlu0 %v628
  %v630 = vpop.xlane.xlu0 %629
  %v631 = vsel %vm152, %v599, 0.0
  %632 = vadd.xlane.f32.xlu0 %v631
  %v633 = vpop.xlane.xlu0 %632
  %v634 = vsel %vm152, %v601, 0.0
  %635 = vadd.xlane.f32.xlu0 %v634
  %v636 = vpop.xlane.xlu0 %635
  %v637 = vsel %vm152, %v603, 0.0
  %638 = vadd.xlane.f32.xlu0 %v637
  %v639 = vpop.xlane.xlu0 %638
  %v640 = vsel %vm152, %v605, 0.0
  %641 = vadd.xlane.f32.xlu0 %v640
  %v642 = vpop.xlane.xlu0 %641
  %v643 = vsel %vm152, %v607, 0.0
  %644 = vadd.xlane.f32.xlu0 %v643
  %v645 = vpop.xlane.xlu0 %644
  %v646 = vsel %vm152, %v609, 0.0
  %647 = vadd.xlane.f32.xlu0 %v646
  %v648 = vpop.xlane.xlu0 %647
  %v649 = vsel %vm152, %v611, 0.0
  %650 = vadd.xlane.f32.xlu0 %v649
  %v651 = vpop.xlane.xlu0 %650
  %v652 = vsel %vm152, %v613, 0.0
  %653 = vadd.xlane.f32.xlu0 %v652
  %v654 = vpop.xlane.xlu0 %653
  %v655 = vsel %vm152, %v615, 0.0
  %656 = vadd.xlane.f32.xlu0 %v655
  %v657 = vpop.xlane.xlu0 %656
  %v658 = vsel %vm152, %v617, 0.0
  %659 = vadd.xlane.f32.xlu0 %v658
  %v660 = vpop.xlane.xlu0 %659
  %v661 = vsel %vm152, %v619, 0.0
  %662 = vadd.xlane.f32.xlu0 %v661
  %v663 = vpop.xlane.xlu0 %662
  %v664 = vsel %vm152, %v621, 0.0
  %665 = vadd.xlane.f32.xlu0 %v664
  %v666 = vpop.xlane.xlu0 %665
  %v667 = vsel %vm152, %v623, 0.0
  %668 = vadd.xlane.f32.xlu0 %v667
  %v669 = vpop.xlane.xlu0 %668
  %v670 = vsel %vm152, %v625, 0.0
  %671 = vadd.xlane.f32.xlu0 %v670
  %v672 = vpop.xlane.xlu0 %671
  %v673 = vsel %vm152, %v627, 0.0
  %674 = vadd.xlane.f32.xlu0 %v673
  %v675 = vpop.xlane.xlu0 %674
  %v676 = vrcp.pop %v630
  %v677 = vrcp.pop %v633
  %v678 = vrcp.pop %v636
  %v679 = vrcp.pop %v639
  %v680 = vrcp.pop %v642
  %v681 = vrcp.pop %v645
  %v682 = vrcp.pop %v648
  %v683 = vrcp.pop %v651
  %v684 = vrcp.pop %v654
  %v685 = vrcp.pop %v657
  %v686 = vrcp.pop %v660
  %v687 = vrcp.pop %v663
  %v688 = vrcp.pop %v666
  %v689 = vrcp.pop %v669
  %v690 = vrcp.pop %v672
  %v691 = vrcp.pop %v675
  %v692 = vmul.f32 %v597, %v676
  %v693 = vmul.f32 %v599, %v677
  %v694 = vmul.f32 %v601, %v678
  %v695 = vmul.f32 %v603, %v679
  %v696 = vmul.f32 %v605, %v680
  %v697 = vmul.f32 %v607, %v681
  %v698 = vmul.f32 %v609, %v682
  %v699 = vmul.f32 %v611, %v683
  %v700 = vmul.f32 %v613, %v684
  %v701 = vmul.f32 %v615, %v685
  %v702 = vmul.f32 %v617, %v686
  %v703 = vmul.f32 %v619, %v687
  %v704 = vmul.f32 %v621, %v688
  %v705 = vmul.f32 %v623, %v689
  %v706 = vmul.f32 %v625, %v690
  %v707 = vmul.f32 %v627, %v691
  %v708 = vpack.c.bf16 %v692, %v692
  %v709 = vpack.c.bf16 %v693, %v693
  %v710 = vpack.c.bf16 %v694, %v694
  %v711 = vpack.c.bf16 %v695, %v695
  %v712 = vpack.c.bf16 %v696, %v696
  %v713 = vpack.c.bf16 %v697, %v697
  %v714 = vpack.c.bf16 %v698, %v698
  %v715 = vpack.c.bf16 %v699, %v699
  %v716 = vpack.c.bf16 %v700, %v700
  %v717 = vpack.c.bf16 %v701, %v701
  %v718 = vpack.c.bf16 %v702, %v702
  %v719 = vpack.c.bf16 %v703, %v703
  %v720 = vpack.c.bf16 %v704, %v704
  %v721 = vpack.c.bf16 %v705, %v705
  %v722 = vpack.c.bf16 %v706, %v706
  %v723 = vpack.c.bf16 %v707, %v707
  %724 = vrot.lane.b32.xlu0 %v149, 64
  %v725 = vpop.permute.xlu0 %724
  %v727 = vsel %vm152, %v708, 0
  %vm729 = vcmask 1043456
  %v731 = vsel %vm729, %v725, 0
  %733 = vmatpush.bf16.msra.mxu0 0
  %734 = vmatpush.bf16.msra.mxu0 0
  %735 = vmatpush.bf16.msra.mxu0 0
  %736 = vmatpush.bf16.msra.mxu0 0
  %737 = vmatpush.bf16.msra.mxu0 0
  %738 = vmatpush.bf16.msra.mxu0 0
  %739 = vmatpush.bf16.msra.mxu0 0
  %740 = vmatpush.bf16.msra.mxu0 %v731
  %741 = vmatmul.bf16.gmra.mxu0 %v727
  %v742 = vpop.f32.mrf.mxu0
  %v743 = vadd.f32 0.0, %v742
  %v744 = vpop.f32.mrf.mxu0
  %745 = vdwg.mxu0
  %746 = vrot.lane.b32.xlu0 %v174, 64
  %v747 = vpop.permute.xlu0 %746
  %v749 = vsel %vm152, %v709, 0
  %v752 = vsel %vm729, %v747, 0
  %754 = vmatpush.bf16.msra.mxu0 0
  %755 = vmatpush.bf16.msra.mxu0 0
  %756 = vmatpush.bf16.msra.mxu0 0
  %757 = vmatpush.bf16.msra.mxu0 0
  %758 = vmatpush.bf16.msra.mxu0 0
  %759 = vmatpush.bf16.msra.mxu0 0
  %760 = vmatpush.bf16.msra.mxu0 0
  %761 = vmatpush.bf16.msra.mxu0 %v752
  %762 = vmatmul.bf16.gmra.mxu0 %v749
  %v763 = vpop.f32.mrf.mxu0
  %v764 = vadd.f32 0.0, %v763
  %v765 = vpop.f32.mrf.mxu0
  %766 = vdwg.mxu0
  %767 = vrot.lane.b32.xlu0 %v198, 64
  %v768 = vpop.permute.xlu0 %767
  %v770 = vsel %vm152, %v710, 0
  %v773 = vsel %vm729, %v768, 0
  %775 = vmatpush.bf16.msra.mxu0 0
  %776 = vmatpush.bf16.msra.mxu0 0
  %777 = vmatpush.bf16.msra.mxu0 0
  %778 = vmatpush.bf16.msra.mxu0 0
  %779 = vmatpush.bf16.msra.mxu0 0
  %780 = vmatpush.bf16.msra.mxu0 0
  %781 = vmatpush.bf16.msra.mxu0 0
  %782 = vmatpush.bf16.msra.mxu0 %v773
  %783 = vmatmul.bf16.gmra.mxu0 %v770
  %v784 = vpop.f32.mrf.mxu0
  %v785 = vadd.f32 0.0, %v784
  %v786 = vpop.f32.mrf.mxu0
  %787 = vdwg.mxu0
  %788 = vrot.lane.b32.xlu0 %v222, 64
  %v789 = vpop.permute.xlu0 %788
  %v791 = vsel %vm152, %v711, 0
  %v794 = vsel %vm729, %v789, 0
  %796 = vmatpush.bf16.msra.mxu0 0
  %797 = vmatpush.bf16.msra.mxu0 0
  %798 = vmatpush.bf16.msra.mxu0 0
  %799 = vmatpush.bf16.msra.mxu0 0
  %800 = vmatpush.bf16.msra.mxu0 0
  %801 = vmatpush.bf16.msra.mxu0 0
  %802 = vmatpush.bf16.msra.mxu0 0
  %803 = vmatpush.bf16.msra.mxu0 %v794
  %804 = vmatmul.bf16.gmra.mxu0 %v791
  %v805 = vpop.f32.mrf.mxu0
  %v806 = vadd.f32 0.0, %v805
  %v807 = vpop.f32.mrf.mxu0
  %808 = vdwg.mxu0
  %809 = vrot.lane.b32.xlu0 %v246, 64
  %v810 = vpop.permute.xlu0 %809
  %v812 = vsel %vm152, %v712, 0
  %v815 = vsel %vm729, %v810, 0
  %817 = vmatpush.bf16.msra.mxu0 0
  %818 = vmatpush.bf16.msra.mxu0 0
  %819 = vmatpush.bf16.msra.mxu0 0
  %820 = vmatpush.bf16.msra.mxu0 0
  %821 = vmatpush.bf16.msra.mxu0 0
  %822 = vmatpush.bf16.msra.mxu0 0
  %823 = vmatpush.bf16.msra.mxu0 0
  %824 = vmatpush.bf16.msra.mxu0 %v815
  %825 = vmatmul.bf16.gmra.mxu0 %v812
  %v826 = vpop.f32.mrf.mxu0
  %v827 = vadd.f32 0.0, %v826
  %v828 = vpop.f32.mrf.mxu0
  %829 = vdwg.mxu0
  %830 = vrot.lane.b32.xlu0 %v270, 64
  %v831 = vpop.permute.xlu0 %830
  %v833 = vsel %vm152, %v713, 0
  %v836 = vsel %vm729, %v831, 0
  %838 = vmatpush.bf16.msra.mxu0 0
  %839 = vmatpush.bf16.msra.mxu0 0
  %840 = vmatpush.bf16.msra.mxu0 0
  %841 = vmatpush.bf16.msra.mxu0 0
  %842 = vmatpush.bf16.msra.mxu0 0
  %843 = vmatpush.bf16.msra.mxu0 0
  %844 = vmatpush.bf16.msra.mxu0 0
  %845 = vmatpush.bf16.msra.mxu0 %v836
  %846 = vmatmul.bf16.gmra.mxu0 %v833
  %v847 = vpop.f32.mrf.mxu0
  %v848 = vadd.f32 0.0, %v847
  %v849 = vpop.f32.mrf.mxu0
  %850 = vdwg.mxu0
  %851 = vrot.lane.b32.xlu0 %v294, 64
  %v852 = vpop.permute.xlu0 %851
  %v854 = vsel %vm152, %v714, 0
  %v857 = vsel %vm729, %v852, 0
  %859 = vmatpush.bf16.msra.mxu0 0
  %860 = vmatpush.bf16.msra.mxu0 0
  %861 = vmatpush.bf16.msra.mxu0 0
  %862 = vmatpush.bf16.msra.mxu0 0
  %863 = vmatpush.bf16.msra.mxu0 0
  %864 = vmatpush.bf16.msra.mxu0 0
  %865 = vmatpush.bf16.msra.mxu0 0
  %866 = vmatpush.bf16.msra.mxu0 %v857
  %867 = vmatmul.bf16.gmra.mxu0 %v854
  %v868 = vpop.f32.mrf.mxu0
  %v869 = vadd.f32 0.0, %v868
  %v870 = vpop.f32.mrf.mxu0
  %871 = vdwg.mxu0
  %872 = vrot.lane.b32.xlu0 %v318, 64
  %v873 = vpop.permute.xlu0 %872
  %v875 = vsel %vm152, %v715, 0
  %v878 = vsel %vm729, %v873, 0
  %880 = vmatpush.bf16.msra.mxu0 0
  %881 = vmatpush.bf16.msra.mxu0 0
  %882 = vmatpush.bf16.msra.mxu0 0
  %883 = vmatpush.bf16.msra.mxu0 0
  %884 = vmatpush.bf16.msra.mxu0 0
  %885 = vmatpush.bf16.msra.mxu0 0
  %886 = vmatpush.bf16.msra.mxu0 0
  %887 = vmatpush.bf16.msra.mxu0 %v878
  %888 = vmatmul.bf16.gmra.mxu0 %v875
  %v889 = vpop.f32.mrf.mxu0
  %v890 = vadd.f32 0.0, %v889
  %v891 = vpop.f32.mrf.mxu0
  %892 = vdwg.mxu0
  %893 = vrot.lane.b32.xlu0 %v342, 64
  %v894 = vpop.permute.xlu0 %893
  %v896 = vsel %vm152, %v716, 0
  %v899 = vsel %vm729, %v894, 0
  %901 = vmatpush.bf16.msra.mxu0 0
  %902 = vmatpush.bf16.msra.mxu0 0
  %903 = vmatpush.bf16.msra.mxu0 0
  %904 = vmatpush.bf16.msra.mxu0 0
  %905 = vmatpush.bf16.msra.mxu0 0
  %906 = vmatpush.bf16.msra.mxu0 0
  %907 = vmatpush.bf16.msra.mxu0 0
  %908 = vmatpush.bf16.msra.mxu0 %v899
  %909 = vmatmul.bf16.gmra.mxu0 %v896
  %v910 = vpop.f32.mrf.mxu0
  %v911 = vadd.f32 0.0, %v910
  %v912 = vpop.f32.mrf.mxu0
  %913 = vdwg.mxu0
  %914 = vrot.lane.b32.xlu0 %v366, 64
  %v915 = vpop.permute.xlu0 %914
  %v917 = vsel %vm152, %v717, 0
  %v920 = vsel %vm729, %v915, 0
  %922 = vmatpush.bf16.msra.mxu0 0
  %923 = vmatpush.bf16.msra.mxu0 0
  %924 = vmatpush.bf16.msra.mxu0 0
  %925 = vmatpush.bf16.msra.mxu0 0
  %926 = vmatpush.bf16.msra.mxu0 0
  %927 = vmatpush.bf16.msra.mxu0 0
  %928 = vmatpush.bf16.msra.mxu0 0
  %929 = vmatpush.bf16.msra.mxu0 %v920
  %930 = vmatmul.bf16.gmra.mxu0 %v917
  %v931 = vpop.f32.mrf.mxu0
  %v932 = vadd.f32 0.0, %v931
  %v933 = vpop.f32.mrf.mxu0
  %934 = vdwg.mxu0
  %935 = vrot.lane.b32.xlu0 %v390, 64
  %v936 = vpop.permute.xlu0 %935
  %v938 = vsel %vm152, %v718, 0
  %v941 = vsel %vm729, %v936, 0
  %943 = vmatpush.bf16.msra.mxu0 0
  %944 = vmatpush.bf16.msra.mxu0 0
  %945 = vmatpush.bf16.msra.mxu0 0
  %946 = vmatpush.bf16.msra.mxu0 0
  %947 = vmatpush.bf16.msra.mxu0 0
  %948 = vmatpush.bf16.msra.mxu0 0
  %949 = vmatpush.bf16.msra.mxu0 0
  %950 = vmatpush.bf16.msra.mxu0 %v941
  %951 = vmatmul.bf16.gmra.mxu0 %v938
  %v952 = vpop.f32.mrf.mxu0
  %v953 = vadd.f32 0.0, %v952
  %v954 = vpop.f32.mrf.mxu0
  %955 = vdwg.mxu0
  %956 = vrot.lane.b32.xlu0 %v414, 64
  %v957 = vpop.permute.xlu0 %956
  %v959 = vsel %vm152, %v719, 0
  %v962 = vsel %vm729, %v957, 0
  %964 = vmatpush.bf16.msra.mxu0 0
  %965 = vmatpush.bf16.msra.mxu0 0
  %966 = vmatpush.bf16.msra.mxu0 0
  %967 = vmatpush.bf16.msra.mxu0 0
  %968 = vmatpush.bf16.msra.mxu0 0
  %969 = vmatpush.bf16.msra.mxu0 0
  %970 = vmatpush.bf16.msra.mxu0 0
  %971 = vmatpush.bf16.msra.mxu0 %v962
  %972 = vmatmul.bf16.gmra.mxu0 %v959
  %v973 = vpop.f32.mrf.mxu0
  %v974 = vadd.f32 0.0, %v973
  %v975 = vpop.f32.mrf.mxu0
  %976 = vdwg.mxu0
  %977 = vrot.lane.b32.xlu0 %v438, 64
  %v978 = vpop.permute.xlu0 %977
  %v980 = vsel %vm152, %v720, 0
  %v983 = vsel %vm729, %v978, 0
  %985 = vmatpush.bf16.msra.mxu0 0
  %986 = vmatpush.bf16.msra.mxu0 0
  %987 = vmatpush.bf16.msra.mxu0 0
  %988 = vmatpush.bf16.msra.mxu0 0
  %989 = vmatpush.bf16.msra.mxu0 0
  %990 = vmatpush.bf16.msra.mxu0 0
  %991 = vmatpush.bf16.msra.mxu0 0
  %992 = vmatpush.bf16.msra.mxu0 %v983
  %993 = vmatmul.bf16.gmra.mxu0 %v980
  %v994 = vpop.f32.mrf.mxu0
  %v995 = vadd.f32 0.0, %v994
  %v996 = vpop.f32.mrf.mxu0
  %997 = vdwg.mxu0
  %998 = vrot.lane.b32.xlu0 %v462, 64
  %v999 = vpop.permute.xlu0 %998
  %v1001 = vsel %vm152, %v721, 0
  %v1004 = vsel %vm729, %v999, 0
  %1006 = vmatpush.bf16.msra.mxu0 0
  %1007 = vmatpush.bf16.msra.mxu0 0
  %1008 = vmatpush.bf16.msra.mxu0 0
  %1009 = vmatpush.bf16.msra.mxu0 0
  %1010 = vmatpush.bf16.msra.mxu0 0
  %1011 = vmatpush.bf16.msra.mxu0 0
  %1012 = vmatpush.bf16.msra.mxu0 0
  %1013 = vmatpush.bf16.msra.mxu0 %v1004
  %1014 = vmatmul.bf16.gmra.mxu0 %v1001
  %v1015 = vpop.f32.mrf.mxu0
  %v1016 = vadd.f32 0.0, %v1015
  %v1017 = vpop.f32.mrf.mxu0
  %1018 = vdwg.mxu0
  %1019 = vrot.lane.b32.xlu0 %v486, 64
  %v1020 = vpop.permute.xlu0 %1019
  %v1022 = vsel %vm152, %v722, 0
  %v1025 = vsel %vm729, %v1020, 0
  %1027 = vmatpush.bf16.msra.mxu0 0
  %1028 = vmatpush.bf16.msra.mxu0 0
  %1029 = vmatpush.bf16.msra.mxu0 0
  %1030 = vmatpush.bf16.msra.mxu0 0
  %1031 = vmatpush.bf16.msra.mxu0 0
  %1032 = vmatpush.bf16.msra.mxu0 0
  %1033 = vmatpush.bf16.msra.mxu0 0
  %1034 = vmatpush.bf16.msra.mxu0 %v1025
  %1035 = vmatmul.bf16.gmra.mxu0 %v1022
  %v1036 = vpop.f32.mrf.mxu0
  %v1037 = vadd.f32 0.0, %v1036
  %v1038 = vpop.f32.mrf.mxu0
  %1039 = vdwg.mxu0
  %1040 = vrot.lane.b32.xlu0 %v510, 64
  %v1041 = vpop.permute.xlu0 %1040
  %v1043 = vsel %vm152, %v723, 0
  %v1046 = vsel %vm729, %v1041, 0
  %1048 = vmatpush.bf16.msra.mxu0 0
  %1049 = vmatpush.bf16.msra.mxu0 0
  %1050 = vmatpush.bf16.msra.mxu0 0
  %1051 = vmatpush.bf16.msra.mxu0 0
  %1052 = vmatpush.bf16.msra.mxu0 0
  %1053 = vmatpush.bf16.msra.mxu0 0
  %1054 = vmatpush.bf16.msra.mxu0 0
  %1055 = vmatpush.bf16.msra.mxu0 %v1046
  %1056 = vmatmul.bf16.gmra.mxu0 %v1043
  %v1057 = vpop.f32.mrf.mxu0
  %v1058 = vadd.f32 0.0, %v1057
  %v1059 = vpop.f32.mrf.mxu0
  %1060 = vdwg.mxu0
  %1061 = vrot.lane.b32.xlu0 %v149, 120
  %v1062 = vpop.permute.xlu0 %1061
  %1063 = vrot.lane.b32.xlu0 %v149, 88
  %v1064 = vpop.permute.xlu0 %1063
  %v1066 = vsel %vm152, %v1062, 0
  %v1069 = vsel %vm152, %v1064, 0
  %1071 = vmatpush.bf16.xpose.msra.mxu0 0
  %1072 = vmatpush.bf16.xpose.msra.mxu0 0
  %1073 = vmatpush.bf16.xpose.msra.mxu0 0
  %1074 = vmatpush.bf16.xpose.msra.mxu0 0
  %1075 = vmatpush.bf16.xpose.msra.mxu0 0
  %1076 = vmatpush.bf16.xpose.msra.mxu0 0
  %1077 = vmatpush.bf16.xpose.msra.mxu0 0
  %1078 = vmatpush.bf16.xpose.msra.mxu0 %v1069
  %1079 = vmatmul.bf16.gmra.mxu0 %v1066
  %v1080 = vpop.f32.mrf.mxu0
  %v1081 = vadd.f32 0.0, %v1080
  %v1082 = vpop.f32.mrf.mxu0
  %1083 = vdwg.mxu0
  %1084 = vrot.lane.b32.xlu0 %v174, 120
  %v1085 = vpop.permute.xlu0 %1084
  %1086 = vrot.lane.b32.xlu0 %v174, 88
  %v1087 = vpop.permute.xlu0 %1086
  %v1089 = vsel %vm152, %v1085, 0
  %v1092 = vsel %vm152, %v1087, 0
  %1094 = vmatpush.bf16.xpose.msra.mxu0 0
  %1095 = vmatpush.bf16.xpose.msra.mxu0 0
  %1096 = vmatpush.bf16.xpose.msra.mxu0 0
  %1097 = vmatpush.bf16.xpose.msra.mxu0 0
  %1098 = vmatpush.bf16.xpose.msra.mxu0 0
  %1099 = vmatpush.bf16.xpose.msra.mxu0 0
  %1100 = vmatpush.bf16.xpose.msra.mxu0 0
  %1101 = vmatpush.bf16.xpose.msra.mxu0 %v1092
  %1102 = vmatmul.bf16.gmra.mxu0 %v1089
  %v1103 = vpop.f32.mrf.mxu0
  %v1104 = vadd.f32 0.0, %v1103
  %v1105 = vpop.f32.mrf.mxu0
  %1106 = vdwg.mxu0
  %1107 = vrot.lane.b32.xlu0 %v198, 120
  %v1108 = vpop.permute.xlu0 %1107
  %1109 = vrot.lane.b32.xlu0 %v198, 88
  %v1110 = vpop.permute.xlu0 %1109
  %v1112 = vsel %vm152, %v1108, 0
  %v1115 = vsel %vm152, %v1110, 0
  %1117 = vmatpush.bf16.xpose.msra.mxu0 0
  %1118 = vmatpush.bf16.xpose.msra.mxu0 0
  %1119 = vmatpush.bf16.xpose.msra.mxu0 0
  %1120 = vmatpush.bf16.xpose.msra.mxu0 0
  %1121 = vmatpush.bf16.xpose.msra.mxu0 0
  %1122 = vmatpush.bf16.xpose.msra.mxu0 0
  %1123 = vmatpush.bf16.xpose.msra.mxu0 0
  %1124 = vmatpush.bf16.xpose.msra.mxu0 %v1115
  %1125 = vmatmul.bf16.gmra.mxu0 %v1112
  %v1126 = vpop.f32.mrf.mxu0
  %v1127 = vadd.f32 0.0, %v1126
  %v1128 = vpop.f32.mrf.mxu0
  %1129 = vdwg.mxu0
  %1130 = vrot.lane.b32.xlu0 %v222, 120
  %v1131 = vpop.permute.xlu0 %1130
  %1132 = vrot.lane.b32.xlu0 %v222, 88
  %v1133 = vpop.permute.xlu0 %1132
  %v1135 = vsel %vm152, %v1131, 0
  %v1138 = vsel %vm152, %v1133, 0
  %1140 = vmatpush.bf16.xpose.msra.mxu0 0
  %1141 = vmatpush.bf16.xpose.msra.mxu0 0
  %1142 = vmatpush.bf16.xpose.msra.mxu0 0
  %1143 = vmatpush.bf16.xpose.msra.mxu0 0
  %1144 = vmatpush.bf16.xpose.msra.mxu0 0
  %1145 = vmatpush.bf16.xpose.msra.mxu0 0
  %1146 = vmatpush.bf16.xpose.msra.mxu0 0
  %1147 = vmatpush.bf16.xpose.msra.mxu0 %v1138
  %1148 = vmatmul.bf16.gmra.mxu0 %v1135
  %v1149 = vpop.f32.mrf.mxu0
  %v1150 = vadd.f32 0.0, %v1149
  %v1151 = vpop.f32.mrf.mxu0
  %1152 = vdwg.mxu0
  %1153 = vrot.lane.b32.xlu0 %v246, 120
  %v1154 = vpop.permute.xlu0 %1153
  %1155 = vrot.lane.b32.xlu0 %v246, 88
  %v1156 = vpop.permute.xlu0 %1155
  %v1158 = vsel %vm152, %v1154, 0
  %v1161 = vsel %vm152, %v1156, 0
  %1163 = vmatpush.bf16.xpose.msra.mxu0 0
  %1164 = vmatpush.bf16.xpose.msra.mxu0 0
  %1165 = vmatpush.bf16.xpose.msra.mxu0 0
  %1166 = vmatpush.bf16.xpose.msra.mxu0 0
  %1167 = vmatpush.bf16.xpose.msra.mxu0 0
  %1168 = vmatpush.bf16.xpose.msra.mxu0 0
  %1169 = vmatpush.bf16.xpose.msra.mxu0 0
  %1170 = vmatpush.bf16.xpose.msra.mxu0 %v1161
  %1171 = vmatmul.bf16.gmra.mxu0 %v1158
  %v1172 = vpop.f32.mrf.mxu0
  %v1173 = vadd.f32 0.0, %v1172
  %v1174 = vpop.f32.mrf.mxu0
  %1175 = vdwg.mxu0
  %1176 = vrot.lane.b32.xlu0 %v270, 120
  %v1177 = vpop.permute.xlu0 %1176
  %1178 = vrot.lane.b32.xlu0 %v270, 88
  %v1179 = vpop.permute.xlu0 %1178
  %v1181 = vsel %vm152, %v1177, 0
  %v1184 = vsel %vm152, %v1179, 0
  %1186 = vmatpush.bf16.xpose.msra.mxu0 0
  %1187 = vmatpush.bf16.xpose.msra.mxu0 0
  %1188 = vmatpush.bf16.xpose.msra.mxu0 0
  %1189 = vmatpush.bf16.xpose.msra.mxu0 0
  %1190 = vmatpush.bf16.xpose.msra.mxu0 0
  %1191 = vmatpush.bf16.xpose.msra.mxu0 0
  %1192 = vmatpush.bf16.xpose.msra.mxu0 0
  %1193 = vmatpush.bf16.xpose.msra.mxu0 %v1184
  %1194 = vmatmul.bf16.gmra.mxu0 %v1181
  %v1195 = vpop.f32.mrf.mxu0
  %v1196 = vadd.f32 0.0, %v1195
  %v1197 = vpop.f32.mrf.mxu0
  %1198 = vdwg.mxu0
  %1199 = vrot.lane.b32.xlu0 %v294, 120
  %v1200 = vpop.permute.xlu0 %1199
  %1201 = vrot.lane.b32.xlu0 %v294, 88
  %v1202 = vpop.permute.xlu0 %1201
  %v1204 = vsel %vm152, %v1200, 0
  %v1207 = vsel %vm152, %v1202, 0
  %1209 = vmatpush.bf16.xpose.msra.mxu0 0
  %1210 = vmatpush.bf16.xpose.msra.mxu0 0
  %1211 = vmatpush.bf16.xpose.msra.mxu0 0
  %1212 = vmatpush.bf16.xpose.msra.mxu0 0
  %1213 = vmatpush.bf16.xpose.msra.mxu0 0
  %1214 = vmatpush.bf16.xpose.msra.mxu0 0
  %1215 = vmatpush.bf16.xpose.msra.mxu0 0
  %1216 = vmatpush.bf16.xpose.msra.mxu0 %v1207
  %1217 = vmatmul.bf16.gmra.mxu0 %v1204
  %v1218 = vpop.f32.mrf.mxu0
  %v1219 = vadd.f32 0.0, %v1218
  %v1220 = vpop.f32.mrf.mxu0
  %1221 = vdwg.mxu0
  %1222 = vrot.lane.b32.xlu0 %v318, 120
  %v1223 = vpop.permute.xlu0 %1222
  %1224 = vrot.lane.b32.xlu0 %v318, 88
  %v1225 = vpop.permute.xlu0 %1224
  %v1227 = vsel %vm152, %v1223, 0
  %v1230 = vsel %vm152, %v1225, 0
  %1232 = vmatpush.bf16.xpose.msra.mxu0 0
  %1233 = vmatpush.bf16.xpose.msra.mxu0 0
  %1234 = vmatpush.bf16.xpose.msra.mxu0 0
  %1235 = vmatpush.bf16.xpose.msra.mxu0 0
  %1236 = vmatpush.bf16.xpose.msra.mxu0 0
  %1237 = vmatpush.bf16.xpose.msra.mxu0 0
  %1238 = vmatpush.bf16.xpose.msra.mxu0 0
  %1239 = vmatpush.bf16.xpose.msra.mxu0 %v1230
  %1240 = vmatmul.bf16.gmra.mxu0 %v1227
  %v1241 = vpop.f32.mrf.mxu0
  %v1242 = vadd.f32 0.0, %v1241
  %v1243 = vpop.f32.mrf.mxu0
  %1244 = vdwg.mxu0
  %1245 = vrot.lane.b32.xlu0 %v342, 120
  %v1246 = vpop.permute.xlu0 %1245
  %1247 = vrot.lane.b32.xlu0 %v342, 88
  %v1248 = vpop.permute.xlu0 %1247
  %v1250 = vsel %vm152, %v1246, 0
  %v1253 = vsel %vm152, %v1248, 0
  %1255 = vmatpush.bf16.xpose.msra.mxu0 0
  %1256 = vmatpush.bf16.xpose.msra.mxu0 0
  %1257 = vmatpush.bf16.xpose.msra.mxu0 0
  %1258 = vmatpush.bf16.xpose.msra.mxu0 0
  %1259 = vmatpush.bf16.xpose.msra.mxu0 0
  %1260 = vmatpush.bf16.xpose.msra.mxu0 0
  %1261 = vmatpush.bf16.xpose.msra.mxu0 0
  %1262 = vmatpush.bf16.xpose.msra.mxu0 %v1253
  %1263 = vmatmul.bf16.gmra.mxu0 %v1250
  %v1264 = vpop.f32.mrf.mxu0
  %v1265 = vadd.f32 0.0, %v1264
  %v1266 = vpop.f32.mrf.mxu0
  %1267 = vdwg.mxu0
  %1268 = vrot.lane.b32.xlu0 %v366, 120
  %v1269 = vpop.permute.xlu0 %1268
  %1270 = vrot.lane.b32.xlu0 %v366, 88
  %v1271 = vpop.permute.xlu0 %1270
  %v1273 = vsel %vm152, %v1269, 0
  %v1276 = vsel %vm152, %v1271, 0
  %1278 = vmatpush.bf16.xpose.msra.mxu0 0
  %1279 = vmatpush.bf16.xpose.msra.mxu0 0
  %1280 = vmatpush.bf16.xpose.msra.mxu0 0
  %1281 = vmatpush.bf16.xpose.msra.mxu0 0
  %1282 = vmatpush.bf16.xpose.msra.mxu0 0
  %1283 = vmatpush.bf16.xpose.msra.mxu0 0
  %1284 = vmatpush.bf16.xpose.msra.mxu0 0
  %1285 = vmatpush.bf16.xpose.msra.mxu0 %v1276
  %1286 = vmatmul.bf16.gmra.mxu0 %v1273
  %v1287 = vpop.f32.mrf.mxu0
  %v1288 = vadd.f32 0.0, %v1287
  %v1289 = vpop.f32.mrf.mxu0
  %1290 = vdwg.mxu0
  %1291 = vrot.lane.b32.xlu0 %v390, 120
  %v1292 = vpop.permute.xlu0 %1291
  %1293 = vrot.lane.b32.xlu0 %v390, 88
  %v1294 = vpop.permute.xlu0 %1293
  %v1296 = vsel %vm152, %v1292, 0
  %v1299 = vsel %vm152, %v1294, 0
  %1301 = vmatpush.bf16.xpose.msra.mxu0 0
  %1302 = vmatpush.bf16.xpose.msra.mxu0 0
  %1303 = vmatpush.bf16.xpose.msra.mxu0 0
  %1304 = vmatpush.bf16.xpose.msra.mxu0 0
  %1305 = vmatpush.bf16.xpose.msra.mxu0 0
  %1306 = vmatpush.bf16.xpose.msra.mxu0 0
  %1307 = vmatpush.bf16.xpose.msra.mxu0 0
  %1308 = vmatpush.bf16.xpose.msra.mxu0 %v1299
  %1309 = vmatmul.bf16.gmra.mxu0 %v1296
  %v1310 = vpop.f32.mrf.mxu0
  %v1311 = vadd.f32 0.0, %v1310
  %v1312 = vpop.f32.mrf.mxu0
  %1313 = vdwg.mxu0
  %1314 = vrot.lane.b32.xlu0 %v414, 120
  %v1315 = vpop.permute.xlu0 %1314
  %1316 = vrot.lane.b32.xlu0 %v414, 88
  %v1317 = vpop.permute.xlu0 %1316
  %v1319 = vsel %vm152, %v1315, 0
  %v1322 = vsel %vm152, %v1317, 0
  %1324 = vmatpush.bf16.xpose.msra.mxu0 0
  %1325 = vmatpush.bf16.xpose.msra.mxu0 0
  %1326 = vmatpush.bf16.xpose.msra.mxu0 0
  %1327 = vmatpush.bf16.xpose.msra.mxu0 0
  %1328 = vmatpush.bf16.xpose.msra.mxu0 0
  %1329 = vmatpush.bf16.xpose.msra.mxu0 0
  %1330 = vmatpush.bf16.xpose.msra.mxu0 0
  %1331 = vmatpush.bf16.xpose.msra.mxu0 %v1322
  %1332 = vmatmul.bf16.gmra.mxu0 %v1319
  %v1333 = vpop.f32.mrf.mxu0
  %v1334 = vadd.f32 0.0, %v1333
  %v1335 = vpop.f32.mrf.mxu0
  %1336 = vdwg.mxu0
  %1337 = vrot.lane.b32.xlu0 %v438, 120
  %v1338 = vpop.permute.xlu0 %1337
  %1339 = vrot.lane.b32.xlu0 %v438, 88
  %v1340 = vpop.permute.xlu0 %1339
  %v1342 = vsel %vm152, %v1338, 0
  %v1345 = vsel %vm152, %v1340, 0
  %1347 = vmatpush.bf16.xpose.msra.mxu0 0
  %1348 = vmatpush.bf16.xpose.msra.mxu0 0
  %1349 = vmatpush.bf16.xpose.msra.mxu0 0
  %1350 = vmatpush.bf16.xpose.msra.mxu0 0
  %1351 = vmatpush.bf16.xpose.msra.mxu0 0
  %1352 = vmatpush.bf16.xpose.msra.mxu0 0
  %1353 = vmatpush.bf16.xpose.msra.mxu0 0
  %1354 = vmatpush.bf16.xpose.msra.mxu0 %v1345
  %1355 = vmatmul.bf16.gmra.mxu0 %v1342
  %v1356 = vpop.f32.mrf.mxu0
  %v1357 = vadd.f32 0.0, %v1356
  %v1358 = vpop.f32.mrf.mxu0
  %1359 = vdwg.mxu0
  %1360 = vrot.lane.b32.xlu0 %v462, 120
  %v1361 = vpop.permute.xlu0 %1360
  %1362 = vrot.lane.b32.xlu0 %v462, 88
  %v1363 = vpop.permute.xlu0 %1362
  %v1365 = vsel %vm152, %v1361, 0
  %v1368 = vsel %vm152, %v1363, 0
  %1370 = vmatpush.bf16.xpose.msra.mxu0 0
  %1371 = vmatpush.bf16.xpose.msra.mxu0 0
  %1372 = vmatpush.bf16.xpose.msra.mxu0 0
  %1373 = vmatpush.bf16.xpose.msra.mxu0 0
  %1374 = vmatpush.bf16.xpose.msra.mxu0 0
  %1375 = vmatpush.bf16.xpose.msra.mxu0 0
  %1376 = vmatpush.bf16.xpose.msra.mxu0 0
  %1377 = vmatpush.bf16.xpose.msra.mxu0 %v1368
  %1378 = vmatmul.bf16.gmra.mxu0 %v1365
  %v1379 = vpop.f32.mrf.mxu0
  %v1380 = vadd.f32 0.0, %v1379
  %v1381 = vpop.f32.mrf.mxu0
  %1382 = vdwg.mxu0
  %1383 = vrot.lane.b32.xlu0 %v486, 120
  %v1384 = vpop.permute.xlu0 %1383
  %1385 = vrot.lane.b32.xlu0 %v486, 88
  %v1386 = vpop.permute.xlu0 %1385
  %v1388 = vsel %vm152, %v1384, 0
  %v1391 = vsel %vm152, %v1386, 0
  %1393 = vmatpush.bf16.xpose.msra.mxu0 0
  %1394 = vmatpush.bf16.xpose.msra.mxu0 0
  %1395 = vmatpush.bf16.xpose.msra.mxu0 0
  %1396 = vmatpush.bf16.xpose.msra.mxu0 0
  %1397 = vmatpush.bf16.xpose.msra.mxu0 0
  %1398 = vmatpush.bf16.xpose.msra.mxu0 0
  %1399 = vmatpush.bf16.xpose.msra.mxu0 0
  %1400 = vmatpush.bf16.xpose.msra.mxu0 %v1391
  %1401 = vmatmul.bf16.gmra.mxu0 %v1388
  %v1402 = vpop.f32.mrf.mxu0
  %v1403 = vadd.f32 0.0, %v1402
  %v1404 = vpop.f32.mrf.mxu0
  %1405 = vdwg.mxu0
  %1406 = vrot.lane.b32.xlu0 %v510, 120
  %v1407 = vpop.permute.xlu0 %1406
  %1408 = vrot.lane.b32.xlu0 %v510, 88
  %v1409 = vpop.permute.xlu0 %1408
  %v1411 = vsel %vm152, %v1407, 0
  %v1414 = vsel %vm152, %v1409, 0
  %1416 = vmatpush.bf16.xpose.msra.mxu0 0
  %1417 = vmatpush.bf16.xpose.msra.mxu0 0
  %1418 = vmatpush.bf16.xpose.msra.mxu0 0
  %1419 = vmatpush.bf16.xpose.msra.mxu0 0
  %1420 = vmatpush.bf16.xpose.msra.mxu0 0
  %1421 = vmatpush.bf16.xpose.msra.mxu0 0
  %1422 = vmatpush.bf16.xpose.msra.mxu0 0
  %1423 = vmatpush.bf16.xpose.msra.mxu0 %v1414
  %1424 = vmatmul.bf16.gmra.mxu0 %v1411
  %v1425 = vpop.f32.mrf.mxu0
  %v1426 = vadd.f32 0.0, %v1425
  %v1427 = vpop.f32.mrf.mxu0
  %1428 = vdwg.mxu0
  %v1429 = vsel %vm152, %v1081, -inf
  %1430 = vmax.xlane.f32.xlu0 %v1429
  %v1431 = vpop.xlane.xlu0 %1430
  %v1432 = vsel %vm152, %v1104, -inf
  %1433 = vmax.xlane.f32.xlu0 %v1432
  %v1434 = vpop.xlane.xlu0 %1433
  %v1435 = vsel %vm152, %v1127, -inf
  %1436 = vmax.xlane.f32.xlu0 %v1435
  %v1437 = vpop.xlane.xlu0 %1436
  %v1438 = vsel %vm152, %v1150, -inf
  %1439 = vmax.xlane.f32.xlu0 %v1438
  %v1440 = vpop.xlane.xlu0 %1439
  %v1441 = vsel %vm152, %v1173, -inf
  %1442 = vmax.xlane.f32.xlu0 %v1441
  %v1443 = vpop.xlane.xlu0 %1442
  %v1444 = vsel %vm152, %v1196, -inf
  %1445 = vmax.xlane.f32.xlu0 %v1444
  %v1446 = vpop.xlane.xlu0 %1445
  %v1447 = vsel %vm152, %v1219, -inf
  %1448 = vmax.xlane.f32.xlu0 %v1447
  %v1449 = vpop.xlane.xlu0 %1448
  %v1450 = vsel %vm152, %v1242, -inf
  %1451 = vmax.xlane.f32.xlu0 %v1450
  %v1452 = vpop.xlane.xlu0 %1451
  %v1453 = vsel %vm152, %v1265, -inf
  %1454 = vmax.xlane.f32.xlu0 %v1453
  %v1455 = vpop.xlane.xlu0 %1454
  %v1456 = vsel %vm152, %v1288, -inf
  %1457 = vmax.xlane.f32.xlu0 %v1456
  %v1458 = vpop.xlane.xlu0 %1457
  %v1459 = vsel %vm152, %v1311, -inf
  %1460 = vmax.xlane.f32.xlu0 %v1459
  %v1461 = vpop.xlane.xlu0 %1460
  %v1462 = vsel %vm152, %v1334, -inf
  %1463 = vmax.xlane.f32.xlu0 %v1462
  %v1464 = vpop.xlane.xlu0 %1463
  %v1465 = vsel %vm152, %v1357, -inf
  %1466 = vmax.xlane.f32.xlu0 %v1465
  %v1467 = vpop.xlane.xlu0 %1466
  %v1468 = vsel %vm152, %v1380, -inf
  %1469 = vmax.xlane.f32.xlu0 %v1468
  %v1470 = vpop.xlane.xlu0 %1469
  %v1471 = vsel %vm152, %v1403, -inf
  %1472 = vmax.xlane.f32.xlu0 %v1471
  %v1473 = vpop.xlane.xlu0 %1472
  %v1474 = vsel %vm152, %v1426, -inf
  %1475 = vmax.xlane.f32.xlu0 %v1474
  %v1476 = vpop.xlane.xlu0 %1475
  %v1477 = vsub.f32 %v1081, %v1431
  %v1478 = vsub.f32 %v1104, %v1434
  %v1479 = vsub.f32 %v1127, %v1437
  %v1480 = vsub.f32 %v1150, %v1440
  %v1481 = vsub.f32 %v1173, %v1443
  %v1482 = vsub.f32 %v1196, %v1446
  %v1483 = vsub.f32 %v1219, %v1449
  %v1484 = vsub.f32 %v1242, %v1452
  %v1485 = vsub.f32 %v1265, %v1455
  %v1486 = vsub.f32 %v1288, %v1458
  %v1487 = vsub.f32 %v1311, %v1461
  %v1488 = vsub.f32 %v1334, %v1464
  %v1489 = vsub.f32 %v1357, %v1467
  %v1490 = vsub.f32 %v1380, %v1470
  %v1491 = vsub.f32 %v1403, %v1473
  %v1492 = vsub.f32 %v1426, %v1476
  %v1493 = vmul.f32 %v1477, 1.442695
  %v1494 = vpow.pop %v1493
  %v1495 = vmul.f32 %v1478, 1.442695
  %v1496 = vpow.pop %v1495
  %v1497 = vmul.f32 %v1479, 1.442695
  %v1498 = vpow.pop %v1497
  %v1499 = vmul.f32 %v1480, 1.442695
  %v1500 = vpow.pop %v1499
  %v1501 = vmul.f32 %v1481, 1.442695
  %v1502 = vpow.pop %v1501
  %v1503 = vmul.f32 %v1482, 1.442695
  %v1504 = vpow.pop %v1503
  %v1505 = vmul.f32 %v1483, 1.442695
  %v1506 = vpow.pop %v1505
  %v1507 = vmul.f32 %v1484, 1.442695
  %v1508 = vpow.pop %v1507
  %v1509 = vmul.f32 %v1485, 1.442695
  %v1510 = vpow.pop %v1509
  %v1511 = vmul.f32 %v1486, 1.442695
  %v1512 = vpow.pop %v1511
  %v1513 = vmul.f32 %v1487, 1.442695
  %v1514 = vpow.pop %v1513
  %v1515 = vmul.f32 %v1488, 1.442695
  %v1516 = vpow.pop %v1515
  %v1517 = vmul.f32 %v1489, 1.442695
  %v1518 = vpow.pop %v1517
  %v1519 = vmul.f32 %v1490, 1.442695
  %v1520 = vpow.pop %v1519
  %v1521 = vmul.f32 %v1491, 1.442695
  %v1522 = vpow.pop %v1521
  %v1523 = vmul.f32 %v1492, 1.442695
  %v1524 = vpow.pop %v1523
  %v1525 = vsel %vm152, %v1494, 0.0
  %1526 = vadd.xlane.f32.xlu0 %v1525
  %v1527 = vpop.xlane.xlu0 %1526
  %v1528 = vsel %vm152, %v1496, 0.0
  %1529 = vadd.xlane.f32.xlu0 %v1528
  %v1530 = vpop.xlane.xlu0 %1529
  %v1531 = vsel %vm152, %v1498, 0.0
  %1532 = vadd.xlane.f32.xlu0 %v1531
  %v1533 = vpop.xlane.xlu0 %1532
  %v1534 = vsel %vm152, %v1500, 0.0
  %1535 = vadd.xlane.f32.xlu0 %v1534
  %v1536 = vpop.xlane.xlu0 %1535
  %v1537 = vsel %vm152, %v1502, 0.0
  %1538 = vadd.xlane.f32.xlu0 %v1537
  %v1539 = vpop.xlane.xlu0 %1538
  %v1540 = vsel %vm152, %v1504, 0.0
  %1541 = vadd.xlane.f32.xlu0 %v1540
  %v1542 = vpop.xlane.xlu0 %1541
  %v1543 = vsel %vm152, %v1506, 0.0
  %1544 = vadd.xlane.f32.xlu0 %v1543
  %v1545 = vpop.xlane.xlu0 %1544
  %v1546 = vsel %vm152, %v1508, 0.0
  %1547 = vadd.xlane.f32.xlu0 %v1546
  %v1548 = vpop.xlane.xlu0 %1547
  %v1549 = vsel %vm152, %v1510, 0.0
  %1550 = vadd.xlane.f32.xlu0 %v1549
  %v1551 = vpop.xlane.xlu0 %1550
  %v1552 = vsel %vm152, %v1512, 0.0
  %1553 = vadd.xlane.f32.xlu0 %v1552
  %v1554 = vpop.xlane.xlu0 %1553
  %v1555 = vsel %vm152, %v1514, 0.0
  %1556 = vadd.xlane.f32.xlu0 %v1555
  %v1557 = vpop.xlane.xlu0 %1556
  %v1558 = vsel %vm152, %v1516, 0.0
  %1559 = vadd.xlane.f32.xlu0 %v1558
  %v1560 = vpop.xlane.xlu0 %1559
  %v1561 = vsel %vm152, %v1518, 0.0
  %1562 = vadd.xlane.f32.xlu0 %v1561
  %v1563 = vpop.xlane.xlu0 %1562
  %v1564 = vsel %vm152, %v1520, 0.0
  %1565 = vadd.xlane.f32.xlu0 %v1564
  %v1566 = vpop.xlane.xlu0 %1565
  %v1567 = vsel %vm152, %v1522, 0.0
  %1568 = vadd.xlane.f32.xlu0 %v1567
  %v1569 = vpop.xlane.xlu0 %1568
  %v1570 = vsel %vm152, %v1524, 0.0
  %1571 = vadd.xlane.f32.xlu0 %v1570
  %v1572 = vpop.xlane.xlu0 %1571
  %v1573 = vrcp.pop %v1527
  %v1574 = vrcp.pop %v1530
  %v1575 = vrcp.pop %v1533
  %v1576 = vrcp.pop %v1536
  %v1577 = vrcp.pop %v1539
  %v1578 = vrcp.pop %v1542
  %v1579 = vrcp.pop %v1545
  %v1580 = vrcp.pop %v1548
  %v1581 = vrcp.pop %v1551
  %v1582 = vrcp.pop %v1554
  %v1583 = vrcp.pop %v1557
  %v1584 = vrcp.pop %v1560
  %v1585 = vrcp.pop %v1563
  %v1586 = vrcp.pop %v1566
  %v1587 = vrcp.pop %v1569
  %v1588 = vrcp.pop %v1572
  %v1589 = vmul.f32 %v1494, %v1573
  %v1590 = vmul.f32 %v1496, %v1574
  %v1591 = vmul.f32 %v1498, %v1575
  %v1592 = vmul.f32 %v1500, %v1576
  %v1593 = vmul.f32 %v1502, %v1577
  %v1594 = vmul.f32 %v1504, %v1578
  %v1595 = vmul.f32 %v1506, %v1579
  %v1596 = vmul.f32 %v1508, %v1580
  %v1597 = vmul.f32 %v1510, %v1581
  %v1598 = vmul.f32 %v1512, %v1582
  %v1599 = vmul.f32 %v1514, %v1583
  %v1600 = vmul.f32 %v1516, %v1584
  %v1601 = vmul.f32 %v1518, %v1585
  %v1602 = vmul.f32 %v1520, %v1586
  %v1603 = vmul.f32 %v1522, %v1587
  %v1604 = vmul.f32 %v1524, %v1588
  %v1605 = vpack.c.bf16 %v1589, %v1589
  %v1606 = vpack.c.bf16 %v1590, %v1590
  %v1607 = vpack.c.bf16 %v1591, %v1591
  %v1608 = vpack.c.bf16 %v1592, %v1592
  %v1609 = vpack.c.bf16 %v1593, %v1593
  %v1610 = vpack.c.bf16 %v1594, %v1594
  %v1611 = vpack.c.bf16 %v1595, %v1595
  %v1612 = vpack.c.bf16 %v1596, %v1596
  %v1613 = vpack.c.bf16 %v1597, %v1597
  %v1614 = vpack.c.bf16 %v1598, %v1598
  %v1615 = vpack.c.bf16 %v1599, %v1599
  %v1616 = vpack.c.bf16 %v1600, %v1600
  %v1617 = vpack.c.bf16 %v1601, %v1601
  %v1618 = vpack.c.bf16 %v1602, %v1602
  %v1619 = vpack.c.bf16 %v1603, %v1603
  %v1620 = vpack.c.bf16 %v1604, %v1604
  %1621 = vrot.lane.b32.xlu0 %v149, 56
  %v1622 = vpop.permute.xlu0 %1621
  %v1624 = vsel %vm152, %v1605, 0
  %v1627 = vsel %vm729, %v1622, 0
  %1629 = vmatpush.bf16.msra.mxu0 0
  %1630 = vmatpush.bf16.msra.mxu0 0
  %1631 = vmatpush.bf16.msra.mxu0 0
  %1632 = vmatpush.bf16.msra.mxu0 0
  %1633 = vmatpush.bf16.msra.mxu0 0
  %1634 = vmatpush.bf16.msra.mxu0 0
  %1635 = vmatpush.bf16.msra.mxu0 0
  %1636 = vmatpush.bf16.msra.mxu0 %v1627
  %1637 = vmatmul.bf16.gmra.mxu0 %v1624
  %v1638 = vpop.f32.mrf.mxu0
  %v1639 = vadd.f32 0.0, %v1638
  %v1640 = vpop.f32.mrf.mxu0
  %1641 = vdwg.mxu0
  %1642 = vrot.lane.b32.xlu0 %v174, 56
  %v1643 = vpop.permute.xlu0 %1642
  %v1645 = vsel %vm152, %v1606, 0
  %v1648 = vsel %vm729, %v1643, 0
  %1650 = vmatpush.bf16.msra.mxu0 0
  %1651 = vmatpush.bf16.msra.mxu0 0
  %1652 = vmatpush.bf16.msra.mxu0 0
  %1653 = vmatpush.bf16.msra.mxu0 0
  %1654 = vmatpush.bf16.msra.mxu0 0
  %1655 = vmatpush.bf16.msra.mxu0 0
  %1656 = vmatpush.bf16.msra.mxu0 0
  %1657 = vmatpush.bf16.msra.mxu0 %v1648
  %1658 = vmatmul.bf16.gmra.mxu0 %v1645
  %v1659 = vpop.f32.mrf.mxu0
  %v1660 = vadd.f32 0.0, %v1659
  %v1661 = vpop.f32.mrf.mxu0
  %1662 = vdwg.mxu0
  %1663 = vrot.lane.b32.xlu0 %v198, 56
  %v1664 = vpop.permute.xlu0 %1663
  %v1666 = vsel %vm152, %v1607, 0
  %v1669 = vsel %vm729, %v1664, 0
  %1671 = vmatpush.bf16.msra.mxu0 0
  %1672 = vmatpush.bf16.msra.mxu0 0
  %1673 = vmatpush.bf16.msra.mxu0 0
  %1674 = vmatpush.bf16.msra.mxu0 0
  %1675 = vmatpush.bf16.msra.mxu0 0
  %1676 = vmatpush.bf16.msra.mxu0 0
  %1677 = vmatpush.bf16.msra.mxu0 0
  %1678 = vmatpush.bf16.msra.mxu0 %v1669
  %1679 = vmatmul.bf16.gmra.mxu0 %v1666
  %v1680 = vpop.f32.mrf.mxu0
  %v1681 = vadd.f32 0.0, %v1680
  %v1682 = vpop.f32.mrf.mxu0
  %1683 = vdwg.mxu0
  %1684 = vrot.lane.b32.xlu0 %v222, 56
  %v1685 = vpop.permute.xlu0 %1684
  %v1687 = vsel %vm152, %v1608, 0
  %v1690 = vsel %vm729, %v1685, 0
  %1692 = vmatpush.bf16.msra.mxu0 0
  %1693 = vmatpush.bf16.msra.mxu0 0
  %1694 = vmatpush.bf16.msra.mxu0 0
  %1695 = vmatpush.bf16.msra.mxu0 0
  %1696 = vmatpush.bf16.msra.mxu0 0
  %1697 = vmatpush.bf16.msra.mxu0 0
  %1698 = vmatpush.bf16.msra.mxu0 0
  %1699 = vmatpush.bf16.msra.mxu0 %v1690
  %1700 = vmatmul.bf16.gmra.mxu0 %v1687
  %v1701 = vpop.f32.mrf.mxu0
  %v1702 = vadd.f32 0.0, %v1701
  %v1703 = vpop.f32.mrf.mxu0
  %1704 = vdwg.mxu0
  %1705 = vrot.lane.b32.xlu0 %v246, 56
  %v1706 = vpop.permute.xlu0 %1705
  %v1708 = vsel %vm152, %v1609, 0
  %v1711 = vsel %vm729, %v1706, 0
  %1713 = vmatpush.bf16.msra.mxu0 0
  %1714 = vmatpush.bf16.msra.mxu0 0
  %1715 = vmatpush.bf16.msra.mxu0 0
  %1716 = vmatpush.bf16.msra.mxu0 0
  %1717 = vmatpush.bf16.msra.mxu0 0
  %1718 = vmatpush.bf16.msra.mxu0 0
  %1719 = vmatpush.bf16.msra.mxu0 0
  %1720 = vmatpush.bf16.msra.mxu0 %v1711
  %1721 = vmatmul.bf16.gmra.mxu0 %v1708
  %v1722 = vpop.f32.mrf.mxu0
  %v1723 = vadd.f32 0.0, %v1722
  %v1724 = vpop.f32.mrf.mxu0
  %1725 = vdwg.mxu0
  %1726 = vrot.lane.b32.xlu0 %v270, 56
  %v1727 = vpop.permute.xlu0 %1726
  %v1729 = vsel %vm152, %v1610, 0
  %v1732 = vsel %vm729, %v1727, 0
  %1734 = vmatpush.bf16.msra.mxu0 0
  %1735 = vmatpush.bf16.msra.mxu0 0
  %1736 = vmatpush.bf16.msra.mxu0 0
  %1737 = vmatpush.bf16.msra.mxu0 0
  %1738 = vmatpush.bf16.msra.mxu0 0
  %1739 = vmatpush.bf16.msra.mxu0 0
  %1740 = vmatpush.bf16.msra.mxu0 0
  %1741 = vmatpush.bf16.msra.mxu0 %v1732
  %1742 = vmatmul.bf16.gmra.mxu0 %v1729
  %v1743 = vpop.f32.mrf.mxu0
  %v1744 = vadd.f32 0.0, %v1743
  %v1745 = vpop.f32.mrf.mxu0
  %1746 = vdwg.mxu0
  %1747 = vrot.lane.b32.xlu0 %v294, 56
  %v1748 = vpop.permute.xlu0 %1747
  %v1750 = vsel %vm152, %v1611, 0
  %v1753 = vsel %vm729, %v1748, 0
  %1755 = vmatpush.bf16.msra.mxu0 0
  %1756 = vmatpush.bf16.msra.mxu0 0
  %1757 = vmatpush.bf16.msra.mxu0 0
  %1758 = vmatpush.bf16.msra.mxu0 0
  %1759 = vmatpush.bf16.msra.mxu0 0
  %1760 = vmatpush.bf16.msra.mxu0 0
  %1761 = vmatpush.bf16.msra.mxu0 0
  %1762 = vmatpush.bf16.msra.mxu0 %v1753
  %1763 = vmatmul.bf16.gmra.mxu0 %v1750
  %v1764 = vpop.f32.mrf.mxu0
  %v1765 = vadd.f32 0.0, %v1764
  %v1766 = vpop.f32.mrf.mxu0
  %1767 = vdwg.mxu0
  %1768 = vrot.lane.b32.xlu0 %v318, 56
  %v1769 = vpop.permute.xlu0 %1768
  %v1771 = vsel %vm152, %v1612, 0
  %v1774 = vsel %vm729, %v1769, 0
  %1776 = vmatpush.bf16.msra.mxu0 0
  %1777 = vmatpush.bf16.msra.mxu0 0
  %1778 = vmatpush.bf16.msra.mxu0 0
  %1779 = vmatpush.bf16.msra.mxu0 0
  %1780 = vmatpush.bf16.msra.mxu0 0
  %1781 = vmatpush.bf16.msra.mxu0 0
  %1782 = vmatpush.bf16.msra.mxu0 0
  %1783 = vmatpush.bf16.msra.mxu0 %v1774
  %1784 = vmatmul.bf16.gmra.mxu0 %v1771
  %v1785 = vpop.f32.mrf.mxu0
  %v1786 = vadd.f32 0.0, %v1785
  %v1787 = vpop.f32.mrf.mxu0
  %1788 = vdwg.mxu0
  %1789 = vrot.lane.b32.xlu0 %v342, 56
  %v1790 = vpop.permute.xlu0 %1789
  %v1792 = vsel %vm152, %v1613, 0
  %v1795 = vsel %vm729, %v1790, 0
  %1797 = vmatpush.bf16.msra.mxu0 0
  %1798 = vmatpush.bf16.msra.mxu0 0
  %1799 = vmatpush.bf16.msra.mxu0 0
  %1800 = vmatpush.bf16.msra.mxu0 0
  %1801 = vmatpush.bf16.msra.mxu0 0
  %1802 = vmatpush.bf16.msra.mxu0 0
  %1803 = vmatpush.bf16.msra.mxu0 0
  %1804 = vmatpush.bf16.msra.mxu0 %v1795
  %1805 = vmatmul.bf16.gmra.mxu0 %v1792
  %v1806 = vpop.f32.mrf.mxu0
  %v1807 = vadd.f32 0.0, %v1806
  %v1808 = vpop.f32.mrf.mxu0
  %1809 = vdwg.mxu0
  %1810 = vrot.lane.b32.xlu0 %v366, 56
  %v1811 = vpop.permute.xlu0 %1810
  %v1813 = vsel %vm152, %v1614, 0
  %v1816 = vsel %vm729, %v1811, 0
  %1818 = vmatpush.bf16.msra.mxu0 0
  %1819 = vmatpush.bf16.msra.mxu0 0
  %1820 = vmatpush.bf16.msra.mxu0 0
  %1821 = vmatpush.bf16.msra.mxu0 0
  %1822 = vmatpush.bf16.msra.mxu0 0
  %1823 = vmatpush.bf16.msra.mxu0 0
  %1824 = vmatpush.bf16.msra.mxu0 0
  %1825 = vmatpush.bf16.msra.mxu0 %v1816
  %1826 = vmatmul.bf16.gmra.mxu0 %v1813
  %v1827 = vpop.f32.mrf.mxu0
  %v1828 = vadd.f32 0.0, %v1827
  %v1829 = vpop.f32.mrf.mxu0
  %1830 = vdwg.mxu0
  %1831 = vrot.lane.b32.xlu0 %v390, 56
  %v1832 = vpop.permute.xlu0 %1831
  %v1834 = vsel %vm152, %v1615, 0
  %v1837 = vsel %vm729, %v1832, 0
  %1839 = vmatpush.bf16.msra.mxu0 0
  %1840 = vmatpush.bf16.msra.mxu0 0
  %1841 = vmatpush.bf16.msra.mxu0 0
  %1842 = vmatpush.bf16.msra.mxu0 0
  %1843 = vmatpush.bf16.msra.mxu0 0
  %1844 = vmatpush.bf16.msra.mxu0 0
  %1845 = vmatpush.bf16.msra.mxu0 0
  %1846 = vmatpush.bf16.msra.mxu0 %v1837
  %1847 = vmatmul.bf16.gmra.mxu0 %v1834
  %v1848 = vpop.f32.mrf.mxu0
  %v1849 = vadd.f32 0.0, %v1848
  %v1850 = vpop.f32.mrf.mxu0
  %1851 = vdwg.mxu0
  %1852 = vrot.lane.b32.xlu0 %v414, 56
  %v1853 = vpop.permute.xlu0 %1852
  %v1855 = vsel %vm152, %v1616, 0
  %v1858 = vsel %vm729, %v1853, 0
  %1860 = vmatpush.bf16.msra.mxu0 0
  %1861 = vmatpush.bf16.msra.mxu0 0
  %1862 = vmatpush.bf16.msra.mxu0 0
  %1863 = vmatpush.bf16.msra.mxu0 0
  %1864 = vmatpush.bf16.msra.mxu0 0
  %1865 = vmatpush.bf16.msra.mxu0 0
  %1866 = vmatpush.bf16.msra.mxu0 0
  %1867 = vmatpush.bf16.msra.mxu0 %v1858
  %1868 = vmatmul.bf16.gmra.mxu0 %v1855
  %v1869 = vpop.f32.mrf.mxu0
  %v1870 = vadd.f32 0.0, %v1869
  %v1871 = vpop.f32.mrf.mxu0
  %1872 = vdwg.mxu0
  %1873 = vrot.lane.b32.xlu0 %v438, 56
  %v1874 = vpop.permute.xlu0 %1873
  %v1876 = vsel %vm152, %v1617, 0
  %v1879 = vsel %vm729, %v1874, 0
  %1881 = vmatpush.bf16.msra.mxu0 0
  %1882 = vmatpush.bf16.msra.mxu0 0
  %1883 = vmatpush.bf16.msra.mxu0 0
  %1884 = vmatpush.bf16.msra.mxu0 0
  %1885 = vmatpush.bf16.msra.mxu0 0
  %1886 = vmatpush.bf16.msra.mxu0 0
  %1887 = vmatpush.bf16.msra.mxu0 0
  %1888 = vmatpush.bf16.msra.mxu0 %v1879
  %1889 = vmatmul.bf16.gmra.mxu0 %v1876
  %v1890 = vpop.f32.mrf.mxu0
  %v1891 = vadd.f32 0.0, %v1890
  %v1892 = vpop.f32.mrf.mxu0
  %1893 = vdwg.mxu0
  %1894 = vrot.lane.b32.xlu0 %v462, 56
  %v1895 = vpop.permute.xlu0 %1894
  %v1897 = vsel %vm152, %v1618, 0
  %v1900 = vsel %vm729, %v1895, 0
  %1902 = vmatpush.bf16.msra.mxu0 0
  %1903 = vmatpush.bf16.msra.mxu0 0
  %1904 = vmatpush.bf16.msra.mxu0 0
  %1905 = vmatpush.bf16.msra.mxu0 0
  %1906 = vmatpush.bf16.msra.mxu0 0
  %1907 = vmatpush.bf16.msra.mxu0 0
  %1908 = vmatpush.bf16.msra.mxu0 0
  %1909 = vmatpush.bf16.msra.mxu0 %v1900
  %1910 = vmatmul.bf16.gmra.mxu0 %v1897
  %v1911 = vpop.f32.mrf.mxu0
  %v1912 = vadd.f32 0.0, %v1911
  %v1913 = vpop.f32.mrf.mxu0
  %1914 = vdwg.mxu0
  %1915 = vrot.lane.b32.xlu0 %v486, 56
  %v1916 = vpop.permute.xlu0 %1915
  %v1918 = vsel %vm152, %v1619, 0
  %v1921 = vsel %vm729, %v1916, 0
  %1923 = vmatpush.bf16.msra.mxu0 0
  %1924 = vmatpush.bf16.msra.mxu0 0
  %1925 = vmatpush.bf16.msra.mxu0 0
  %1926 = vmatpush.bf16.msra.mxu0 0
  %1927 = vmatpush.bf16.msra.mxu0 0
  %1928 = vmatpush.bf16.msra.mxu0 0
  %1929 = vmatpush.bf16.msra.mxu0 0
  %1930 = vmatpush.bf16.msra.mxu0 %v1921
  %1931 = vmatmul.bf16.gmra.mxu0 %v1918
  %v1932 = vpop.f32.mrf.mxu0
  %v1933 = vadd.f32 0.0, %v1932
  %v1934 = vpop.f32.mrf.mxu0
  %1935 = vdwg.mxu0
  %1936 = vrot.lane.b32.xlu0 %v510, 56
  %v1937 = vpop.permute.xlu0 %1936
  %v1939 = vsel %vm152, %v1620, 0
  %v1942 = vsel %vm729, %v1937, 0
  %1944 = vmatpush.bf16.msra.mxu0 0
  %1945 = vmatpush.bf16.msra.mxu0 0
  %1946 = vmatpush.bf16.msra.mxu0 0
  %1947 = vmatpush.bf16.msra.mxu0 0
  %1948 = vmatpush.bf16.msra.mxu0 0
  %1949 = vmatpush.bf16.msra.mxu0 0
  %1950 = vmatpush.bf16.msra.mxu0 0
  %1951 = vmatpush.bf16.msra.mxu0 %v1942
  %1952 = vmatmul.bf16.gmra.mxu0 %v1939
  %v1953 = vpop.f32.mrf.mxu0
  %v1954 = vadd.f32 0.0, %v1953
  %v1955 = vpop.f32.mrf.mxu0
  %1956 = vdwg.mxu0
  %1957 = vrot.lane.b32.xlu0 %v149, 112
  %v1958 = vpop.permute.xlu0 %1957
  %1959 = vrot.lane.b32.xlu0 %v149, 80
  %v1960 = vpop.permute.xlu0 %1959
  %v1962 = vsel %vm152, %v1958, 0
  %v1965 = vsel %vm152, %v1960, 0
  %1967 = vmatpush.bf16.xpose.msra.mxu0 0
  %1968 = vmatpush.bf16.xpose.msra.mxu0 0
  %1969 = vmatpush.bf16.xpose.msra.mxu0 0
  %1970 = vmatpush.bf16.xpose.msra.mxu0 0
  %1971 = vmatpush.bf16.xpose.msra.mxu0 0
  %1972 = vmatpush.bf16.xpose.msra.mxu0 0
  %1973 = vmatpush.bf16.xpose.msra.mxu0 0
  %1974 = vmatpush.bf16.xpose.msra.mxu0 %v1965
  %1975 = vmatmul.bf16.gmra.mxu0 %v1962
  %v1976 = vpop.f32.mrf.mxu0
  %v1977 = vadd.f32 0.0, %v1976
  %v1978 = vpop.f32.mrf.mxu0
  %1979 = vdwg.mxu0
  %1980 = vrot.lane.b32.xlu0 %v174, 112
  %v1981 = vpop.permute.xlu0 %1980
  %1982 = vrot.lane.b32.xlu0 %v174, 80
  %v1983 = vpop.permute.xlu0 %1982
  %v1985 = vsel %vm152, %v1981, 0
  %v1988 = vsel %vm152, %v1983, 0
  %1990 = vmatpush.bf16.xpose.msra.mxu0 0
  %1991 = vmatpush.bf16.xpose.msra.mxu0 0
  %1992 = vmatpush.bf16.xpose.msra.mxu0 0
  %1993 = vmatpush.bf16.xpose.msra.mxu0 0
  %1994 = vmatpush.bf16.xpose.msra.mxu0 0
  %1995 = vmatpush.bf16.xpose.msra.mxu0 0
  %1996 = vmatpush.bf16.xpose.msra.mxu0 0
  %1997 = vmatpush.bf16.xpose.msra.mxu0 %v1988
  %1998 = vmatmul.bf16.gmra.mxu0 %v1985
  %v1999 = vpop.f32.mrf.mxu0
  %v2000 = vadd.f32 0.0, %v1999
  %v2001 = vpop.f32.mrf.mxu0
  %2002 = vdwg.mxu0
  %2003 = vrot.lane.b32.xlu0 %v198, 112
  %v2004 = vpop.permute.xlu0 %2003
  %2005 = vrot.lane.b32.xlu0 %v198, 80
  %v2006 = vpop.permute.xlu0 %2005
  %v2008 = vsel %vm152, %v2004, 0
  %v2011 = vsel %vm152, %v2006, 0
  %2013 = vmatpush.bf16.xpose.msra.mxu0 0
  %2014 = vmatpush.bf16.xpose.msra.mxu0 0
  %2015 = vmatpush.bf16.xpose.msra.mxu0 0
  %2016 = vmatpush.bf16.xpose.msra.mxu0 0
  %2017 = vmatpush.bf16.xpose.msra.mxu0 0
  %2018 = vmatpush.bf16.xpose.msra.mxu0 0
  %2019 = vmatpush.bf16.xpose.msra.mxu0 0
  %2020 = vmatpush.bf16.xpose.msra.mxu0 %v2011
  %2021 = vmatmul.bf16.gmra.mxu0 %v2008
  %v2022 = vpop.f32.mrf.mxu0
  %v2023 = vadd.f32 0.0, %v2022
  %v2024 = vpop.f32.mrf.mxu0
  %2025 = vdwg.mxu0
  %2026 = vrot.lane.b32.xlu0 %v222, 112
  %v2027 = vpop.permute.xlu0 %2026
  %2028 = vrot.lane.b32.xlu0 %v222, 80
  %v2029 = vpop.permute.xlu0 %2028
  %v2031 = vsel %vm152, %v2027, 0
  %v2034 = vsel %vm152, %v2029, 0
  %2036 = vmatpush.bf16.xpose.msra.mxu0 0
  %2037 = vmatpush.bf16.xpose.msra.mxu0 0
  %2038 = vmatpush.bf16.xpose.msra.mxu0 0
  %2039 = vmatpush.bf16.xpose.msra.mxu0 0
  %2040 = vmatpush.bf16.xpose.msra.mxu0 0
  %2041 = vmatpush.bf16.xpose.msra.mxu0 0
  %2042 = vmatpush.bf16.xpose.msra.mxu0 0
  %2043 = vmatpush.bf16.xpose.msra.mxu0 %v2034
  %2044 = vmatmul.bf16.gmra.mxu0 %v2031
  %v2045 = vpop.f32.mrf.mxu0
  %v2046 = vadd.f32 0.0, %v2045
  %v2047 = vpop.f32.mrf.mxu0
  %2048 = vdwg.mxu0
  %2049 = vrot.lane.b32.xlu0 %v246, 112
  %v2050 = vpop.permute.xlu0 %2049
  %2051 = vrot.lane.b32.xlu0 %v246, 80
  %v2052 = vpop.permute.xlu0 %2051
  %v2054 = vsel %vm152, %v2050, 0
  %v2057 = vsel %vm152, %v2052, 0
  %2059 = vmatpush.bf16.xpose.msra.mxu0 0
  %2060 = vmatpush.bf16.xpose.msra.mxu0 0
  %2061 = vmatpush.bf16.xpose.msra.mxu0 0
  %2062 = vmatpush.bf16.xpose.msra.mxu0 0
  %2063 = vmatpush.bf16.xpose.msra.mxu0 0
  %2064 = vmatpush.bf16.xpose.msra.mxu0 0
  %2065 = vmatpush.bf16.xpose.msra.mxu0 0
  %2066 = vmatpush.bf16.xpose.msra.mxu0 %v2057
  %2067 = vmatmul.bf16.gmra.mxu0 %v2054
  %v2068 = vpop.f32.mrf.mxu0
  %v2069 = vadd.f32 0.0, %v2068
  %v2070 = vpop.f32.mrf.mxu0
  %2071 = vdwg.mxu0
  %2072 = vrot.lane.b32.xlu0 %v270, 112
  %v2073 = vpop.permute.xlu0 %2072
  %2074 = vrot.lane.b32.xlu0 %v270, 80
  %v2075 = vpop.permute.xlu0 %2074
  %v2077 = vsel %vm152, %v2073, 0
  %v2080 = vsel %vm152, %v2075, 0
  %2082 = vmatpush.bf16.xpose.msra.mxu0 0
  %2083 = vmatpush.bf16.xpose.msra.mxu0 0
  %2084 = vmatpush.bf16.xpose.msra.mxu0 0
  %2085 = vmatpush.bf16.xpose.msra.mxu0 0
  %2086 = vmatpush.bf16.xpose.msra.mxu0 0
  %2087 = vmatpush.bf16.xpose.msra.mxu0 0
  %2088 = vmatpush.bf16.xpose.msra.mxu0 0
  %2089 = vmatpush.bf16.xpose.msra.mxu0 %v2080
  %2090 = vmatmul.bf16.gmra.mxu0 %v2077
  %v2091 = vpop.f32.mrf.mxu0
  %v2092 = vadd.f32 0.0, %v2091
  %v2093 = vpop.f32.mrf.mxu0
  %2094 = vdwg.mxu0
  %2095 = vrot.lane.b32.xlu0 %v294, 112
  %v2096 = vpop.permute.xlu0 %2095
  %2097 = vrot.lane.b32.xlu0 %v294, 80
  %v2098 = vpop.permute.xlu0 %2097
  %v2100 = vsel %vm152, %v2096, 0
  %v2103 = vsel %vm152, %v2098, 0
  %2105 = vmatpush.bf16.xpose.msra.mxu0 0
  %2106 = vmatpush.bf16.xpose.msra.mxu0 0
  %2107 = vmatpush.bf16.xpose.msra.mxu0 0
  %2108 = vmatpush.bf16.xpose.msra.mxu0 0
  %2109 = vmatpush.bf16.xpose.msra.mxu0 0
  %2110 = vmatpush.bf16.xpose.msra.mxu0 0
  %2111 = vmatpush.bf16.xpose.msra.mxu0 0
  %2112 = vmatpush.bf16.xpose.msra.mxu0 %v2103
  %2113 = vmatmul.bf16.gmra.mxu0 %v2100
  %v2114 = vpop.f32.mrf.mxu0
  %v2115 = vadd.f32 0.0, %v2114
  %v2116 = vpop.f32.mrf.mxu0
  %2117 = vdwg.mxu0
  %2118 = vrot.lane.b32.xlu0 %v318, 112
  %v2119 = vpop.permute.xlu0 %2118
  %2120 = vrot.lane.b32.xlu0 %v318, 80
  %v2121 = vpop.permute.xlu0 %2120
  %v2123 = vsel %vm152, %v2119, 0
  %v2126 = vsel %vm152, %v2121, 0
  %2128 = vmatpush.bf16.xpose.msra.mxu0 0
  %2129 = vmatpush.bf16.xpose.msra.mxu0 0
  %2130 = vmatpush.bf16.xpose.msra.mxu0 0
  %2131 = vmatpush.bf16.xpose.msra.mxu0 0
  %2132 = vmatpush.bf16.xpose.msra.mxu0 0
  %2133 = vmatpush.bf16.xpose.msra.mxu0 0
  %2134 = vmatpush.bf16.xpose.msra.mxu0 0
  %2135 = vmatpush.bf16.xpose.msra.mxu0 %v2126
  %2136 = vmatmul.bf16.gmra.mxu0 %v2123
  %v2137 = vpop.f32.mrf.mxu0
  %v2138 = vadd.f32 0.0, %v2137
  %v2139 = vpop.f32.mrf.mxu0
  %2140 = vdwg.mxu0
  %2141 = vrot.lane.b32.xlu0 %v342, 112
  %v2142 = vpop.permute.xlu0 %2141
  %2143 = vrot.lane.b32.xlu0 %v342, 80
  %v2144 = vpop.permute.xlu0 %2143
  %v2146 = vsel %vm152, %v2142, 0
  %v2149 = vsel %vm152, %v2144, 0
  %2151 = vmatpush.bf16.xpose.msra.mxu0 0
  %2152 = vmatpush.bf16.xpose.msra.mxu0 0
  %2153 = vmatpush.bf16.xpose.msra.mxu0 0
  %2154 = vmatpush.bf16.xpose.msra.mxu0 0
  %2155 = vmatpush.bf16.xpose.msra.mxu0 0
  %2156 = vmatpush.bf16.xpose.msra.mxu0 0
  %2157 = vmatpush.bf16.xpose.msra.mxu0 0
  %2158 = vmatpush.bf16.xpose.msra.mxu0 %v2149
  %2159 = vmatmul.bf16.gmra.mxu0 %v2146
  %v2160 = vpop.f32.mrf.mxu0
  %v2161 = vadd.f32 0.0, %v2160
  %v2162 = vpop.f32.mrf.mxu0
  %2163 = vdwg.mxu0
  %2164 = vrot.lane.b32.xlu0 %v366, 112
  %v2165 = vpop.permute.xlu0 %2164
  %2166 = vrot.lane.b32.xlu0 %v366, 80
  %v2167 = vpop.permute.xlu0 %2166
  %v2169 = vsel %vm152, %v2165, 0
  %v2172 = vsel %vm152, %v2167, 0
  %2174 = vmatpush.bf16.xpose.msra.mxu0 0
  %2175 = vmatpush.bf16.xpose.msra.mxu0 0
  %2176 = vmatpush.bf16.xpose.msra.mxu0 0
  %2177 = vmatpush.bf16.xpose.msra.mxu0 0
  %2178 = vmatpush.bf16.xpose.msra.mxu0 0
  %2179 = vmatpush.bf16.xpose.msra.mxu0 0
  %2180 = vmatpush.bf16.xpose.msra.mxu0 0
  %2181 = vmatpush.bf16.xpose.msra.mxu0 %v2172
  %2182 = vmatmul.bf16.gmra.mxu0 %v2169
  %v2183 = vpop.f32.mrf.mxu0
  %v2184 = vadd.f32 0.0, %v2183
  %v2185 = vpop.f32.mrf.mxu0
  %2186 = vdwg.mxu0
  %2187 = vrot.lane.b32.xlu0 %v390, 112
  %v2188 = vpop.permute.xlu0 %2187
  %2189 = vrot.lane.b32.xlu0 %v390, 80
  %v2190 = vpop.permute.xlu0 %2189
  %v2192 = vsel %vm152, %v2188, 0
  %v2195 = vsel %vm152, %v2190, 0
  %2197 = vmatpush.bf16.xpose.msra.mxu0 0
  %2198 = vmatpush.bf16.xpose.msra.mxu0 0
  %2199 = vmatpush.bf16.xpose.msra.mxu0 0
  %2200 = vmatpush.bf16.xpose.msra.mxu0 0
  %2201 = vmatpush.bf16.xpose.msra.mxu0 0
  %2202 = vmatpush.bf16.xpose.msra.mxu0 0
  %2203 = vmatpush.bf16.xpose.msra.mxu0 0
  %2204 = vmatpush.bf16.xpose.msra.mxu0 %v2195
  %2205 = vmatmul.bf16.gmra.mxu0 %v2192
  %v2206 = vpop.f32.mrf.mxu0
  %v2207 = vadd.f32 0.0, %v2206
  %v2208 = vpop.f32.mrf.mxu0
  %2209 = vdwg.mxu0
  %2210 = vrot.lane.b32.xlu0 %v414, 112
  %v2211 = vpop.permute.xlu0 %2210
  %2212 = vrot.lane.b32.xlu0 %v414, 80
  %v2213 = vpop.permute.xlu0 %2212
  %v2215 = vsel %vm152, %v2211, 0
  %v2218 = vsel %vm152, %v2213, 0
  %2220 = vmatpush.bf16.xpose.msra.mxu0 0
  %2221 = vmatpush.bf16.xpose.msra.mxu0 0
  %2222 = vmatpush.bf16.xpose.msra.mxu0 0
  %2223 = vmatpush.bf16.xpose.msra.mxu0 0
  %2224 = vmatpush.bf16.xpose.msra.mxu0 0
  %2225 = vmatpush.bf16.xpose.msra.mxu0 0
  %2226 = vmatpush.bf16.xpose.msra.mxu0 0
  %2227 = vmatpush.bf16.xpose.msra.mxu0 %v2218
  %2228 = vmatmul.bf16.gmra.mxu0 %v2215
  %v2229 = vpop.f32.mrf.mxu0
  %v2230 = vadd.f32 0.0, %v2229
  %v2231 = vpop.f32.mrf.mxu0
  %2232 = vdwg.mxu0
  %2233 = vrot.lane.b32.xlu0 %v438, 112
  %v2234 = vpop.permute.xlu0 %2233
  %2235 = vrot.lane.b32.xlu0 %v438, 80
  %v2236 = vpop.permute.xlu0 %2235
  %v2238 = vsel %vm152, %v2234, 0
  %v2241 = vsel %vm152, %v2236, 0
  %2243 = vmatpush.bf16.xpose.msra.mxu0 0
  %2244 = vmatpush.bf16.xpose.msra.mxu0 0
  %2245 = vmatpush.bf16.xpose.msra.mxu0 0
  %2246 = vmatpush.bf16.xpose.msra.mxu0 0
  %2247 = vmatpush.bf16.xpose.msra.mxu0 0
  %2248 = vmatpush.bf16.xpose.msra.mxu0 0
  %2249 = vmatpush.bf16.xpose.msra.mxu0 0
  %2250 = vmatpush.bf16.xpose.msra.mxu0 %v2241
  %2251 = vmatmul.bf16.gmra.mxu0 %v2238
  %v2252 = vpop.f32.mrf.mxu0
  %v2253 = vadd.f32 0.0, %v2252
  %v2254 = vpop.f32.mrf.mxu0
  %2255 = vdwg.mxu0
  %2256 = vrot.lane.b32.xlu0 %v462, 112
  %v2257 = vpop.permute.xlu0 %2256
  %2258 = vrot.lane.b32.xlu0 %v462, 80
  %v2259 = vpop.permute.xlu0 %2258
  %v2261 = vsel %vm152, %v2257, 0
  %v2264 = vsel %vm152, %v2259, 0
  %2266 = vmatpush.bf16.xpose.msra.mxu0 0
  %2267 = vmatpush.bf16.xpose.msra.mxu0 0
  %2268 = vmatpush.bf16.xpose.msra.mxu0 0
  %2269 = vmatpush.bf16.xpose.msra.mxu0 0
  %2270 = vmatpush.bf16.xpose.msra.mxu0 0
  %2271 = vmatpush.bf16.xpose.msra.mxu0 0
  %2272 = vmatpush.bf16.xpose.msra.mxu0 0
  %2273 = vmatpush.bf16.xpose.msra.mxu0 %v2264
  %2274 = vmatmul.bf16.gmra.mxu0 %v2261
  %v2275 = vpop.f32.mrf.mxu0
  %v2276 = vadd.f32 0.0, %v2275
  %v2277 = vpop.f32.mrf.mxu0
  %2278 = vdwg.mxu0
  %2279 = vrot.lane.b32.xlu0 %v486, 112
  %v2280 = vpop.permute.xlu0 %2279
  %2281 = vrot.lane.b32.xlu0 %v486, 80
  %v2282 = vpop.permute.xlu0 %2281
  %v2284 = vsel %vm152, %v2280, 0
  %v2287 = vsel %vm152, %v2282, 0
  %2289 = vmatpush.bf16.xpose.msra.mxu0 0
  %2290 = vmatpush.bf16.xpose.msra.mxu0 0
  %2291 = vmatpush.bf16.xpose.msra.mxu0 0
  %2292 = vmatpush.bf16.xpose.msra.mxu0 0
  %2293 = vmatpush.bf16.xpose.msra.mxu0 0
  %2294 = vmatpush.bf16.xpose.msra.mxu0 0
  %2295 = vmatpush.bf16.xpose.msra.mxu0 0
  %2296 = vmatpush.bf16.xpose.msra.mxu0 %v2287
  %2297 = vmatmul.bf16.gmra.mxu0 %v2284
  %v2298 = vpop.f32.mrf.mxu0
  %v2299 = vadd.f32 0.0, %v2298
  %v2300 = vpop.f32.mrf.mxu0
  %2301 = vdwg.mxu0
  %2302 = vrot.lane.b32.xlu0 %v510, 112
  %v2303 = vpop.permute.xlu0 %2302
  %2304 = vrot.lane.b32.xlu0 %v510, 80
  %v2305 = vpop.permute.xlu0 %2304
  %v2307 = vsel %vm152, %v2303, 0
  %v2310 = vsel %vm152, %v2305, 0
  %2312 = vmatpush.bf16.xpose.msra.mxu0 0
  %2313 = vmatpush.bf16.xpose.msra.mxu0 0
  %2314 = vmatpush.bf16.xpose.msra.mxu0 0
  %2315 = vmatpush.bf16.xpose.msra.mxu0 0
  %2316 = vmatpush.bf16.xpose.msra.mxu0 0
  %2317 = vmatpush.bf16.xpose.msra.mxu0 0
  %2318 = vmatpush.bf16.xpose.msra.mxu0 0
  %2319 = vmatpush.bf16.xpose.msra.mxu0 %v2310
  %2320 = vmatmul.bf16.gmra.mxu0 %v2307
  %v2321 = vpop.f32.mrf.mxu0
  %v2322 = vadd.f32 0.0, %v2321
  %v2323 = vpop.f32.mrf.mxu0
  %2324 = vdwg.mxu0
  %v2325 = vsel %vm152, %v1977, -inf
  %2326 = vmax.xlane.f32.xlu0 %v2325
  %v2327 = vpop.xlane.xlu0 %2326
  %v2328 = vsel %vm152, %v2000, -inf
  %2329 = vmax.xlane.f32.xlu0 %v2328
  %v2330 = vpop.xlane.xlu0 %2329
  %v2331 = vsel %vm152, %v2023, -inf
  %2332 = vmax.xlane.f32.xlu0 %v2331
  %v2333 = vpop.xlane.xlu0 %2332
  %v2334 = vsel %vm152, %v2046, -inf
  %2335 = vmax.xlane.f32.xlu0 %v2334
  %v2336 = vpop.xlane.xlu0 %2335
  %v2337 = vsel %vm152, %v2069, -inf
  %2338 = vmax.xlane.f32.xlu0 %v2337
  %v2339 = vpop.xlane.xlu0 %2338
  %v2340 = vsel %vm152, %v2092, -inf
  %2341 = vmax.xlane.f32.xlu0 %v2340
  %v2342 = vpop.xlane.xlu0 %2341
  %v2343 = vsel %vm152, %v2115, -inf
  %2344 = vmax.xlane.f32.xlu0 %v2343
  %v2345 = vpop.xlane.xlu0 %2344
  %v2346 = vsel %vm152, %v2138, -inf
  %2347 = vmax.xlane.f32.xlu0 %v2346
  %v2348 = vpop.xlane.xlu0 %2347
  %v2349 = vsel %vm152, %v2161, -inf
  %2350 = vmax.xlane.f32.xlu0 %v2349
  %v2351 = vpop.xlane.xlu0 %2350
  %v2352 = vsel %vm152, %v2184, -inf
  %2353 = vmax.xlane.f32.xlu0 %v2352
  %v2354 = vpop.xlane.xlu0 %2353
  %v2355 = vsel %vm152, %v2207, -inf
  %2356 = vmax.xlane.f32.xlu0 %v2355
  %v2357 = vpop.xlane.xlu0 %2356
  %v2358 = vsel %vm152, %v2230, -inf
  %2359 = vmax.xlane.f32.xlu0 %v2358
  %v2360 = vpop.xlane.xlu0 %2359
  %v2361 = vsel %vm152, %v2253, -inf
  %2362 = vmax.xlane.f32.xlu0 %v2361
  %v2363 = vpop.xlane.xlu0 %2362
  %v2364 = vsel %vm152, %v2276, -inf
  %2365 = vmax.xlane.f32.xlu0 %v2364
  %v2366 = vpop.xlane.xlu0 %2365
  %v2367 = vsel %vm152, %v2299, -inf
  %2368 = vmax.xlane.f32.xlu0 %v2367
  %v2369 = vpop.xlane.xlu0 %2368
  %v2370 = vsel %vm152, %v2322, -inf
  %2371 = vmax.xlane.f32.xlu0 %v2370
  %v2372 = vpop.xlane.xlu0 %2371
  %v2373 = vsub.f32 %v1977, %v2327
  %v2374 = vsub.f32 %v2000, %v2330
  %v2375 = vsub.f32 %v2023, %v2333
  %v2376 = vsub.f32 %v2046, %v2336
  %v2377 = vsub.f32 %v2069, %v2339
  %v2378 = vsub.f32 %v2092, %v2342
  %v2379 = vsub.f32 %v2115, %v2345
  %v2380 = vsub.f32 %v2138, %v2348
  %v2381 = vsub.f32 %v2161, %v2351
  %v2382 = vsub.f32 %v2184, %v2354
  %v2383 = vsub.f32 %v2207, %v2357
  %v2384 = vsub.f32 %v2230, %v2360
  %v2385 = vsub.f32 %v2253, %v2363
  %v2386 = vsub.f32 %v2276, %v2366
  %v2387 = vsub.f32 %v2299, %v2369
  %v2388 = vsub.f32 %v2322, %v2372
  %v2389 = vmul.f32 %v2373, 1.442695
  %v2390 = vpow.pop %v2389
  %v2391 = vmul.f32 %v2374, 1.442695
  %v2392 = vpow.pop %v2391
  %v2393 = vmul.f32 %v2375, 1.442695
  %v2394 = vpow.pop %v2393
  %v2395 = vmul.f32 %v2376, 1.442695
  %v2396 = vpow.pop %v2395
  %v2397 = vmul.f32 %v2377, 1.442695
  %v2398 = vpow.pop %v2397
  %v2399 = vmul.f32 %v2378, 1.442695
  %v2400 = vpow.pop %v2399
  %v2401 = vmul.f32 %v2379, 1.442695
  %v2402 = vpow.pop %v2401
  %v2403 = vmul.f32 %v2380, 1.442695
  %v2404 = vpow.pop %v2403
  %v2405 = vmul.f32 %v2381, 1.442695
  %v2406 = vpow.pop %v2405
  %v2407 = vmul.f32 %v2382, 1.442695
  %v2408 = vpow.pop %v2407
  %v2409 = vmul.f32 %v2383, 1.442695
  %v2410 = vpow.pop %v2409
  %v2411 = vmul.f32 %v2384, 1.442695
  %v2412 = vpow.pop %v2411
  %v2413 = vmul.f32 %v2385, 1.442695
  %v2414 = vpow.pop %v2413
  %v2415 = vmul.f32 %v2386, 1.442695
  %v2416 = vpow.pop %v2415
  %v2417 = vmul.f32 %v2387, 1.442695
  %v2418 = vpow.pop %v2417
  %v2419 = vmul.f32 %v2388, 1.442695
  %v2420 = vpow.pop %v2419
  %v2421 = vsel %vm152, %v2390, 0.0
  %2422 = vadd.xlane.f32.xlu0 %v2421
  %v2423 = vpop.xlane.xlu0 %2422
  %v2424 = vsel %vm152, %v2392, 0.0
  %2425 = vadd.xlane.f32.xlu0 %v2424
  %v2426 = vpop.xlane.xlu0 %2425
  %v2427 = vsel %vm152, %v2394, 0.0
  %2428 = vadd.xlane.f32.xlu0 %v2427
  %v2429 = vpop.xlane.xlu0 %2428
  %v2430 = vsel %vm152, %v2396, 0.0
  %2431 = vadd.xlane.f32.xlu0 %v2430
  %v2432 = vpop.xlane.xlu0 %2431
  %v2433 = vsel %vm152, %v2398, 0.0
  %2434 = vadd.xlane.f32.xlu0 %v2433
  %v2435 = vpop.xlane.xlu0 %2434
  %v2436 = vsel %vm152, %v2400, 0.0
  %2437 = vadd.xlane.f32.xlu0 %v2436
  %v2438 = vpop.xlane.xlu0 %2437
  %v2439 = vsel %vm152, %v2402, 0.0
  %2440 = vadd.xlane.f32.xlu0 %v2439
  %v2441 = vpop.xlane.xlu0 %2440
  %v2442 = vsel %vm152, %v2404, 0.0
  %2443 = vadd.xlane.f32.xlu0 %v2442
  %v2444 = vpop.xlane.xlu0 %2443
  %v2445 = vsel %vm152, %v2406, 0.0
  %2446 = vadd.xlane.f32.xlu0 %v2445
  %v2447 = vpop.xlane.xlu0 %2446
  %v2448 = vsel %vm152, %v2408, 0.0
  %2449 = vadd.xlane.f32.xlu0 %v2448
  %v2450 = vpop.xlane.xlu0 %2449
  %v2451 = vsel %vm152, %v2410, 0.0
  %2452 = vadd.xlane.f32.xlu0 %v2451
  %v2453 = vpop.xlane.xlu0 %2452
  %v2454 = vsel %vm152, %v2412, 0.0
  %2455 = vadd.xlane.f32.xlu0 %v2454
  %v2456 = vpop.xlane.xlu0 %2455
  %v2457 = vsel %vm152, %v2414, 0.0
  %2458 = vadd.xlane.f32.xlu0 %v2457
  %v2459 = vpop.xlane.xlu0 %2458
  %v2460 = vsel %vm152, %v2416, 0.0
  %2461 = vadd.xlane.f32.xlu0 %v2460
  %v2462 = vpop.xlane.xlu0 %2461
  %v2463 = vsel %vm152, %v2418, 0.0
  %2464 = vadd.xlane.f32.xlu0 %v2463
  %v2465 = vpop.xlane.xlu0 %2464
  %v2466 = vsel %vm152, %v2420, 0.0
  %2467 = vadd.xlane.f32.xlu0 %v2466
  %v2468 = vpop.xlane.xlu0 %2467
  %v2469 = vrcp.pop %v2423
  %v2470 = vrcp.pop %v2426
  %v2471 = vrcp.pop %v2429
  %v2472 = vrcp.pop %v2432
  %v2473 = vrcp.pop %v2435
  %v2474 = vrcp.pop %v2438
  %v2475 = vrcp.pop %v2441
  %v2476 = vrcp.pop %v2444
  %v2477 = vrcp.pop %v2447
  %v2478 = vrcp.pop %v2450
  %v2479 = vrcp.pop %v2453
  %v2480 = vrcp.pop %v2456
  %v2481 = vrcp.pop %v2459
  %v2482 = vrcp.pop %v2462
  %v2483 = vrcp.pop %v2465
  %v2484 = vrcp.pop %v2468
  %v2485 = vmul.f32 %v2390, %v2469
  %v2486 = vmul.f32 %v2392, %v2470
  %v2487 = vmul.f32 %v2394, %v2471
  %v2488 = vmul.f32 %v2396, %v2472
  %v2489 = vmul.f32 %v2398, %v2473
  %v2490 = vmul.f32 %v2400, %v2474
  %v2491 = vmul.f32 %v2402, %v2475
  %v2492 = vmul.f32 %v2404, %v2476
  %v2493 = vmul.f32 %v2406, %v2477
  %v2494 = vmul.f32 %v2408, %v2478
  %v2495 = vmul.f32 %v2410, %v2479
  %v2496 = vmul.f32 %v2412, %v2480
  %v2497 = vmul.f32 %v2414, %v2481
  %v2498 = vmul.f32 %v2416, %v2482
  %v2499 = vmul.f32 %v2418, %v2483
  %v2500 = vmul.f32 %v2420, %v2484
  %v2501 = vpack.c.bf16 %v2485, %v2485
  %v2502 = vpack.c.bf16 %v2486, %v2486
  %v2503 = vpack.c.bf16 %v2487, %v2487
  %v2504 = vpack.c.bf16 %v2488, %v2488
  %v2505 = vpack.c.bf16 %v2489, %v2489
  %v2506 = vpack.c.bf16 %v2490, %v2490
  %v2507 = vpack.c.bf16 %v2491, %v2491
  %v2508 = vpack.c.bf16 %v2492, %v2492
  %v2509 = vpack.c.bf16 %v2493, %v2493
  %v2510 = vpack.c.bf16 %v2494, %v2494
  %v2511 = vpack.c.bf16 %v2495, %v2495
  %v2512 = vpack.c.bf16 %v2496, %v2496
  %v2513 = vpack.c.bf16 %v2497, %v2497
  %v2514 = vpack.c.bf16 %v2498, %v2498
  %v2515 = vpack.c.bf16 %v2499, %v2499
  %v2516 = vpack.c.bf16 %v2500, %v2500
  %2517 = vrot.lane.b32.xlu0 %v149, 48
  %v2518 = vpop.permute.xlu0 %2517
  %v2520 = vsel %vm152, %v2501, 0
  %v2523 = vsel %vm729, %v2518, 0
  %2525 = vmatpush.bf16.msra.mxu0 0
  %2526 = vmatpush.bf16.msra.mxu0 0
  %2527 = vmatpush.bf16.msra.mxu0 0
  %2528 = vmatpush.bf16.msra.mxu0 0
  %2529 = vmatpush.bf16.msra.mxu0 0
  %2530 = vmatpush.bf16.msra.mxu0 0
  %2531 = vmatpush.bf16.msra.mxu0 0
  %2532 = vmatpush.bf16.msra.mxu0 %v2523
  %2533 = vmatmul.bf16.gmra.mxu0 %v2520
  %v2534 = vpop.f32.mrf.mxu0
  %v2535 = vadd.f32 0.0, %v2534
  %v2536 = vpop.f32.mrf.mxu0
  %2537 = vdwg.mxu0
  %2538 = vrot.lane.b32.xlu0 %v174, 48
  %v2539 = vpop.permute.xlu0 %2538
  %v2541 = vsel %vm152, %v2502, 0
  %v2544 = vsel %vm729, %v2539, 0
  %2546 = vmatpush.bf16.msra.mxu0 0
  %2547 = vmatpush.bf16.msra.mxu0 0
  %2548 = vmatpush.bf16.msra.mxu0 0
  %2549 = vmatpush.bf16.msra.mxu0 0
  %2550 = vmatpush.bf16.msra.mxu0 0
  %2551 = vmatpush.bf16.msra.mxu0 0
  %2552 = vmatpush.bf16.msra.mxu0 0
  %2553 = vmatpush.bf16.msra.mxu0 %v2544
  %2554 = vmatmul.bf16.gmra.mxu0 %v2541
  %v2555 = vpop.f32.mrf.mxu0
  %v2556 = vadd.f32 0.0, %v2555
  %v2557 = vpop.f32.mrf.mxu0
  %2558 = vdwg.mxu0
  %2559 = vrot.lane.b32.xlu0 %v198, 48
  %v2560 = vpop.permute.xlu0 %2559
  %v2562 = vsel %vm152, %v2503, 0
  %v2565 = vsel %vm729, %v2560, 0
  %2567 = vmatpush.bf16.msra.mxu0 0
  %2568 = vmatpush.bf16.msra.mxu0 0
  %2569 = vmatpush.bf16.msra.mxu0 0
  %2570 = vmatpush.bf16.msra.mxu0 0
  %2571 = vmatpush.bf16.msra.mxu0 0
  %2572 = vmatpush.bf16.msra.mxu0 0
  %2573 = vmatpush.bf16.msra.mxu0 0
  %2574 = vmatpush.bf16.msra.mxu0 %v2565
  %2575 = vmatmul.bf16.gmra.mxu0 %v2562
  %v2576 = vpop.f32.mrf.mxu0
  %v2577 = vadd.f32 0.0, %v2576
  %v2578 = vpop.f32.mrf.mxu0
  %2579 = vdwg.mxu0
  %2580 = vrot.lane.b32.xlu0 %v222, 48
  %v2581 = vpop.permute.xlu0 %2580
  %v2583 = vsel %vm152, %v2504, 0
  %v2586 = vsel %vm729, %v2581, 0
  %2588 = vmatpush.bf16.msra.mxu0 0
  %2589 = vmatpush.bf16.msra.mxu0 0
  %2590 = vmatpush.bf16.msra.mxu0 0
  %2591 = vmatpush.bf16.msra.mxu0 0
  %2592 = vmatpush.bf16.msra.mxu0 0
  %2593 = vmatpush.bf16.msra.mxu0 0
  %2594 = vmatpush.bf16.msra.mxu0 0
  %2595 = vmatpush.bf16.msra.mxu0 %v2586
  %2596 = vmatmul.bf16.gmra.mxu0 %v2583
  %v2597 = vpop.f32.mrf.mxu0
  %v2598 = vadd.f32 0.0, %v2597
  %v2599 = vpop.f32.mrf.mxu0
  %2600 = vdwg.mxu0
  %2601 = vrot.lane.b32.xlu0 %v246, 48
  %v2602 = vpop.permute.xlu0 %2601
  %v2604 = vsel %vm152, %v2505, 0
  %v2607 = vsel %vm729, %v2602, 0
  %2609 = vmatpush.bf16.msra.mxu0 0
  %2610 = vmatpush.bf16.msra.mxu0 0
  %2611 = vmatpush.bf16.msra.mxu0 0
  %2612 = vmatpush.bf16.msra.mxu0 0
  %2613 = vmatpush.bf16.msra.mxu0 0
  %2614 = vmatpush.bf16.msra.mxu0 0
  %2615 = vmatpush.bf16.msra.mxu0 0
  %2616 = vmatpush.bf16.msra.mxu0 %v2607
  %2617 = vmatmul.bf16.gmra.mxu0 %v2604
  %v2618 = vpop.f32.mrf.mxu0
  %v2619 = vadd.f32 0.0, %v2618
  %v2620 = vpop.f32.mrf.mxu0
  %2621 = vdwg.mxu0
  %2622 = vrot.lane.b32.xlu0 %v270, 48
  %v2623 = vpop.permute.xlu0 %2622
  %v2625 = vsel %vm152, %v2506, 0
  %v2628 = vsel %vm729, %v2623, 0
  %2630 = vmatpush.bf16.msra.mxu0 0
  %2631 = vmatpush.bf16.msra.mxu0 0
  %2632 = vmatpush.bf16.msra.mxu0 0
  %2633 = vmatpush.bf16.msra.mxu0 0
  %2634 = vmatpush.bf16.msra.mxu0 0
  %2635 = vmatpush.bf16.msra.mxu0 0
  %2636 = vmatpush.bf16.msra.mxu0 0
  %2637 = vmatpush.bf16.msra.mxu0 %v2628
  %2638 = vmatmul.bf16.gmra.mxu0 %v2625
  %v2639 = vpop.f32.mrf.mxu0
  %v2640 = vadd.f32 0.0, %v2639
  %v2641 = vpop.f32.mrf.mxu0
  %2642 = vdwg.mxu0
  %2643 = vrot.lane.b32.xlu0 %v294, 48
  %v2644 = vpop.permute.xlu0 %2643
  %v2646 = vsel %vm152, %v2507, 0
  %v2649 = vsel %vm729, %v2644, 0
  %2651 = vmatpush.bf16.msra.mxu0 0
  %2652 = vmatpush.bf16.msra.mxu0 0
  %2653 = vmatpush.bf16.msra.mxu0 0
  %2654 = vmatpush.bf16.msra.mxu0 0
  %2655 = vmatpush.bf16.msra.mxu0 0
  %2656 = vmatpush.bf16.msra.mxu0 0
  %2657 = vmatpush.bf16.msra.mxu0 0
  %2658 = vmatpush.bf16.msra.mxu0 %v2649
  %2659 = vmatmul.bf16.gmra.mxu0 %v2646
  %v2660 = vpop.f32.mrf.mxu0
  %v2661 = vadd.f32 0.0, %v2660
  %v2662 = vpop.f32.mrf.mxu0
  %2663 = vdwg.mxu0
  %2664 = vrot.lane.b32.xlu0 %v318, 48
  %v2665 = vpop.permute.xlu0 %2664
  %v2667 = vsel %vm152, %v2508, 0
  %v2670 = vsel %vm729, %v2665, 0
  %2672 = vmatpush.bf16.msra.mxu0 0
  %2673 = vmatpush.bf16.msra.mxu0 0
  %2674 = vmatpush.bf16.msra.mxu0 0
  %2675 = vmatpush.bf16.msra.mxu0 0
  %2676 = vmatpush.bf16.msra.mxu0 0
  %2677 = vmatpush.bf16.msra.mxu0 0
  %2678 = vmatpush.bf16.msra.mxu0 0
  %2679 = vmatpush.bf16.msra.mxu0 %v2670
  %2680 = vmatmul.bf16.gmra.mxu0 %v2667
  %v2681 = vpop.f32.mrf.mxu0
  %v2682 = vadd.f32 0.0, %v2681
  %v2683 = vpop.f32.mrf.mxu0
  %2684 = vdwg.mxu0
  %2685 = vrot.lane.b32.xlu0 %v342, 48
  %v2686 = vpop.permute.xlu0 %2685
  %v2688 = vsel %vm152, %v2509, 0
  %v2691 = vsel %vm729, %v2686, 0
  %2693 = vmatpush.bf16.msra.mxu0 0
  %2694 = vmatpush.bf16.msra.mxu0 0
  %2695 = vmatpush.bf16.msra.mxu0 0
  %2696 = vmatpush.bf16.msra.mxu0 0
  %2697 = vmatpush.bf16.msra.mxu0 0
  %2698 = vmatpush.bf16.msra.mxu0 0
  %2699 = vmatpush.bf16.msra.mxu0 0
  %2700 = vmatpush.bf16.msra.mxu0 %v2691
  %2701 = vmatmul.bf16.gmra.mxu0 %v2688
  %v2702 = vpop.f32.mrf.mxu0
  %v2703 = vadd.f32 0.0, %v2702
  %v2704 = vpop.f32.mrf.mxu0
  %2705 = vdwg.mxu0
  %2706 = vrot.lane.b32.xlu0 %v366, 48
  %v2707 = vpop.permute.xlu0 %2706
  %v2709 = vsel %vm152, %v2510, 0
  %v2712 = vsel %vm729, %v2707, 0
  %2714 = vmatpush.bf16.msra.mxu0 0
  %2715 = vmatpush.bf16.msra.mxu0 0
  %2716 = vmatpush.bf16.msra.mxu0 0
  %2717 = vmatpush.bf16.msra.mxu0 0
  %2718 = vmatpush.bf16.msra.mxu0 0
  %2719 = vmatpush.bf16.msra.mxu0 0
  %2720 = vmatpush.bf16.msra.mxu0 0
  %2721 = vmatpush.bf16.msra.mxu0 %v2712
  %2722 = vmatmul.bf16.gmra.mxu0 %v2709
  %v2723 = vpop.f32.mrf.mxu0
  %v2724 = vadd.f32 0.0, %v2723
  %v2725 = vpop.f32.mrf.mxu0
  %2726 = vdwg.mxu0
  %2727 = vrot.lane.b32.xlu0 %v390, 48
  %v2728 = vpop.permute.xlu0 %2727
  %v2730 = vsel %vm152, %v2511, 0
  %v2733 = vsel %vm729, %v2728, 0
  %2735 = vmatpush.bf16.msra.mxu0 0
  %2736 = vmatpush.bf16.msra.mxu0 0
  %2737 = vmatpush.bf16.msra.mxu0 0
  %2738 = vmatpush.bf16.msra.mxu0 0
  %2739 = vmatpush.bf16.msra.mxu0 0
  %2740 = vmatpush.bf16.msra.mxu0 0
  %2741 = vmatpush.bf16.msra.mxu0 0
  %2742 = vmatpush.bf16.msra.mxu0 %v2733
  %2743 = vmatmul.bf16.gmra.mxu0 %v2730
  %v2744 = vpop.f32.mrf.mxu0
  %v2745 = vadd.f32 0.0, %v2744
  %v2746 = vpop.f32.mrf.mxu0
  %2747 = vdwg.mxu0
  %2748 = vrot.lane.b32.xlu0 %v414, 48
  %v2749 = vpop.permute.xlu0 %2748
  %v2751 = vsel %vm152, %v2512, 0
  %v2754 = vsel %vm729, %v2749, 0
  %2756 = vmatpush.bf16.msra.mxu0 0
  %2757 = vmatpush.bf16.msra.mxu0 0
  %2758 = vmatpush.bf16.msra.mxu0 0
  %2759 = vmatpush.bf16.msra.mxu0 0
  %2760 = vmatpush.bf16.msra.mxu0 0
  %2761 = vmatpush.bf16.msra.mxu0 0
  %2762 = vmatpush.bf16.msra.mxu0 0
  %2763 = vmatpush.bf16.msra.mxu0 %v2754
  %2764 = vmatmul.bf16.gmra.mxu0 %v2751
  %v2765 = vpop.f32.mrf.mxu0
  %v2766 = vadd.f32 0.0, %v2765
  %v2767 = vpop.f32.mrf.mxu0
  %2768 = vdwg.mxu0
  %2769 = vrot.lane.b32.xlu0 %v438, 48
  %v2770 = vpop.permute.xlu0 %2769
  %v2772 = vsel %vm152, %v2513, 0
  %v2775 = vsel %vm729, %v2770, 0
  %2777 = vmatpush.bf16.msra.mxu0 0
  %2778 = vmatpush.bf16.msra.mxu0 0
  %2779 = vmatpush.bf16.msra.mxu0 0
  %2780 = vmatpush.bf16.msra.mxu0 0
  %2781 = vmatpush.bf16.msra.mxu0 0
  %2782 = vmatpush.bf16.msra.mxu0 0
  %2783 = vmatpush.bf16.msra.mxu0 0
  %2784 = vmatpush.bf16.msra.mxu0 %v2775
  %2785 = vmatmul.bf16.gmra.mxu0 %v2772
  %v2786 = vpop.f32.mrf.mxu0
  %v2787 = vadd.f32 0.0, %v2786
  %v2788 = vpop.f32.mrf.mxu0
  %2789 = vdwg.mxu0
  %2790 = vrot.lane.b32.xlu0 %v462, 48
  %v2791 = vpop.permute.xlu0 %2790
  %v2793 = vsel %vm152, %v2514, 0
  %v2796 = vsel %vm729, %v2791, 0
  %2798 = vmatpush.bf16.msra.mxu0 0
  %2799 = vmatpush.bf16.msra.mxu0 0
  %2800 = vmatpush.bf16.msra.mxu0 0
  %2801 = vmatpush.bf16.msra.mxu0 0
  %2802 = vmatpush.bf16.msra.mxu0 0
  %2803 = vmatpush.bf16.msra.mxu0 0
  %2804 = vmatpush.bf16.msra.mxu0 0
  %2805 = vmatpush.bf16.msra.mxu0 %v2796
  %2806 = vmatmul.bf16.gmra.mxu0 %v2793
  %v2807 = vpop.f32.mrf.mxu0
  %v2808 = vadd.f32 0.0, %v2807
  %v2809 = vpop.f32.mrf.mxu0
  %2810 = vdwg.mxu0
  %2811 = vrot.lane.b32.xlu0 %v486, 48
  %v2812 = vpop.permute.xlu0 %2811
  %v2814 = vsel %vm152, %v2515, 0
  %v2817 = vsel %vm729, %v2812, 0
  %2819 = vmatpush.bf16.msra.mxu0 0
  %2820 = vmatpush.bf16.msra.mxu0 0
  %2821 = vmatpush.bf16.msra.mxu0 0
  %2822 = vmatpush.bf16.msra.mxu0 0
  %2823 = vmatpush.bf16.msra.mxu0 0
  %2824 = vmatpush.bf16.msra.mxu0 0
  %2825 = vmatpush.bf16.msra.mxu0 0
  %2826 = vmatpush.bf16.msra.mxu0 %v2817
  %2827 = vmatmul.bf16.gmra.mxu0 %v2814
  %v2828 = vpop.f32.mrf.mxu0
  %v2829 = vadd.f32 0.0, %v2828
  %v2830 = vpop.f32.mrf.mxu0
  %2831 = vdwg.mxu0
  %2832 = vrot.lane.b32.xlu0 %v510, 48
  %v2833 = vpop.permute.xlu0 %2832
  %v2835 = vsel %vm152, %v2516, 0
  %v2838 = vsel %vm729, %v2833, 0
  %2840 = vmatpush.bf16.msra.mxu0 0
  %2841 = vmatpush.bf16.msra.mxu0 0
  %2842 = vmatpush.bf16.msra.mxu0 0
  %2843 = vmatpush.bf16.msra.mxu0 0
  %2844 = vmatpush.bf16.msra.mxu0 0
  %2845 = vmatpush.bf16.msra.mxu0 0
  %2846 = vmatpush.bf16.msra.mxu0 0
  %2847 = vmatpush.bf16.msra.mxu0 %v2838
  %2848 = vmatmul.bf16.gmra.mxu0 %v2835
  %v2849 = vpop.f32.mrf.mxu0
  %v2850 = vadd.f32 0.0, %v2849
  %v2851 = vpop.f32.mrf.mxu0
  %2852 = vdwg.mxu0
  %2853 = vrot.lane.b32.xlu0 %v149, 104
  %v2854 = vpop.permute.xlu0 %2853
  %2855 = vrot.lane.b32.xlu0 %v149, 72
  %v2856 = vpop.permute.xlu0 %2855
  %v2858 = vsel %vm152, %v2854, 0
  %v2861 = vsel %vm152, %v2856, 0
  %2863 = vmatpush.bf16.xpose.msra.mxu0 0
  %2864 = vmatpush.bf16.xpose.msra.mxu0 0
  %2865 = vmatpush.bf16.xpose.msra.mxu0 0
  %2866 = vmatpush.bf16.xpose.msra.mxu0 0
  %2867 = vmatpush.bf16.xpose.msra.mxu0 0
  %2868 = vmatpush.bf16.xpose.msra.mxu0 0
  %2869 = vmatpush.bf16.xpose.msra.mxu0 0
  %2870 = vmatpush.bf16.xpose.msra.mxu0 %v2861
  %2871 = vmatmul.bf16.gmra.mxu0 %v2858
  %v2872 = vpop.f32.mrf.mxu0
  %v2873 = vadd.f32 0.0, %v2872
  %v2874 = vpop.f32.mrf.mxu0
  %2875 = vdwg.mxu0
  %2876 = vrot.lane.b32.xlu0 %v174, 104
  %v2877 = vpop.permute.xlu0 %2876
  %2878 = vrot.lane.b32.xlu0 %v174, 72
  %v2879 = vpop.permute.xlu0 %2878
  %v2881 = vsel %vm152, %v2877, 0
  %v2884 = vsel %vm152, %v2879, 0
  %2886 = vmatpush.bf16.xpose.msra.mxu0 0
  %2887 = vmatpush.bf16.xpose.msra.mxu0 0
  %2888 = vmatpush.bf16.xpose.msra.mxu0 0
  %2889 = vmatpush.bf16.xpose.msra.mxu0 0
  %2890 = vmatpush.bf16.xpose.msra.mxu0 0
  %2891 = vmatpush.bf16.xpose.msra.mxu0 0
  %2892 = vmatpush.bf16.xpose.msra.mxu0 0
  %2893 = vmatpush.bf16.xpose.msra.mxu0 %v2884
  %2894 = vmatmul.bf16.gmra.mxu0 %v2881
  %v2895 = vpop.f32.mrf.mxu0
  %v2896 = vadd.f32 0.0, %v2895
  %v2897 = vpop.f32.mrf.mxu0
  %2898 = vdwg.mxu0
  %2899 = vrot.lane.b32.xlu0 %v198, 104
  %v2900 = vpop.permute.xlu0 %2899
  %2901 = vrot.lane.b32.xlu0 %v198, 72
  %v2902 = vpop.permute.xlu0 %2901
  %v2904 = vsel %vm152, %v2900, 0
  %v2907 = vsel %vm152, %v2902, 0
  %2909 = vmatpush.bf16.xpose.msra.mxu0 0
  %2910 = vmatpush.bf16.xpose.msra.mxu0 0
  %2911 = vmatpush.bf16.xpose.msra.mxu0 0
  %2912 = vmatpush.bf16.xpose.msra.mxu0 0
  %2913 = vmatpush.bf16.xpose.msra.mxu0 0
  %2914 = vmatpush.bf16.xpose.msra.mxu0 0
  %2915 = vmatpush.bf16.xpose.msra.mxu0 0
  %2916 = vmatpush.bf16.xpose.msra.mxu0 %v2907
  %2917 = vmatmul.bf16.gmra.mxu0 %v2904
  %v2918 = vpop.f32.mrf.mxu0
  %v2919 = vadd.f32 0.0, %v2918
  %v2920 = vpop.f32.mrf.mxu0
  %2921 = vdwg.mxu0
  %2922 = vrot.lane.b32.xlu0 %v222, 104
  %v2923 = vpop.permute.xlu0 %2922
  %2924 = vrot.lane.b32.xlu0 %v222, 72
  %v2925 = vpop.permute.xlu0 %2924
  %v2927 = vsel %vm152, %v2923, 0
  %v2930 = vsel %vm152, %v2925, 0
  %2932 = vmatpush.bf16.xpose.msra.mxu0 0
  %2933 = vmatpush.bf16.xpose.msra.mxu0 0
  %2934 = vmatpush.bf16.xpose.msra.mxu0 0
  %2935 = vmatpush.bf16.xpose.msra.mxu0 0
  %2936 = vmatpush.bf16.xpose.msra.mxu0 0
  %2937 = vmatpush.bf16.xpose.msra.mxu0 0
  %2938 = vmatpush.bf16.xpose.msra.mxu0 0
  %2939 = vmatpush.bf16.xpose.msra.mxu0 %v2930
  %2940 = vmatmul.bf16.gmra.mxu0 %v2927
  %v2941 = vpop.f32.mrf.mxu0
  %v2942 = vadd.f32 0.0, %v2941
  %v2943 = vpop.f32.mrf.mxu0
  %2944 = vdwg.mxu0
  %2945 = vrot.lane.b32.xlu0 %v246, 104
  %v2946 = vpop.permute.xlu0 %2945
  %2947 = vrot.lane.b32.xlu0 %v246, 72
  %v2948 = vpop.permute.xlu0 %2947
  %v2950 = vsel %vm152, %v2946, 0
  %v2953 = vsel %vm152, %v2948, 0
  %2955 = vmatpush.bf16.xpose.msra.mxu0 0
  %2956 = vmatpush.bf16.xpose.msra.mxu0 0
  %2957 = vmatpush.bf16.xpose.msra.mxu0 0
  %2958 = vmatpush.bf16.xpose.msra.mxu0 0
  %2959 = vmatpush.bf16.xpose.msra.mxu0 0
  %2960 = vmatpush.bf16.xpose.msra.mxu0 0
  %2961 = vmatpush.bf16.xpose.msra.mxu0 0
  %2962 = vmatpush.bf16.xpose.msra.mxu0 %v2953
  %2963 = vmatmul.bf16.gmra.mxu0 %v2950
  %v2964 = vpop.f32.mrf.mxu0
  %v2965 = vadd.f32 0.0, %v2964
  %v2966 = vpop.f32.mrf.mxu0
  %2967 = vdwg.mxu0
  %2968 = vrot.lane.b32.xlu0 %v270, 104
  %v2969 = vpop.permute.xlu0 %2968
  %2970 = vrot.lane.b32.xlu0 %v270, 72
  %v2971 = vpop.permute.xlu0 %2970
  %v2973 = vsel %vm152, %v2969, 0
  %v2976 = vsel %vm152, %v2971, 0
  %2978 = vmatpush.bf16.xpose.msra.mxu0 0
  %2979 = vmatpush.bf16.xpose.msra.mxu0 0
  %2980 = vmatpush.bf16.xpose.msra.mxu0 0
  %2981 = vmatpush.bf16.xpose.msra.mxu0 0
  %2982 = vmatpush.bf16.xpose.msra.mxu0 0
  %2983 = vmatpush.bf16.xpose.msra.mxu0 0
  %2984 = vmatpush.bf16.xpose.msra.mxu0 0
  %2985 = vmatpush.bf16.xpose.msra.mxu0 %v2976
  %2986 = vmatmul.bf16.gmra.mxu0 %v2973
  %v2987 = vpop.f32.mrf.mxu0
  %v2988 = vadd.f32 0.0, %v2987
  %v2989 = vpop.f32.mrf.mxu0
  %2990 = vdwg.mxu0
  %2991 = vrot.lane.b32.xlu0 %v294, 104
  %v2992 = vpop.permute.xlu0 %2991
  %2993 = vrot.lane.b32.xlu0 %v294, 72
  %v2994 = vpop.permute.xlu0 %2993
  %v2996 = vsel %vm152, %v2992, 0
  %v2999 = vsel %vm152, %v2994, 0
  %3001 = vmatpush.bf16.xpose.msra.mxu0 0
  %3002 = vmatpush.bf16.xpose.msra.mxu0 0
  %3003 = vmatpush.bf16.xpose.msra.mxu0 0
  %3004 = vmatpush.bf16.xpose.msra.mxu0 0
  %3005 = vmatpush.bf16.xpose.msra.mxu0 0
  %3006 = vmatpush.bf16.xpose.msra.mxu0 0
  %3007 = vmatpush.bf16.xpose.msra.mxu0 0
  %3008 = vmatpush.bf16.xpose.msra.mxu0 %v2999
  %3009 = vmatmul.bf16.gmra.mxu0 %v2996
  %v3010 = vpop.f32.mrf.mxu0
  %v3011 = vadd.f32 0.0, %v3010
  %v3012 = vpop.f32.mrf.mxu0
  %3013 = vdwg.mxu0
  %3014 = vrot.lane.b32.xlu0 %v318, 104
  %v3015 = vpop.permute.xlu0 %3014
  %3016 = vrot.lane.b32.xlu0 %v318, 72
  %v3017 = vpop.permute.xlu0 %3016
  %v3019 = vsel %vm152, %v3015, 0
  %v3022 = vsel %vm152, %v3017, 0
  %3024 = vmatpush.bf16.xpose.msra.mxu0 0
  %3025 = vmatpush.bf16.xpose.msra.mxu0 0
  %3026 = vmatpush.bf16.xpose.msra.mxu0 0
  %3027 = vmatpush.bf16.xpose.msra.mxu0 0
  %3028 = vmatpush.bf16.xpose.msra.mxu0 0
  %3029 = vmatpush.bf16.xpose.msra.mxu0 0
  %3030 = vmatpush.bf16.xpose.msra.mxu0 0
  %3031 = vmatpush.bf16.xpose.msra.mxu0 %v3022
  %3032 = vmatmul.bf16.gmra.mxu0 %v3019
  %v3033 = vpop.f32.mrf.mxu0
  %v3034 = vadd.f32 0.0, %v3033
  %v3035 = vpop.f32.mrf.mxu0
  %3036 = vdwg.mxu0
  %3037 = vrot.lane.b32.xlu0 %v342, 104
  %v3038 = vpop.permute.xlu0 %3037
  %3039 = vrot.lane.b32.xlu0 %v342, 72
  %v3040 = vpop.permute.xlu0 %3039
  %v3042 = vsel %vm152, %v3038, 0
  %v3045 = vsel %vm152, %v3040, 0
  %3047 = vmatpush.bf16.xpose.msra.mxu0 0
  %3048 = vmatpush.bf16.xpose.msra.mxu0 0
  %3049 = vmatpush.bf16.xpose.msra.mxu0 0
  %3050 = vmatpush.bf16.xpose.msra.mxu0 0
  %3051 = vmatpush.bf16.xpose.msra.mxu0 0
  %3052 = vmatpush.bf16.xpose.msra.mxu0 0
  %3053 = vmatpush.bf16.xpose.msra.mxu0 0
  %3054 = vmatpush.bf16.xpose.msra.mxu0 %v3045
  %3055 = vmatmul.bf16.gmra.mxu0 %v3042
  %v3056 = vpop.f32.mrf.mxu0
  %v3057 = vadd.f32 0.0, %v3056
  %v3058 = vpop.f32.mrf.mxu0
  %3059 = vdwg.mxu0
  %3060 = vrot.lane.b32.xlu0 %v366, 104
  %v3061 = vpop.permute.xlu0 %3060
  %3062 = vrot.lane.b32.xlu0 %v366, 72
  %v3063 = vpop.permute.xlu0 %3062
  %v3065 = vsel %vm152, %v3061, 0
  %v3068 = vsel %vm152, %v3063, 0
  %3070 = vmatpush.bf16.xpose.msra.mxu0 0
  %3071 = vmatpush.bf16.xpose.msra.mxu0 0
  %3072 = vmatpush.bf16.xpose.msra.mxu0 0
  %3073 = vmatpush.bf16.xpose.msra.mxu0 0
  %3074 = vmatpush.bf16.xpose.msra.mxu0 0
  %3075 = vmatpush.bf16.xpose.msra.mxu0 0
  %3076 = vmatpush.bf16.xpose.msra.mxu0 0
  %3077 = vmatpush.bf16.xpose.msra.mxu0 %v3068
  %3078 = vmatmul.bf16.gmra.mxu0 %v3065
  %v3079 = vpop.f32.mrf.mxu0
  %v3080 = vadd.f32 0.0, %v3079
  %v3081 = vpop.f32.mrf.mxu0
  %3082 = vdwg.mxu0
  %3083 = vrot.lane.b32.xlu0 %v390, 104
  %v3084 = vpop.permute.xlu0 %3083
  %3085 = vrot.lane.b32.xlu0 %v390, 72
  %v3086 = vpop.permute.xlu0 %3085
  %v3088 = vsel %vm152, %v3084, 0
  %v3091 = vsel %vm152, %v3086, 0
  %3093 = vmatpush.bf16.xpose.msra.mxu0 0
  %3094 = vmatpush.bf16.xpose.msra.mxu0 0
  %3095 = vmatpush.bf16.xpose.msra.mxu0 0
  %3096 = vmatpush.bf16.xpose.msra.mxu0 0
  %3097 = vmatpush.bf16.xpose.msra.mxu0 0
  %3098 = vmatpush.bf16.xpose.msra.mxu0 0
  %3099 = vmatpush.bf16.xpose.msra.mxu0 0
  %3100 = vmatpush.bf16.xpose.msra.mxu0 %v3091
  %3101 = vmatmul.bf16.gmra.mxu0 %v3088
  %v3102 = vpop.f32.mrf.mxu0
  %v3103 = vadd.f32 0.0, %v3102
  %v3104 = vpop.f32.mrf.mxu0
  %3105 = vdwg.mxu0
  %3106 = vrot.lane.b32.xlu0 %v414, 104
  %v3107 = vpop.permute.xlu0 %3106
  %3108 = vrot.lane.b32.xlu0 %v414, 72
  %v3109 = vpop.permute.xlu0 %3108
  %v3111 = vsel %vm152, %v3107, 0
  %v3114 = vsel %vm152, %v3109, 0
  %3116 = vmatpush.bf16.xpose.msra.mxu0 0
  %3117 = vmatpush.bf16.xpose.msra.mxu0 0
  %3118 = vmatpush.bf16.xpose.msra.mxu0 0
  %3119 = vmatpush.bf16.xpose.msra.mxu0 0
  %3120 = vmatpush.bf16.xpose.msra.mxu0 0
  %3121 = vmatpush.bf16.xpose.msra.mxu0 0
  %3122 = vmatpush.bf16.xpose.msra.mxu0 0
  %3123 = vmatpush.bf16.xpose.msra.mxu0 %v3114
  %3124 = vmatmul.bf16.gmra.mxu0 %v3111
  %v3125 = vpop.f32.mrf.mxu0
  %v3126 = vadd.f32 0.0, %v3125
  %v3127 = vpop.f32.mrf.mxu0
  %3128 = vdwg.mxu0
  %3129 = vrot.lane.b32.xlu0 %v438, 104
  %v3130 = vpop.permute.xlu0 %3129
  %3131 = vrot.lane.b32.xlu0 %v438, 72
  %v3132 = vpop.permute.xlu0 %3131
  %v3134 = vsel %vm152, %v3130, 0
  %v3137 = vsel %vm152, %v3132, 0
  %3139 = vmatpush.bf16.xpose.msra.mxu0 0
  %3140 = vmatpush.bf16.xpose.msra.mxu0 0
  %3141 = vmatpush.bf16.xpose.msra.mxu0 0
  %3142 = vmatpush.bf16.xpose.msra.mxu0 0
  %3143 = vmatpush.bf16.xpose.msra.mxu0 0
  %3144 = vmatpush.bf16.xpose.msra.mxu0 0
  %3145 = vmatpush.bf16.xpose.msra.mxu0 0
  %3146 = vmatpush.bf16.xpose.msra.mxu0 %v3137
  %3147 = vmatmul.bf16.gmra.mxu0 %v3134
  %v3148 = vpop.f32.mrf.mxu0
  %v3149 = vadd.f32 0.0, %v3148
  %v3150 = vpop.f32.mrf.mxu0
  %3151 = vdwg.mxu0
  %3152 = vrot.lane.b32.xlu0 %v462, 104
  %v3153 = vpop.permute.xlu0 %3152
  %3154 = vrot.lane.b32.xlu0 %v462, 72
  %v3155 = vpop.permute.xlu0 %3154
  %v3157 = vsel %vm152, %v3153, 0
  %v3160 = vsel %vm152, %v3155, 0
  %3162 = vmatpush.bf16.xpose.msra.mxu0 0
  %3163 = vmatpush.bf16.xpose.msra.mxu0 0
  %3164 = vmatpush.bf16.xpose.msra.mxu0 0
  %3165 = vmatpush.bf16.xpose.msra.mxu0 0
  %3166 = vmatpush.bf16.xpose.msra.mxu0 0
  %3167 = vmatpush.bf16.xpose.msra.mxu0 0
  %3168 = vmatpush.bf16.xpose.msra.mxu0 0
  %3169 = vmatpush.bf16.xpose.msra.mxu0 %v3160
  %3170 = vmatmul.bf16.gmra.mxu0 %v3157
  %v3171 = vpop.f32.mrf.mxu0
  %v3172 = vadd.f32 0.0, %v3171
  %v3173 = vpop.f32.mrf.mxu0
  %3174 = vdwg.mxu0
  %3175 = vrot.lane.b32.xlu0 %v486, 104
  %v3176 = vpop.permute.xlu0 %3175
  %3177 = vrot.lane.b32.xlu0 %v486, 72
  %v3178 = vpop.permute.xlu0 %3177
  %v3180 = vsel %vm152, %v3176, 0
  %v3183 = vsel %vm152, %v3178, 0
  %3185 = vmatpush.bf16.xpose.msra.mxu0 0
  %3186 = vmatpush.bf16.xpose.msra.mxu0 0
  %3187 = vmatpush.bf16.xpose.msra.mxu0 0
  %3188 = vmatpush.bf16.xpose.msra.mxu0 0
  %3189 = vmatpush.bf16.xpose.msra.mxu0 0
  %3190 = vmatpush.bf16.xpose.msra.mxu0 0
  %3191 = vmatpush.bf16.xpose.msra.mxu0 0
  %3192 = vmatpush.bf16.xpose.msra.mxu0 %v3183
  %3193 = vmatmul.bf16.gmra.mxu0 %v3180
  %v3194 = vpop.f32.mrf.mxu0
  %v3195 = vadd.f32 0.0, %v3194
  %v3196 = vpop.f32.mrf.mxu0
  %3197 = vdwg.mxu0
  %3198 = vrot.lane.b32.xlu0 %v510, 104
  %v3199 = vpop.permute.xlu0 %3198
  %3200 = vrot.lane.b32.xlu0 %v510, 72
  %v3201 = vpop.permute.xlu0 %3200
  %v3203 = vsel %vm152, %v3199, 0
  %v3206 = vsel %vm152, %v3201, 0
  %3208 = vmatpush.bf16.xpose.msra.mxu0 0
  %3209 = vmatpush.bf16.xpose.msra.mxu0 0
  %3210 = vmatpush.bf16.xpose.msra.mxu0 0
  %3211 = vmatpush.bf16.xpose.msra.mxu0 0
  %3212 = vmatpush.bf16.xpose.msra.mxu0 0
  %3213 = vmatpush.bf16.xpose.msra.mxu0 0
  %3214 = vmatpush.bf16.xpose.msra.mxu0 0
  %3215 = vmatpush.bf16.xpose.msra.mxu0 %v3206
  %3216 = vmatmul.bf16.gmra.mxu0 %v3203
  %v3217 = vpop.f32.mrf.mxu0
  %v3218 = vadd.f32 0.0, %v3217
  %v3219 = vpop.f32.mrf.mxu0
  %3220 = vdwg.mxu0
  %v3221 = vsel %vm152, %v2873, -inf
  %3222 = vmax.xlane.f32.xlu0 %v3221
  %v3223 = vpop.xlane.xlu0 %3222
  %v3224 = vsel %vm152, %v2896, -inf
  %3225 = vmax.xlane.f32.xlu0 %v3224
  %v3226 = vpop.xlane.xlu0 %3225
  %v3227 = vsel %vm152, %v2919, -inf
  %3228 = vmax.xlane.f32.xlu0 %v3227
  %v3229 = vpop.xlane.xlu0 %3228
  %v3230 = vsel %vm152, %v2942, -inf
  %3231 = vmax.xlane.f32.xlu0 %v3230
  %v3232 = vpop.xlane.xlu0 %3231
  %v3233 = vsel %vm152, %v2965, -inf
  %3234 = vmax.xlane.f32.xlu0 %v3233
  %v3235 = vpop.xlane.xlu0 %3234
  %v3236 = vsel %vm152, %v2988, -inf
  %3237 = vmax.xlane.f32.xlu0 %v3236
  %v3238 = vpop.xlane.xlu0 %3237
  %v3239 = vsel %vm152, %v3011, -inf
  %3240 = vmax.xlane.f32.xlu0 %v3239
  %v3241 = vpop.xlane.xlu0 %3240
  %v3242 = vsel %vm152, %v3034, -inf
  %3243 = vmax.xlane.f32.xlu0 %v3242
  %v3244 = vpop.xlane.xlu0 %3243
  %v3245 = vsel %vm152, %v3057, -inf
  %3246 = vmax.xlane.f32.xlu0 %v3245
  %v3247 = vpop.xlane.xlu0 %3246
  %v3248 = vsel %vm152, %v3080, -inf
  %3249 = vmax.xlane.f32.xlu0 %v3248
  %v3250 = vpop.xlane.xlu0 %3249
  %v3251 = vsel %vm152, %v3103, -inf
  %3252 = vmax.xlane.f32.xlu0 %v3251
  %v3253 = vpop.xlane.xlu0 %3252
  %v3254 = vsel %vm152, %v3126, -inf
  %3255 = vmax.xlane.f32.xlu0 %v3254
  %v3256 = vpop.xlane.xlu0 %3255
  %v3257 = vsel %vm152, %v3149, -inf
  %3258 = vmax.xlane.f32.xlu0 %v3257
  %v3259 = vpop.xlane.xlu0 %3258
  %v3260 = vsel %vm152, %v3172, -inf
  %3261 = vmax.xlane.f32.xlu0 %v3260
  %v3262 = vpop.xlane.xlu0 %3261
  %v3263 = vsel %vm152, %v3195, -inf
  %3264 = vmax.xlane.f32.xlu0 %v3263
  %v3265 = vpop.xlane.xlu0 %3264
  %v3266 = vsel %vm152, %v3218, -inf
  %3267 = vmax.xlane.f32.xlu0 %v3266
  %v3268 = vpop.xlane.xlu0 %3267
  %v3269 = vsub.f32 %v2873, %v3223
  %v3270 = vsub.f32 %v2896, %v3226
  %v3271 = vsub.f32 %v2919, %v3229
  %v3272 = vsub.f32 %v2942, %v3232
  %v3273 = vsub.f32 %v2965, %v3235
  %v3274 = vsub.f32 %v2988, %v3238
  %v3275 = vsub.f32 %v3011, %v3241
  %v3276 = vsub.f32 %v3034, %v3244
  %v3277 = vsub.f32 %v3057, %v3247
  %v3278 = vsub.f32 %v3080, %v3250
  %v3279 = vsub.f32 %v3103, %v3253
  %v3280 = vsub.f32 %v3126, %v3256
  %v3281 = vsub.f32 %v3149, %v3259
  %v3282 = vsub.f32 %v3172, %v3262
  %v3283 = vsub.f32 %v3195, %v3265
  %v3284 = vsub.f32 %v3218, %v3268
  %v3285 = vmul.f32 %v3269, 1.442695
  %v3286 = vpow.pop %v3285
  %v3287 = vmul.f32 %v3270, 1.442695
  %v3288 = vpow.pop %v3287
  %v3289 = vmul.f32 %v3271, 1.442695
  %v3290 = vpow.pop %v3289
  %v3291 = vmul.f32 %v3272, 1.442695
  %v3292 = vpow.pop %v3291
  %v3293 = vmul.f32 %v3273, 1.442695
  %v3294 = vpow.pop %v3293
  %v3295 = vmul.f32 %v3274, 1.442695
  %v3296 = vpow.pop %v3295
  %v3297 = vmul.f32 %v3275, 1.442695
  %v3298 = vpow.pop %v3297
  %v3299 = vmul.f32 %v3276, 1.442695
  %v3300 = vpow.pop %v3299
  %v3301 = vmul.f32 %v3277, 1.442695
  %v3302 = vpow.pop %v3301
  %v3303 = vmul.f32 %v3278, 1.442695
  %v3304 = vpow.pop %v3303
  %v3305 = vmul.f32 %v3279, 1.442695
  %v3306 = vpow.pop %v3305
  %v3307 = vmul.f32 %v3280, 1.442695
  %v3308 = vpow.pop %v3307
  %v3309 = vmul.f32 %v3281, 1.442695
  %v3310 = vpow.pop %v3309
  %v3311 = vmul.f32 %v3282, 1.442695
  %v3312 = vpow.pop %v3311
  %v3313 = vmul.f32 %v3283, 1.442695
  %v3314 = vpow.pop %v3313
  %v3315 = vmul.f32 %v3284, 1.442695
  %v3316 = vpow.pop %v3315
  %v3317 = vsel %vm152, %v3286, 0.0
  %3318 = vadd.xlane.f32.xlu0 %v3317
  %v3319 = vpop.xlane.xlu0 %3318
  %v3320 = vsel %vm152, %v3288, 0.0
  %3321 = vadd.xlane.f32.xlu0 %v3320
  %v3322 = vpop.xlane.xlu0 %3321
  %v3323 = vsel %vm152, %v3290, 0.0
  %3324 = vadd.xlane.f32.xlu0 %v3323
  %v3325 = vpop.xlane.xlu0 %3324
  %v3326 = vsel %vm152, %v3292, 0.0
  %3327 = vadd.xlane.f32.xlu0 %v3326
  %v3328 = vpop.xlane.xlu0 %3327
  %v3329 = vsel %vm152, %v3294, 0.0
  %3330 = vadd.xlane.f32.xlu0 %v3329
  %v3331 = vpop.xlane.xlu0 %3330
  %v3332 = vsel %vm152, %v3296, 0.0
  %3333 = vadd.xlane.f32.xlu0 %v3332
  %v3334 = vpop.xlane.xlu0 %3333
  %v3335 = vsel %vm152, %v3298, 0.0
  %3336 = vadd.xlane.f32.xlu0 %v3335
  %v3337 = vpop.xlane.xlu0 %3336
  %v3338 = vsel %vm152, %v3300, 0.0
  %3339 = vadd.xlane.f32.xlu0 %v3338
  %v3340 = vpop.xlane.xlu0 %3339
  %v3341 = vsel %vm152, %v3302, 0.0
  %3342 = vadd.xlane.f32.xlu0 %v3341
  %v3343 = vpop.xlane.xlu0 %3342
  %v3344 = vsel %vm152, %v3304, 0.0
  %3345 = vadd.xlane.f32.xlu0 %v3344
  %v3346 = vpop.xlane.xlu0 %3345
  %v3347 = vsel %vm152, %v3306, 0.0
  %3348 = vadd.xlane.f32.xlu0 %v3347
  %v3349 = vpop.xlane.xlu0 %3348
  %v3350 = vsel %vm152, %v3308, 0.0
  %3351 = vadd.xlane.f32.xlu0 %v3350
  %v3352 = vpop.xlane.xlu0 %3351
  %v3353 = vsel %vm152, %v3310, 0.0
  %3354 = vadd.xlane.f32.xlu0 %v3353
  %v3355 = vpop.xlane.xlu0 %3354
  %v3356 = vsel %vm152, %v3312, 0.0
  %3357 = vadd.xlane.f32.xlu0 %v3356
  %v3358 = vpop.xlane.xlu0 %3357
  %v3359 = vsel %vm152, %v3314, 0.0
  %3360 = vadd.xlane.f32.xlu0 %v3359
  %v3361 = vpop.xlane.xlu0 %3360
  %v3362 = vsel %vm152, %v3316, 0.0
  %3363 = vadd.xlane.f32.xlu0 %v3362
  %v3364 = vpop.xlane.xlu0 %3363
  %v3365 = vrcp.pop %v3319
  %v3366 = vrcp.pop %v3322
  %v3367 = vrcp.pop %v3325
  %v3368 = vrcp.pop %v3328
  %v3369 = vrcp.pop %v3331
  %v3370 = vrcp.pop %v3334
  %v3371 = vrcp.pop %v3337
  %v3372 = vrcp.pop %v3340
  %v3373 = vrcp.pop %v3343
  %v3374 = vrcp.pop %v3346
  %v3375 = vrcp.pop %v3349
  %v3376 = vrcp.pop %v3352
  %v3377 = vrcp.pop %v3355
  %v3378 = vrcp.pop %v3358
  %v3379 = vrcp.pop %v3361
  %v3380 = vrcp.pop %v3364
  %v3381 = vmul.f32 %v3286, %v3365
  %v3382 = vmul.f32 %v3288, %v3366
  %v3383 = vmul.f32 %v3290, %v3367
  %v3384 = vmul.f32 %v3292, %v3368
  %v3385 = vmul.f32 %v3294, %v3369
  %v3386 = vmul.f32 %v3296, %v3370
  %v3387 = vmul.f32 %v3298, %v3371
  %v3388 = vmul.f32 %v3300, %v3372
  %v3389 = vmul.f32 %v3302, %v3373
  %v3390 = vmul.f32 %v3304, %v3374
  %v3391 = vmul.f32 %v3306, %v3375
  %v3392 = vmul.f32 %v3308, %v3376
  %v3393 = vmul.f32 %v3310, %v3377
  %v3394 = vmul.f32 %v3312, %v3378
  %v3395 = vmul.f32 %v3314, %v3379
  %v3396 = vmul.f32 %v3316, %v3380
  %v3397 = vpack.c.bf16 %v3381, %v3381
  %v3398 = vpack.c.bf16 %v3382, %v3382
  %v3399 = vpack.c.bf16 %v3383, %v3383
  %v3400 = vpack.c.bf16 %v3384, %v3384
  %v3401 = vpack.c.bf16 %v3385, %v3385
  %v3402 = vpack.c.bf16 %v3386, %v3386
  %v3403 = vpack.c.bf16 %v3387, %v3387
  %v3404 = vpack.c.bf16 %v3388, %v3388
  %v3405 = vpack.c.bf16 %v3389, %v3389
  %v3406 = vpack.c.bf16 %v3390, %v3390
  %v3407 = vpack.c.bf16 %v3391, %v3391
  %v3408 = vpack.c.bf16 %v3392, %v3392
  %v3409 = vpack.c.bf16 %v3393, %v3393
  %v3410 = vpack.c.bf16 %v3394, %v3394
  %v3411 = vpack.c.bf16 %v3395, %v3395
  %v3412 = vpack.c.bf16 %v3396, %v3396
  %3413 = vrot.lane.b32.xlu0 %v149, 40
  %v3414 = vpop.permute.xlu0 %3413
  %v3416 = vsel %vm152, %v3397, 0
  %v3419 = vsel %vm729, %v3414, 0
  %3421 = vmatpush.bf16.msra.mxu0 0
  %3422 = vmatpush.bf16.msra.mxu0 0
  %3423 = vmatpush.bf16.msra.mxu0 0
  %3424 = vmatpush.bf16.msra.mxu0 0
  %3425 = vmatpush.bf16.msra.mxu0 0
  %3426 = vmatpush.bf16.msra.mxu0 0
  %3427 = vmatpush.bf16.msra.mxu0 0
  %3428 = vmatpush.bf16.msra.mxu0 %v3419
  %3429 = vmatmul.bf16.gmra.mxu0 %v3416
  %v3430 = vpop.f32.mrf.mxu0
  %v3431 = vadd.f32 0.0, %v3430
  %v3432 = vpop.f32.mrf.mxu0
  %3433 = vdwg.mxu0
  %3434 = vrot.lane.b32.xlu0 %v174, 40
  %v3435 = vpop.permute.xlu0 %3434
  %v3437 = vsel %vm152, %v3398, 0
  %v3440 = vsel %vm729, %v3435, 0
  %3442 = vmatpush.bf16.msra.mxu0 0
  %3443 = vmatpush.bf16.msra.mxu0 0
  %3444 = vmatpush.bf16.msra.mxu0 0
  %3445 = vmatpush.bf16.msra.mxu0 0
  %3446 = vmatpush.bf16.msra.mxu0 0
  %3447 = vmatpush.bf16.msra.mxu0 0
  %3448 = vmatpush.bf16.msra.mxu0 0
  %3449 = vmatpush.bf16.msra.mxu0 %v3440
  %3450 = vmatmul.bf16.gmra.mxu0 %v3437
  %v3451 = vpop.f32.mrf.mxu0
  %v3452 = vadd.f32 0.0, %v3451
  %v3453 = vpop.f32.mrf.mxu0
  %3454 = vdwg.mxu0
  %3455 = vrot.lane.b32.xlu0 %v198, 40
  %v3456 = vpop.permute.xlu0 %3455
  %v3458 = vsel %vm152, %v3399, 0
  %v3461 = vsel %vm729, %v3456, 0
  %3463 = vmatpush.bf16.msra.mxu0 0
  %3464 = vmatpush.bf16.msra.mxu0 0
  %3465 = vmatpush.bf16.msra.mxu0 0
  %3466 = vmatpush.bf16.msra.mxu0 0
  %3467 = vmatpush.bf16.msra.mxu0 0
  %3468 = vmatpush.bf16.msra.mxu0 0
  %3469 = vmatpush.bf16.msra.mxu0 0
  %3470 = vmatpush.bf16.msra.mxu0 %v3461
  %3471 = vmatmul.bf16.gmra.mxu0 %v3458
  %v3472 = vpop.f32.mrf.mxu0
  %v3473 = vadd.f32 0.0, %v3472
  %v3474 = vpop.f32.mrf.mxu0
  %3475 = vdwg.mxu0
  %3476 = vrot.lane.b32.xlu0 %v222, 40
  %v3477 = vpop.permute.xlu0 %3476
  %v3479 = vsel %vm152, %v3400, 0
  %v3482 = vsel %vm729, %v3477, 0
  %3484 = vmatpush.bf16.msra.mxu0 0
  %3485 = vmatpush.bf16.msra.mxu0 0
  %3486 = vmatpush.bf16.msra.mxu0 0
  %3487 = vmatpush.bf16.msra.mxu0 0
  %3488 = vmatpush.bf16.msra.mxu0 0
  %3489 = vmatpush.bf16.msra.mxu0 0
  %3490 = vmatpush.bf16.msra.mxu0 0
  %3491 = vmatpush.bf16.msra.mxu0 %v3482
  %3492 = vmatmul.bf16.gmra.mxu0 %v3479
  %v3493 = vpop.f32.mrf.mxu0
  %v3494 = vadd.f32 0.0, %v3493
  %v3495 = vpop.f32.mrf.mxu0
  %3496 = vdwg.mxu0
  %3497 = vrot.lane.b32.xlu0 %v246, 40
  %v3498 = vpop.permute.xlu0 %3497
  %v3500 = vsel %vm152, %v3401, 0
  %v3503 = vsel %vm729, %v3498, 0
  %3505 = vmatpush.bf16.msra.mxu0 0
  %3506 = vmatpush.bf16.msra.mxu0 0
  %3507 = vmatpush.bf16.msra.mxu0 0
  %3508 = vmatpush.bf16.msra.mxu0 0
  %3509 = vmatpush.bf16.msra.mxu0 0
  %3510 = vmatpush.bf16.msra.mxu0 0
  %3511 = vmatpush.bf16.msra.mxu0 0
  %3512 = vmatpush.bf16.msra.mxu0 %v3503
  %3513 = vmatmul.bf16.gmra.mxu0 %v3500
  %v3514 = vpop.f32.mrf.mxu0
  %v3515 = vadd.f32 0.0, %v3514
  %v3516 = vpop.f32.mrf.mxu0
  %3517 = vdwg.mxu0
  %3518 = vrot.lane.b32.xlu0 %v270, 40
  %v3519 = vpop.permute.xlu0 %3518
  %v3521 = vsel %vm152, %v3402, 0
  %v3524 = vsel %vm729, %v3519, 0
  %3526 = vmatpush.bf16.msra.mxu0 0
  %3527 = vmatpush.bf16.msra.mxu0 0
  %3528 = vmatpush.bf16.msra.mxu0 0
  %3529 = vmatpush.bf16.msra.mxu0 0
  %3530 = vmatpush.bf16.msra.mxu0 0
  %3531 = vmatpush.bf16.msra.mxu0 0
  %3532 = vmatpush.bf16.msra.mxu0 0
  %3533 = vmatpush.bf16.msra.mxu0 %v3524
  %3534 = vmatmul.bf16.gmra.mxu0 %v3521
  %v3535 = vpop.f32.mrf.mxu0
  %v3536 = vadd.f32 0.0, %v3535
  %v3537 = vpop.f32.mrf.mxu0
  %3538 = vdwg.mxu0
  %3539 = vrot.lane.b32.xlu0 %v294, 40
  %v3540 = vpop.permute.xlu0 %3539
  %v3542 = vsel %vm152, %v3403, 0
  %v3545 = vsel %vm729, %v3540, 0
  %3547 = vmatpush.bf16.msra.mxu0 0
  %3548 = vmatpush.bf16.msra.mxu0 0
  %3549 = vmatpush.bf16.msra.mxu0 0
  %3550 = vmatpush.bf16.msra.mxu0 0
  %3551 = vmatpush.bf16.msra.mxu0 0
  %3552 = vmatpush.bf16.msra.mxu0 0
  %3553 = vmatpush.bf16.msra.mxu0 0
  %3554 = vmatpush.bf16.msra.mxu0 %v3545
  %3555 = vmatmul.bf16.gmra.mxu0 %v3542
  %v3556 = vpop.f32.mrf.mxu0
  %v3557 = vadd.f32 0.0, %v3556
  %v3558 = vpop.f32.mrf.mxu0
  %3559 = vdwg.mxu0
  %3560 = vrot.lane.b32.xlu0 %v318, 40
  %v3561 = vpop.permute.xlu0 %3560
  %v3563 = vsel %vm152, %v3404, 0
  %v3566 = vsel %vm729, %v3561, 0
  %3568 = vmatpush.bf16.msra.mxu0 0
  %3569 = vmatpush.bf16.msra.mxu0 0
  %3570 = vmatpush.bf16.msra.mxu0 0
  %3571 = vmatpush.bf16.msra.mxu0 0
  %3572 = vmatpush.bf16.msra.mxu0 0
  %3573 = vmatpush.bf16.msra.mxu0 0
  %3574 = vmatpush.bf16.msra.mxu0 0
  %3575 = vmatpush.bf16.msra.mxu0 %v3566
  %3576 = vmatmul.bf16.gmra.mxu0 %v3563
  %v3577 = vpop.f32.mrf.mxu0
  %v3578 = vadd.f32 0.0, %v3577
  %v3579 = vpop.f32.mrf.mxu0
  %3580 = vdwg.mxu0
  %3581 = vrot.lane.b32.xlu0 %v342, 40
  %v3582 = vpop.permute.xlu0 %3581
  %v3584 = vsel %vm152, %v3405, 0
  %v3587 = vsel %vm729, %v3582, 0
  %3589 = vmatpush.bf16.msra.mxu0 0
  %3590 = vmatpush.bf16.msra.mxu0 0
  %3591 = vmatpush.bf16.msra.mxu0 0
  %3592 = vmatpush.bf16.msra.mxu0 0
  %3593 = vmatpush.bf16.msra.mxu0 0
  %3594 = vmatpush.bf16.msra.mxu0 0
  %3595 = vmatpush.bf16.msra.mxu0 0
  %3596 = vmatpush.bf16.msra.mxu0 %v3587
  %3597 = vmatmul.bf16.gmra.mxu0 %v3584
  %v3598 = vpop.f32.mrf.mxu0
  %v3599 = vadd.f32 0.0, %v3598
  %v3600 = vpop.f32.mrf.mxu0
  %3601 = vdwg.mxu0
  %3602 = vrot.lane.b32.xlu0 %v366, 40
  %v3603 = vpop.permute.xlu0 %3602
  %v3605 = vsel %vm152, %v3406, 0
  %v3608 = vsel %vm729, %v3603, 0
  %3610 = vmatpush.bf16.msra.mxu0 0
  %3611 = vmatpush.bf16.msra.mxu0 0
  %3612 = vmatpush.bf16.msra.mxu0 0
  %3613 = vmatpush.bf16.msra.mxu0 0
  %3614 = vmatpush.bf16.msra.mxu0 0
  %3615 = vmatpush.bf16.msra.mxu0 0
  %3616 = vmatpush.bf16.msra.mxu0 0
  %3617 = vmatpush.bf16.msra.mxu0 %v3608
  %3618 = vmatmul.bf16.gmra.mxu0 %v3605
  %v3619 = vpop.f32.mrf.mxu0
  %v3620 = vadd.f32 0.0, %v3619
  %v3621 = vpop.f32.mrf.mxu0
  %3622 = vdwg.mxu0
  %3623 = vrot.lane.b32.xlu0 %v390, 40
  %v3624 = vpop.permute.xlu0 %3623
  %v3626 = vsel %vm152, %v3407, 0
  %v3629 = vsel %vm729, %v3624, 0
  %3631 = vmatpush.bf16.msra.mxu0 0
  %3632 = vmatpush.bf16.msra.mxu0 0
  %3633 = vmatpush.bf16.msra.mxu0 0
  %3634 = vmatpush.bf16.msra.mxu0 0
  %3635 = vmatpush.bf16.msra.mxu0 0
  %3636 = vmatpush.bf16.msra.mxu0 0
  %3637 = vmatpush.bf16.msra.mxu0 0
  %3638 = vmatpush.bf16.msra.mxu0 %v3629
  %3639 = vmatmul.bf16.gmra.mxu0 %v3626
  %v3640 = vpop.f32.mrf.mxu0
  %v3641 = vadd.f32 0.0, %v3640
  %v3642 = vpop.f32.mrf.mxu0
  %3643 = vdwg.mxu0
  %3644 = vrot.lane.b32.xlu0 %v414, 40
  %v3645 = vpop.permute.xlu0 %3644
  %v3647 = vsel %vm152, %v3408, 0
  %v3650 = vsel %vm729, %v3645, 0
  %3652 = vmatpush.bf16.msra.mxu0 0
  %3653 = vmatpush.bf16.msra.mxu0 0
  %3654 = vmatpush.bf16.msra.mxu0 0
  %3655 = vmatpush.bf16.msra.mxu0 0
  %3656 = vmatpush.bf16.msra.mxu0 0
  %3657 = vmatpush.bf16.msra.mxu0 0
  %3658 = vmatpush.bf16.msra.mxu0 0
  %3659 = vmatpush.bf16.msra.mxu0 %v3650
  %3660 = vmatmul.bf16.gmra.mxu0 %v3647
  %v3661 = vpop.f32.mrf.mxu0
  %v3662 = vadd.f32 0.0, %v3661
  %v3663 = vpop.f32.mrf.mxu0
  %3664 = vdwg.mxu0
  %3665 = vrot.lane.b32.xlu0 %v438, 40
  %v3666 = vpop.permute.xlu0 %3665
  %v3668 = vsel %vm152, %v3409, 0
  %v3671 = vsel %vm729, %v3666, 0
  %3673 = vmatpush.bf16.msra.mxu0 0
  %3674 = vmatpush.bf16.msra.mxu0 0
  %3675 = vmatpush.bf16.msra.mxu0 0
  %3676 = vmatpush.bf16.msra.mxu0 0
  %3677 = vmatpush.bf16.msra.mxu0 0
  %3678 = vmatpush.bf16.msra.mxu0 0
  %3679 = vmatpush.bf16.msra.mxu0 0
  %3680 = vmatpush.bf16.msra.mxu0 %v3671
  %3681 = vmatmul.bf16.gmra.mxu0 %v3668
  %v3682 = vpop.f32.mrf.mxu0
  %v3683 = vadd.f32 0.0, %v3682
  %v3684 = vpop.f32.mrf.mxu0
  %3685 = vdwg.mxu0
  %3686 = vrot.lane.b32.xlu0 %v462, 40
  %v3687 = vpop.permute.xlu0 %3686
  %v3689 = vsel %vm152, %v3410, 0
  %v3692 = vsel %vm729, %v3687, 0
  %3694 = vmatpush.bf16.msra.mxu0 0
  %3695 = vmatpush.bf16.msra.mxu0 0
  %3696 = vmatpush.bf16.msra.mxu0 0
  %3697 = vmatpush.bf16.msra.mxu0 0
  %3698 = vmatpush.bf16.msra.mxu0 0
  %3699 = vmatpush.bf16.msra.mxu0 0
  %3700 = vmatpush.bf16.msra.mxu0 0
  %3701 = vmatpush.bf16.msra.mxu0 %v3692
  %3702 = vmatmul.bf16.gmra.mxu0 %v3689
  %v3703 = vpop.f32.mrf.mxu0
  %v3704 = vadd.f32 0.0, %v3703
  %v3705 = vpop.f32.mrf.mxu0
  %3706 = vdwg.mxu0
  %3707 = vrot.lane.b32.xlu0 %v486, 40
  %v3708 = vpop.permute.xlu0 %3707
  %v3710 = vsel %vm152, %v3411, 0
  %v3713 = vsel %vm729, %v3708, 0
  %3715 = vmatpush.bf16.msra.mxu0 0
  %3716 = vmatpush.bf16.msra.mxu0 0
  %3717 = vmatpush.bf16.msra.mxu0 0
  %3718 = vmatpush.bf16.msra.mxu0 0
  %3719 = vmatpush.bf16.msra.mxu0 0
  %3720 = vmatpush.bf16.msra.mxu0 0
  %3721 = vmatpush.bf16.msra.mxu0 0
  %3722 = vmatpush.bf16.msra.mxu0 %v3713
  %3723 = vmatmul.bf16.gmra.mxu0 %v3710
  %v3724 = vpop.f32.mrf.mxu0
  %v3725 = vadd.f32 0.0, %v3724
  %v3726 = vpop.f32.mrf.mxu0
  %3727 = vdwg.mxu0
  %3728 = vrot.lane.b32.xlu0 %v510, 40
  %v3729 = vpop.permute.xlu0 %3728
  %v3731 = vsel %vm152, %v3412, 0
  %v3734 = vsel %vm729, %v3729, 0
  %3736 = vmatpush.bf16.msra.mxu0 0
  %3737 = vmatpush.bf16.msra.mxu0 0
  %3738 = vmatpush.bf16.msra.mxu0 0
  %3739 = vmatpush.bf16.msra.mxu0 0
  %3740 = vmatpush.bf16.msra.mxu0 0
  %3741 = vmatpush.bf16.msra.mxu0 0
  %3742 = vmatpush.bf16.msra.mxu0 0
  %3743 = vmatpush.bf16.msra.mxu0 %v3734
  %3744 = vmatmul.bf16.gmra.mxu0 %v3731
  %v3745 = vpop.f32.mrf.mxu0
  %v3746 = vadd.f32 0.0, %v3745
  %v3747 = vpop.f32.mrf.mxu0
  %3748 = vdwg.mxu0
  %3765 = vrot.lane.b32.xlu0 %v1639, 8
  %v3766 = vpop.permute.xlu0 %3765
  %3767 = vrot.lane.b32.xlu0 %v1660, 8
  %v3768 = vpop.permute.xlu0 %3767
  %3769 = vrot.lane.b32.xlu0 %v1681, 8
  %v3770 = vpop.permute.xlu0 %3769
  %3771 = vrot.lane.b32.xlu0 %v1702, 8
  %v3772 = vpop.permute.xlu0 %3771
  %3773 = vrot.lane.b32.xlu0 %v1723, 8
  %v3774 = vpop.permute.xlu0 %3773
  %3775 = vrot.lane.b32.xlu0 %v1744, 8
  %v3776 = vpop.permute.xlu0 %3775
  %3777 = vrot.lane.b32.xlu0 %v1765, 8
  %v3778 = vpop.permute.xlu0 %3777
  %3779 = vrot.lane.b32.xlu0 %v1786, 8
  %v3780 = vpop.permute.xlu0 %3779
  %3781 = vrot.lane.b32.xlu0 %v1807, 8
  %v3782 = vpop.permute.xlu0 %3781
  %3783 = vrot.lane.b32.xlu0 %v1828, 8
  %v3784 = vpop.permute.xlu0 %3783
  %3785 = vrot.lane.b32.xlu0 %v1849, 8
  %v3786 = vpop.permute.xlu0 %3785
  %3787 = vrot.lane.b32.xlu0 %v1870, 8
  %v3788 = vpop.permute.xlu0 %3787
  %3789 = vrot.lane.b32.xlu0 %v1891, 8
  %v3790 = vpop.permute.xlu0 %3789
  %3791 = vrot.lane.b32.xlu0 %v1912, 8
  %v3792 = vpop.permute.xlu0 %3791
  %3793 = vrot.lane.b32.xlu0 %v1933, 8
  %v3794 = vpop.permute.xlu0 %3793
  %3795 = vrot.lane.b32.xlu0 %v1954, 8
  %v3796 = vpop.permute.xlu0 %3795
  %3829 = vrot.lane.b32.xlu0 %v2535, 16
  %v3830 = vpop.permute.xlu0 %3829
  %3831 = vrot.lane.b32.xlu0 %v2556, 16
  %v3832 = vpop.permute.xlu0 %3831
  %3833 = vrot.lane.b32.xlu0 %v2577, 16
  %v3834 = vpop.permute.xlu0 %3833
  %3835 = vrot.lane.b32.xlu0 %v2598, 16
  %v3836 = vpop.permute.xlu0 %3835
  %3837 = vrot.lane.b32.xlu0 %v2619, 16
  %v3838 = vpop.permute.xlu0 %3837
  %3839 = vrot.lane.b32.xlu0 %v2640, 16
  %v3840 = vpop.permute.xlu0 %3839
  %3841 = vrot.lane.b32.xlu0 %v2661, 16
  %v3842 = vpop.permute.xlu0 %3841
  %3843 = vrot.lane.b32.xlu0 %v2682, 16
  %v3844 = vpop.permute.xlu0 %3843
  %3845 = vrot.lane.b32.xlu0 %v2703, 16
  %v3846 = vpop.permute.xlu0 %3845
  %3847 = vrot.lane.b32.xlu0 %v2724, 16
  %v3848 = vpop.permute.xlu0 %3847
  %3849 = vrot.lane.b32.xlu0 %v2745, 16
  %v3850 = vpop.permute.xlu0 %3849
  %3851 = vrot.lane.b32.xlu0 %v2766, 16
  %v3852 = vpop.permute.xlu0 %3851
  %3853 = vrot.lane.b32.xlu0 %v2787, 16
  %v3854 = vpop.permute.xlu0 %3853
  %3855 = vrot.lane.b32.xlu0 %v2808, 16
  %v3856 = vpop.permute.xlu0 %3855
  %3857 = vrot.lane.b32.xlu0 %v2829, 16
  %v3858 = vpop.permute.xlu0 %3857
  %3859 = vrot.lane.b32.xlu0 %v2850, 16
  %v3860 = vpop.permute.xlu0 %3859
  %3893 = vrot.lane.b32.xlu0 %v3431, 24
  %v3894 = vpop.permute.xlu0 %3893
  %3895 = vrot.lane.b32.xlu0 %v3452, 24
  %v3896 = vpop.permute.xlu0 %3895
  %3897 = vrot.lane.b32.xlu0 %v3473, 24
  %v3898 = vpop.permute.xlu0 %3897
  %3899 = vrot.lane.b32.xlu0 %v3494, 24
  %v3900 = vpop.permute.xlu0 %3899
  %3901 = vrot.lane.b32.xlu0 %v3515, 24
  %v3902 = vpop.permute.xlu0 %3901
  %3903 = vrot.lane.b32.xlu0 %v3536, 24
  %v3904 = vpop.permute.xlu0 %3903
  %3905 = vrot.lane.b32.xlu0 %v3557, 24
  %v3906 = vpop.permute.xlu0 %3905
  %3907 = vrot.lane.b32.xlu0 %v3578, 24
  %v3908 = vpop.permute.xlu0 %3907
  %3909 = vrot.lane.b32.xlu0 %v3599, 24
  %v3910 = vpop.permute.xlu0 %3909
  %3911 = vrot.lane.b32.xlu0 %v3620, 24
  %v3912 = vpop.permute.xlu0 %3911
  %3913 = vrot.lane.b32.xlu0 %v3641, 24
  %v3914 = vpop.permute.xlu0 %3913
  %3915 = vrot.lane.b32.xlu0 %v3662, 24
  %v3916 = vpop.permute.xlu0 %3915
  %3917 = vrot.lane.b32.xlu0 %v3683, 24
  %v3918 = vpop.permute.xlu0 %3917
  %3919 = vrot.lane.b32.xlu0 %v3704, 24
  %v3920 = vpop.permute.xlu0 %3919
  %3921 = vrot.lane.b32.xlu0 %v3725, 24
  %v3922 = vpop.permute.xlu0 %3921
  %3923 = vrot.lane.b32.xlu0 %v3746, 24
  %v3924 = vpop.permute.xlu0 %3923
  %v3941 = vsel %vm152, %v743, %v3766
  %v3942 = vsel %vm152, %v764, %v3768
  %v3943 = vsel %vm152, %v785, %v3770
  %v3944 = vsel %vm152, %v806, %v3772
  %v3945 = vsel %vm152, %v827, %v3774
  %v3946 = vsel %vm152, %v848, %v3776
  %v3947 = vsel %vm152, %v869, %v3778
  %v3948 = vsel %vm152, %v890, %v3780
  %v3949 = vsel %vm152, %v911, %v3782
  %v3950 = vsel %vm152, %v932, %v3784
  %v3951 = vsel %vm152, %v953, %v3786
  %v3952 = vsel %vm152, %v974, %v3788
  %v3953 = vsel %vm152, %v995, %v3790
  %v3954 = vsel %vm152, %v1016, %v3792
  %v3955 = vsel %vm152, %v1037, %v3794
  %v3956 = vsel %vm152, %v1058, %v3796
  %v3957 = vsel %vm57, %v3941, %v3830
  %v3958 = vsel %vm57, %v3942, %v3832
  %v3959 = vsel %vm57, %v3943, %v3834
  %v3960 = vsel %vm57, %v3944, %v3836
  %v3961 = vsel %vm57, %v3945, %v3838
  %v3962 = vsel %vm57, %v3946, %v3840
  %v3963 = vsel %vm57, %v3947, %v3842
  %v3964 = vsel %vm57, %v3948, %v3844
  %v3965 = vsel %vm57, %v3949, %v3846
  %v3966 = vsel %vm57, %v3950, %v3848
  %v3967 = vsel %vm57, %v3951, %v3850
  %v3968 = vsel %vm57, %v3952, %v3852
  %v3969 = vsel %vm57, %v3953, %v3854
  %v3970 = vsel %vm57, %v3954, %v3856
  %v3971 = vsel %vm57, %v3955, %v3858
  %v3972 = vsel %vm57, %v3956, %v3860
  %vm3973 = vcmask 195584
  %v3974 = vsel %vm3973, %v3957, %v3894
  %v3975 = vsel %vm3973, %v3958, %v3896
  %v3976 = vsel %vm3973, %v3959, %v3898
  %v3977 = vsel %vm3973, %v3960, %v3900
  %v3978 = vsel %vm3973, %v3961, %v3902
  %v3979 = vsel %vm3973, %v3962, %v3904
  %v3980 = vsel %vm3973, %v3963, %v3906
  %v3981 = vsel %vm3973, %v3964, %v3908
  %v3982 = vsel %vm3973, %v3965, %v3910
  %v3983 = vsel %vm3973, %v3966, %v3912
  %v3984 = vsel %vm3973, %v3967, %v3914
  %v3985 = vsel %vm3973, %v3968, %v3916
  %v3986 = vsel %vm3973, %v3969, %v3918
  %v3987 = vsel %vm3973, %v3970, %v3920
  %v3988 = vsel %vm3973, %v3971, %v3922
  %v3989 = vsel %vm3973, %v3972, %v3924
  %v3990 = vpack.c.bf16 %v3975, %v3974
  %v3991 = vpack.c.bf16 %v3977, %v3976
  %v3992 = vpack.c.bf16 %v3979, %v3978
  %v3993 = vpack.c.bf16 %v3981, %v3980
  %v3994 = vpack.c.bf16 %v3983, %v3982
  %v3995 = vpack.c.bf16 %v3985, %v3984
  %v3996 = vpack.c.bf16 %v3987, %v3986
  %v3997 = vpack.c.bf16 %v3989, %v3988
  %v3998 = vld [vmem:[%s3] sm:$0xf]
  %v3999 = vld [vmem:[%s3 + $0x4] sm:$0xf]
  %v4000 = vld [vmem:[%s3 + $0x8] sm:$0xf]
  %v4001 = vld [vmem:[%s3 + $0xc] sm:$0xf]
  %v4002 = vld [vmem:[%s4] sm:$0x1]
  %v4004 = vperm.slane %v4002, 0
  %v4010 = vunpack.c.l.b16 %v3998
  %v4011 = vunpack.c.l.b16 %v3999
  %v4012 = vunpack.c.l.b16 %v4000
  %v4013 = vunpack.c.l.b16 %v4001
  %v4014 = vpack.c.b16 %v4011, %v4010
  %v4015 = vpack.c.b16 %v4013, %v4012
  %vm4018 = vcmask 261120
  %v4020 = vsel %vm4018, %v3990, 0
  %v4023 = vsel %vm4018, %v3991, 0
  %v4026 = vsel %vm4018, %v3992, 0
  %v4029 = vsel %vm4018, %v3993, 0
  %v4032 = vsel %vm4018, %v3994, 0
  %v4035 = vsel %vm4018, %v3995, 0
  %v4038 = vsel %vm4018, %v3996, 0
  %v4041 = vsel %vm4018, %v3997, 0
  %4043 = vmatpush.bf16.msra.mxu0 0
  %4044 = vmatpush.bf16.msra.mxu0 0
  %4045 = vmatpush.bf16.msra.mxu0 0
  %4046 = vmatpush.bf16.msra.mxu0 0
  %4047 = vmatpush.bf16.msra.mxu0 0
  %4048 = vmatpush.bf16.msra.mxu0 0
  %4049 = vmatpush.bf16.msra.mxu0 %v4015
  %4050 = vmatpush.bf16.msra.mxu0 %v4014
  %4051 = vmatmul.bf16.gmra.mxu0 %v4020
  %v4052 = vpop.f32.mrf.mxu0
  %v4053 = vadd.f32 %v4004, %v4052
  %v4054 = vpop.f32.mrf.mxu0
  %v4055 = vadd.f32 %v4004, %v4054
  %4056 = vmatmul.bf16.gmra.mxu0 %v4023
  %v4057 = vpop.f32.mrf.mxu0
  %v4058 = vadd.f32 %v4004, %v4057
  %v4059 = vpop.f32.mrf.mxu0
  %v4060 = vadd.f32 %v4004, %v4059
  %4061 = vmatmul.bf16.gmra.mxu0 %v4026
  %v4062 = vpop.f32.mrf.mxu0
  %v4063 = vadd.f32 %v4004, %v4062
  %v4064 = vpop.f32.mrf.mxu0
  %v4065 = vadd.f32 %v4004, %v4064
  %4066 = vmatmul.bf16.gmra.mxu0 %v4029
  %v4067 = vpop.f32.mrf.mxu0
  %v4068 = vadd.f32 %v4004, %v4067
  %v4069 = vpop.f32.mrf.mxu0
  %v4070 = vadd.f32 %v4004, %v4069
  %4071 = vmatmul.bf16.gmra.mxu0 %v4032
  %v4072 = vpop.f32.mrf.mxu0
  %v4073 = vadd.f32 %v4004, %v4072
  %v4074 = vpop.f32.mrf.mxu0
  %v4075 = vadd.f32 %v4004, %v4074
  %4076 = vmatmul.bf16.gmra.mxu0 %v4035
  %v4077 = vpop.f32.mrf.mxu0
  %v4078 = vadd.f32 %v4004, %v4077
  %v4079 = vpop.f32.mrf.mxu0
  %v4080 = vadd.f32 %v4004, %v4079
  %4081 = vmatmul.bf16.gmra.mxu0 %v4038
  %v4082 = vpop.f32.mrf.mxu0
  %v4083 = vadd.f32 %v4004, %v4082
  %v4084 = vpop.f32.mrf.mxu0
  %v4085 = vadd.f32 %v4004, %v4084
  %4086 = vmatmul.bf16.gmra.mxu0 %v4041
  %v4087 = vpop.f32.mrf.mxu0
  %v4088 = vadd.f32 %v4004, %v4087
  %v4089 = vpop.f32.mrf.mxu0
  %v4090 = vadd.f32 %v4004, %v4089
  %4091 = vdwg.mxu0
  %4092 = vst.msk [vmem:[%s5] sm:$0xff] %vm57, %v4053
  %4093 = vst.msk [vmem:[%s5 + $0x8] sm:$0xff] %vm57, %v4055
  %4094 = vst.msk [vmem:[%s5 + $0x10] sm:$0xff] %vm57, %v4058
  %4095 = vst.msk [vmem:[%s5 + $0x18] sm:$0xff] %vm57, %v4060
  %4096 = vst.msk [vmem:[%s5 + $0x20] sm:$0xff] %vm57, %v4063
  %4097 = vst.msk [vmem:[%s5 + $0x28] sm:$0xff] %vm57, %v4065
  %4098 = vst.msk [vmem:[%s5 + $0x30] sm:$0xff] %vm57, %v4068
  %4099 = vst.msk [vmem:[%s5 + $0x38] sm:$0xff] %vm57, %v4070
  %4100 = vst.msk [vmem:[%s5 + $0x40] sm:$0xff] %vm57, %v4073
  %4101 = vst.msk [vmem:[%s5 + $0x48] sm:$0xff] %vm57, %v4075
  %4102 = vst.msk [vmem:[%s5 + $0x50] sm:$0xff] %vm57, %v4078
  %4103 = vst.msk [vmem:[%s5 + $0x58] sm:$0xff] %vm57, %v4080
  %4104 = vst.msk [vmem:[%s5 + $0x60] sm:$0xff] %vm57, %v4083
  %4105 = vst.msk [vmem:[%s5 + $0x68] sm:$0xff] %vm57, %v4085
  %4106 = vst.msk [vmem:[%s5 + $0x70] sm:$0xff] %vm57, %v4088
  %4107 = vst.msk [vmem:[%s5 + $0x78] sm:$0xff] %vm57, %v4090
  // Predicated region
  $region22: #{tpu_custom_call.1} parent=0 // pred_check
    _
  $region23: #{tpu_custom_call.1} parent=0 // pred_check_branch
    %4109 = sbr.rel (0) target = $region25
  $region24: #{tpu_custom_call.1} parent=0 // pred_region
    _
  $region25: #{tpu_custom_call.1} parent=0 // pred_fallthru
    _
  // Predicated region
  $region26: #{tpu_custom_call.1} parent=0 // pred_check
    _
  $region27: #{tpu_custom_call.1} parent=0 // pred_check_branch
    %4111 = sbr.rel (0) target = $region29
  $region28: #{tpu_custom_call.1} parent=0 // pred_region
    _
  $region29: #{tpu_custom_call.1} parent=0 // pred_fallthru
    _

</llo_original>
